<compile_context>
chip_gen: v5e
topology: v5e:2x2
jax: 0.10.0
libtpu: 0.0.40
codegen_flags: <defaults>
</compile_context>

<pallas_src>
import jax
import jax.numpy as jnp
import numpy as np
from jax.experimental import pallas as pl
from jax.experimental.pallas import tpu as pltpu


# ---------------------------------------------------------------------------
# Pallas kernel: bidirectional GRU + attention pooling + classifier
# ---------------------------------------------------------------------------
def seq_attention_kernel(
    emb_ref,                                                        # (T, TB, D_in)
    wir_f_ref, wiz_f_ref, win_f_ref, br_f_ref, bz_f_ref, bn_f_ref,  # fwd GRU (input side)
    whr_f_ref, whz_f_ref, whn_f_ref, bhn_f_ref,                     # fwd GRU (hidden side)
    wir_b_ref, wiz_b_ref, win_b_ref, br_b_ref, bz_b_ref, bn_b_ref,  # bwd GRU (input side)
    whr_b_ref, whz_b_ref, whn_b_ref, bhn_b_ref,                     # bwd GRU (hidden side)
    watt_f_ref, watt_b_ref, batt_ref, ctx_ref,                      # attention
    w1_ref, b1_ref, w2_ref, b2_ref,                                 # classifier
    out_ref,                                                        # (TB, D_out)
):
    T, TB, D_in = emb_ref.shape
    H = whr_f_ref.shape[0]
    f32 = jnp.float32

    emb = emb_ref[...]                              # (T, TB, D_in)
    emb2d = emb.reshape(T * TB, D_in)               # one-time relayout, off the loop

    # --- Hoisted input-to-hidden projections: one MXU matmul per gate/direction.
    #     r,z gates have b_ih + b_hh pre-folded; n gate folds only b_ih
    #     (b_hh_n must stay inside the r* term, PyTorch GRU semantics).
    gif_r = jnp.dot(emb2d, wir_f_ref[...], preferred_element_type=f32) + br_f_ref[...]
    gif_z = jnp.dot(emb2d, wiz_f_ref[...], preferred_element_type=f32) + bz_f_ref[...]
    gif_n = jnp.dot(emb2d, win_f_ref[...], preferred_element_type=f32) + bn_f_ref[...]
    gib_r = jnp.dot(emb2d, wir_b_ref[...], preferred_element_type=f32) + br_b_ref[...]
    gib_z = jnp.dot(emb2d, wiz_b_ref[...], preferred_element_type=f32) + bz_b_ref[...]
    gib_n = jnp.dot(emb2d, win_b_ref[...], preferred_element_type=f32) + bn_b_ref[...]

    # Hoist recurrent weights / bias loads out of the loop.
    whr_f, whz_f, whn_f, bhn_f = whr_f_ref[...], whz_f_ref[...], whn_f_ref[...], bhn_f_ref[...]
    whr_b, whz_b, whn_b, bhn_b = whr_b_ref[...], whz_b_ref[...], whn_b_ref[...], bhn_b_ref[...]

    def gru_cell(g_r, g_z, g_n, h, w_r, w_z, w_n, b_hn):
        # PyTorch GRU gate order r, z, n; only the hidden-side matmuls remain here.
        r = jax.nn.sigmoid(g_r + jnp.dot(h, w_r, preferred_element_type=f32))
        z = jax.nn.sigmoid(g_z + jnp.dot(h, w_z, preferred_element_type=f32))
        n = jnp.tanh(g_n + r * (jnp.dot(h, w_n, preferred_element_type=f32) + b_hn))
        return (1.0 - z) * n + z * h

    hf = jnp.zeros((TB, H), f32)
    hb = jnp.zeros((TB, H), f32)
    gf = [None] * T
    gb = [None] * T
    # Fused fwd/bwd recurrence, fully unrolled (T static) for LLO visibility.
    for t in range(T):
        s = T - 1 - t
        lo_t, hi_t = t * TB, (t + 1) * TB
        lo_s, hi_s = s * TB, (s + 1) * TB
        hf = gru_cell(gif_r[lo_t:hi_t, :], gif_z[lo_t:hi_t, :], gif_n[lo_t:hi_t, :],
                      hf, whr_f, whz_f, whn_f, bhn_f)
        hb = gru_cell(gib_r[lo_s:hi_s, :], gib_z[lo_s:hi_s, :], gib_n[lo_s:hi_s, :],
                      hb, whr_b, whz_b, whn_b, bhn_b)
        gf[t] = hf
        gb[s] = hb

    gf_all = jnp.concatenate(gf, axis=0)            # (T*TB, H), sublane-tile aligned
    gb_all = jnp.concatenate(gb, axis=0)            # (T*TB, H)

    # matrix_mul(gru_out, weight, bias) without the [gf|gb] concat:
    # u = tanh(concat(gf,gb) @ W + b) == tanh(gf @ W[:H] + gb @ W[H:] + b)
    u = jnp.tanh(
        jnp.dot(gf_all, watt_f_ref[...], preferred_element_type=f32)
        + jnp.dot(gb_all, watt_b_ref[...], preferred_element_type=f32)
        + batt_ref[...])                            # (T*TB, 2H)

    # matrix_mul(u, context_weight): width-1 matmul -> VPU multiply + lane reduce.
    scores = jnp.tanh(jnp.sum(u * ctx_ref[...], axis=-1, keepdims=True))  # (T*TB, 1)
    scores = scores.reshape(T, TB, 1)

    # softmax over the sequence axis (F.softmax(., dim=1) on (B, T))
    m = jnp.max(scores, axis=0, keepdims=True)
    e = jnp.exp(scores - m)
    denom = jnp.sum(e, axis=0, keepdims=True)
    alpha = e * pl.reciprocal(denom, approx=True)   # (T, TB, 1)

    # element_wise_mul(embedding, alpha): attention-weighted sum over time.
    pooled = jnp.sum(emb * alpha, axis=0)           # (TB, D_in)

    # classifier: Linear -> ReLU -> Linear -> Sigmoid (bin_label=True)
    h1 = jnp.maximum(
        jnp.dot(pooled, w1_ref[...], preferred_element_type=f32) + b1_ref[...], 0.0)
    logits = jnp.dot(h1, w2_ref[...], preferred_element_type=f32) + b2_ref[...]
    out_ref[...] = jax.nn.sigmoid(logits)


# ---------------------------------------------------------------------------
# Wrapper (plain-JAX glue for the external sub-model + pallas_call)
# ---------------------------------------------------------------------------
def ensemble_models_attention(x_model, pretrained_data, params, fix_seq_len, tile_b=8):
    T = fix_seq_len

    # --- external sub-model self.models[0] (a simple Linear), plain-JAX glue ---
    sub = x_model @ params['wm'] + params['bm']                 # (T*B, F)
    sub = sub.reshape(T, -1, sub.shape[-1])                     # .view(fix_seq_len, -1, F)
    emb = jnp.concatenate([sub, pretrained_data], axis=-1)      # (T, B, D_in)
    emb = emb.astype(jnp.float32)

    B, D_in = emb.shape[1], emb.shape[2]
    H = params['whh_f'].shape[0]
    D_out = params['w2'].shape[1]

    tile_b = min(tile_b, B)
    assert B % tile_b == 0, "batch must be divisible by the batch tile"
    grid = (B // tile_b,)

    def split_gru(wih, whh, bih, bhh):
        # weights stored as (in, 3H) = PyTorch layout transposed; gate order r,z,n
        w_ir, w_iz, w_in = wih[:, :H], wih[:, H:2 * H], wih[:, 2 * H:]
        w_hr, w_hz, w_hn = whh[:, :H], whh[:, H:2 * H], whh[:, 2 * H:]
        b_r = bih[:, :H] + bhh[:, :H]          # fold b_ih + b_hh for r
        b_z = bih[:, H:2 * H] + bhh[:, H:2 * H]  # fold b_ih + b_hh for z
        b_n = bih[:, 2 * H:]                    # n: only b_ih folded
        b_hn = bhh[:, 2 * H:]                   # n: b_hh stays under r*
        return [w_ir, w_iz, w_in, b_r, b_z, b_n, w_hr, w_hz, w_hn, b_hn]

    fwd = split_gru(params['wih_f'], params['whh_f'], params['bih_f'], params['bhh_f'])
    bwd = split_gru(params['wih_b'], params['whh_b'], params['bih_b'], params['bhh_b'])

    watt_f = params['watt'][:H, :]              # avoids [gf|gb] concat in-kernel
    watt_b = params['watt'][H:, :]
    ctx_row = params['ctx'].reshape(1, -1)      # (1, 2H) broadcast row

    weights = (fwd + bwd
               + [watt_f, watt_b, params['batt'], ctx_row,
                  params['w1'], params['b1'], params['w2'], params['b2']])
    weights = [w.astype(jnp.float32) for w in weights]

    emb_spec = pl.BlockSpec((T, tile_b, D_in), lambda i: (0, i, 0))

    def full_spec(x):
        nd = x.ndim
        return pl.BlockSpec(x.shape, lambda i, _nd=nd: (0,) * _nd)

    in_specs = [emb_spec] + [full_spec(w) for w in weights]
    out_spec = pl.BlockSpec((tile_b, D_out), lambda i: (i, 0))

    out = pl.pallas_call(
        seq_attention_kernel,
        out_shape=jax.ShapeDtypeStruct((B, D_out), jnp.float32),
        grid=grid,
        in_specs=in_specs,
        out_specs=out_spec,
        compiler_params=pltpu.CompilerParams(
            dimension_semantics=("parallel",),   # batch-parallel: megacore on v7x
        ),
    )(emb, *weights)
    return out


# ---------------------------------------------------------------------------
# Pure-JAX reference (for correctness check)
# ---------------------------------------------------------------------------
def reference(x_model, pretrained_data, params, T):
    sub = x_model @ params['wm'] + params['bm']
    sub = sub.reshape(T, -1, sub.shape[-1])
    emb = jnp.concatenate([sub, pretrained_data], axis=-1)
    B = emb.shape[1]
    H = params['whh_f'].shape[0]

    def gru_dir(wih, whh, bih, bhh, reverse):
        h = jnp.zeros((B, H), jnp.float32)
        ts = range(T - 1, -1, -1) if reverse else range(T)
        outs = [None] * T
        for t in ts:
            gi = emb[t] @ wih + bih
            gh = h @ whh + bhh
            r = jax.nn.sigmoid(gi[:, :H] + gh[:, :H])
            z = jax.nn.sigmoid(gi[:, H:2 * H] + gh[:, H:2 * H])
            n = jnp.tanh(gi[:, 2 * H:] + r * gh[:, 2 * H:])
            h = (1.0 - z) * n + z * h
            outs[t] = h
        return jnp.stack(outs, 0)

    gf = gru_dir(params['wih_f'], params['whh_f'], params['bih_f'], params['bhh_f'], False)
    gb = gru_dir(params['wih_b'], params['whh_b'], params['bih_b'], params['bhh_b'], True)
    gru_all = jnp.concatenate([gf, gb], -1)
    u = jnp.tanh(jnp.einsum('tbh,hk->tbk', gru_all, params['watt']) + params['batt'])
    scores = jnp.tanh(jnp.einsum('tbk,ko->tbo', u, params['ctx']))
    alpha = jax.nn.softmax(scores, axis=0)
    pooled = jnp.sum(emb * alpha, axis=0)
    h1 = jnp.maximum(pooled @ params['w1'] + params['b1'], 0.0)
    return jax.nn.sigmoid(h1 @ params['w2'] + params['b2'])


# ---------------------------------------------------------------------------
if __name__ == "__main__":
    key = jax.random.PRNGKey(0)
    T, B = 8, 16                   # fix_seq_len, batch (B multiple of 8 -> sublane-dense tiles)
    D_model_in, F, P = 12, 24, 8   # sub-model in / sub-model out / pretrained feat
    D_in = F + P                   # 32 : SeqAttention GRU input size
    D_out = 4
    hidden_size = 16               # GRU hidden; 2*hidden = 32

    keys = jax.random.split(key, 20)

    def nrm(k, shape, std=0.05):
        return (std * jax.random.normal(k, shape)).astype(jnp.float32)

    # Deterministic synthetic parameters.  GRU / Linear weights stored as
    # (in_features, out_features) == transpose of the PyTorch layout.
    params = dict(
        wm=nrm(keys[0], (D_model_in, F), 0.1), bm=nrm(keys[1], (1, F), 0.1),
        wih_f=nrm(keys[2], (D_in, 3 * hidden_size), 0.1),
        whh_f=nrm(keys[3], (hidden_size, 3 * hidden_size), 0.1),
        bih_f=nrm(keys[4], (1, 3 * hidden_size), 0.1),
        bhh_f=nrm(keys[5], (1, 3 * hidden_size), 0.1),
        wih_b=nrm(keys[6], (D_in, 3 * hidden_size), 0.1),
        whh_b=nrm(keys[7], (hidden_size, 3 * hidden_size), 0.1),
        bih_b=nrm(keys[8], (1, 3 * hidden_size), 0.1),
        bhh_b=nrm(keys[9], (1, 3 * hidden_size), 0.1),
        watt=nrm(keys[10], (2 * hidden_size, 2 * hidden_size)),   # self.weight  ~N(0,0.05)
        batt=nrm(keys[11], (1, 2 * hidden_size)),                 # self.bias
        ctx=nrm(keys[12], (2 * hidden_size, 1)),                  # context_weight
        w1=nrm(keys[13], (D_in, hidden_size), 0.1),
        b1=nrm(keys[14], (1, hidden_size), 0.1),
        w2=nrm(keys[15], (hidden_size, D_out), 0.1),
        b2=nrm(keys[16], (1, D_out), 0.1),
    )

    # data[0] = (input, None)  ->  single sub-model, no seq_len (pack/pad identity)
    x_model = jax.random.normal(keys[17], (T * B, D_model_in), dtype=jnp.float32)
    pretrained_data = jax.random.normal(keys[18], (T, B, P), dtype=jnp.float32)

    out = ensemble_models_attention(x_model, pretrained_data, params, T, tile_b=8)
    out = jax.block_until_ready(out)

    ref = reference(x_model, pretrained_data, params, T)
    assert out.shape == (B, D_out)
    # tolerance slightly relaxed vs pure-f32 due to approx-reciprocal softmax
    np.testing.assert_allclose(np.asarray(out), np.asarray(ref),
                               rtol=2e-3, atol=2e-3)
    print("KERNEL_OK")
</pallas_src>

<mosaic_0001>
module attributes {stable_mosaic.version = 11 : i64} {
  func.func @seq_attention_kernel(%arg0: i32, %arg1: memref<8x8x32xf32, #tpu.memory_space<vmem>>, %arg2: memref<32x16xf32, #tpu.memory_space<vmem>>, %arg3: memref<32x16xf32, #tpu.memory_space<vmem>>, %arg4: memref<32x16xf32, #tpu.memory_space<vmem>>, %arg5: memref<1x16xf32, #tpu.memory_space<vmem>>, %arg6: memref<1x16xf32, #tpu.memory_space<vmem>>, %arg7: memref<1x16xf32, #tpu.memory_space<vmem>>, %arg8: memref<16x16xf32, #tpu.memory_space<vmem>>, %arg9: memref<16x16xf32, #tpu.memory_space<vmem>>, %arg10: memref<16x16xf32, #tpu.memory_space<vmem>>, %arg11: memref<1x16xf32, #tpu.memory_space<vmem>>, %arg12: memref<32x16xf32, #tpu.memory_space<vmem>>, %arg13: memref<32x16xf32, #tpu.memory_space<vmem>>, %arg14: memref<32x16xf32, #tpu.memory_space<vmem>>, %arg15: memref<1x16xf32, #tpu.memory_space<vmem>>, %arg16: memref<1x16xf32, #tpu.memory_space<vmem>>, %arg17: memref<1x16xf32, #tpu.memory_space<vmem>>, %arg18: memref<16x16xf32, #tpu.memory_space<vmem>>, %arg19: memref<16x16xf32, #tpu.memory_space<vmem>>, %arg20: memref<16x16xf32, #tpu.memory_space<vmem>>, %arg21: memref<1x16xf32, #tpu.memory_space<vmem>>, %arg22: memref<16x32xf32, #tpu.memory_space<vmem>>, %arg23: memref<16x32xf32, #tpu.memory_space<vmem>>, %arg24: memref<1x32xf32, #tpu.memory_space<vmem>>, %arg25: memref<1x32xf32, #tpu.memory_space<vmem>>, %arg26: memref<32x16xf32, #tpu.memory_space<vmem>>, %arg27: memref<1x16xf32, #tpu.memory_space<vmem>>, %arg28: memref<16x4xf32, #tpu.memory_space<vmem>>, %arg29: memref<1x4xf32, #tpu.memory_space<vmem>>, %arg30: memref<8x4xf32, #tpu.memory_space<vmem>>) attributes {dimension_semantics = [#tpu.dimension_semantics<parallel>], iteration_bounds = array<i64: 2>, scalar_prefetch = 0 : i64, scratch_operands = 0 : i64, tpu.core_type = #tpu.core_type<tc>, window_params = [{transform_indices = @transform_0, window_bounds = array<i64: 8, 8, 32>}, {pipeline_mode = #tpu.pipeline_mode<synchronous>, transform_indices = @transform_1, window_bounds = array<i64: 32, 16>}, {pipeline_mode = #tpu.pipeline_mode<synchronous>, transform_indices = @transform_2, window_bounds = array<i64: 32, 16>}, {pipeline_mode = #tpu.pipeline_mode<synchronous>, transform_indices = @transform_3, window_bounds = array<i64: 32, 16>}, {pipeline_mode = #tpu.pipeline_mode<synchronous>, transform_indices = @transform_4, window_bounds = array<i64: 1, 16>}, {pipeline_mode = #tpu.pipeline_mode<synchronous>, transform_indices = @transform_5, window_bounds = array<i64: 1, 16>}, {pipeline_mode = #tpu.pipeline_mode<synchronous>, transform_indices = @transform_6, window_bounds = array<i64: 1, 16>}, {pipeline_mode = #tpu.pipeline_mode<synchronous>, transform_indices = @transform_7, window_bounds = array<i64: 16, 16>}, {pipeline_mode = #tpu.pipeline_mode<synchronous>, transform_indices = @transform_8, window_bounds = array<i64: 16, 16>}, {pipeline_mode = #tpu.pipeline_mode<synchronous>, transform_indices = @transform_9, window_bounds = array<i64: 16, 16>}, {pipeline_mode = #tpu.pipeline_mode<synchronous>, transform_indices = @transform_10, window_bounds = array<i64: 1, 16>}, {pipeline_mode = #tpu.pipeline_mode<synchronous>, transform_indices = @transform_11, window_bounds = array<i64: 32, 16>}, {pipeline_mode = #tpu.pipeline_mode<synchronous>, transform_indices = @transform_12, window_bounds = array<i64: 32, 16>}, {pipeline_mode = #tpu.pipeline_mode<synchronous>, transform_indices = @transform_13, window_bounds = array<i64: 32, 16>}, {pipeline_mode = #tpu.pipeline_mode<synchronous>, transform_indices = @transform_14, window_bounds = array<i64: 1, 16>}, {pipeline_mode = #tpu.pipeline_mode<synchronous>, transform_indices = @transform_15, window_bounds = array<i64: 1, 16>}, {pipeline_mode = #tpu.pipeline_mode<synchronous>, transform_indices = @transform_16, window_bounds = array<i64: 1, 16>}, {pipeline_mode = #tpu.pipeline_mode<synchronous>, transform_indices = @transform_17, window_bounds = array<i64: 16, 16>}, {pipeline_mode = #tpu.pipeline_mode<synchronous>, transform_indices = @transform_18, window_bounds = array<i64: 16, 16>}, {pipeline_mode = #tpu.pipeline_mode<synchronous>, transform_indices = @transform_19, window_bounds = array<i64: 16, 16>}, {pipeline_mode = #tpu.pipeline_mode<synchronous>, transform_indices = @transform_20, window_bounds = array<i64: 1, 16>}, {pipeline_mode = #tpu.pipeline_mode<synchronous>, transform_indices = @transform_21, window_bounds = array<i64: 16, 32>}, {pipeline_mode = #tpu.pipeline_mode<synchronous>, transform_indices = @transform_22, window_bounds = array<i64: 16, 32>}, {pipeline_mode = #tpu.pipeline_mode<synchronous>, transform_indices = @transform_23, window_bounds = array<i64: 1, 32>}, {pipeline_mode = #tpu.pipeline_mode<synchronous>, transform_indices = @transform_24, window_bounds = array<i64: 1, 32>}, {pipeline_mode = #tpu.pipeline_mode<synchronous>, transform_indices = @transform_25, window_bounds = array<i64: 32, 16>}, {pipeline_mode = #tpu.pipeline_mode<synchronous>, transform_indices = @transform_26, window_bounds = array<i64: 1, 16>}, {pipeline_mode = #tpu.pipeline_mode<synchronous>, transform_indices = @transform_27, window_bounds = array<i64: 16, 4>}, {pipeline_mode = #tpu.pipeline_mode<synchronous>, transform_indices = @transform_28, window_bounds = array<i64: 1, 4>}, {transform_indices = @transform_29, window_bounds = array<i64: 8, 4>}]} {
    %c0 = arith.constant 0 : index
    %c0_0 = arith.constant 0 : index
    %c0_1 = arith.constant 0 : index
    %0 = vector.load %arg1[%c0, %c0_0, %c0_1] : memref<8x8x32xf32, #tpu.memory_space<vmem>>, vector<8x8x32xf32>
    %1 = vector.shape_cast %0 : vector<8x8x32xf32> to vector<64x32xf32>
    %c0_2 = arith.constant 0 : index
    %c0_3 = arith.constant 0 : index
    %2 = vector.load %arg2[%c0_2, %c0_3] : memref<32x16xf32, #tpu.memory_space<vmem>>, vector<32x16xf32>
    %cst = arith.constant dense<0.000000e+00> : vector<64x16xf32>
    %3 = tpu.matmul %1, %2, %cst {dimension_numbers = #tpu.dot_dimension_numbers<[1], [0], [0], [1], [0, 0, 1, 1], [], []>} : vector<64x32xf32>, vector<32x16xf32>, vector<64x16xf32> -> vector<64x16xf32>
    %c0_4 = arith.constant 0 : index
    %c0_5 = arith.constant 0 : index
    %4 = vector.load %arg5[%c0_4, %c0_5] : memref<1x16xf32, #tpu.memory_space<vmem>>, vector<1x16xf32>
    %5 = vector.broadcast %4 : vector<1x16xf32> to vector<64x16xf32>
    %6 = arith.addf %3, %5 : vector<64x16xf32>
    %c0_6 = arith.constant 0 : index
    %c0_7 = arith.constant 0 : index
    %7 = vector.load %arg3[%c0_6, %c0_7] : memref<32x16xf32, #tpu.memory_space<vmem>>, vector<32x16xf32>
    %cst_8 = arith.constant dense<0.000000e+00> : vector<64x16xf32>
    %8 = tpu.matmul %1, %7, %cst_8 {dimension_numbers = #tpu.dot_dimension_numbers<[1], [0], [0], [1], [0, 0, 1, 1], [], []>} : vector<64x32xf32>, vector<32x16xf32>, vector<64x16xf32> -> vector<64x16xf32>
    %c0_9 = arith.constant 0 : index
    %c0_10 = arith.constant 0 : index
    %9 = vector.load %arg6[%c0_9, %c0_10] : memref<1x16xf32, #tpu.memory_space<vmem>>, vector<1x16xf32>
    %10 = vector.broadcast %9 : vector<1x16xf32> to vector<64x16xf32>
    %11 = arith.addf %8, %10 : vector<64x16xf32>
    %c0_11 = arith.constant 0 : index
    %c0_12 = arith.constant 0 : index
    %12 = vector.load %arg4[%c0_11, %c0_12] : memref<32x16xf32, #tpu.memory_space<vmem>>, vector<32x16xf32>
    %cst_13 = arith.constant dense<0.000000e+00> : vector<64x16xf32>
    %13 = tpu.matmul %1, %12, %cst_13 {dimension_numbers = #tpu.dot_dimension_numbers<[1], [0], [0], [1], [0, 0, 1, 1], [], []>} : vector<64x32xf32>, vector<32x16xf32>, vector<64x16xf32> -> vector<64x16xf32>
    %c0_14 = arith.constant 0 : index
    %c0_15 = arith.constant 0 : index
    %14 = vector.load %arg7[%c0_14, %c0_15] : memref<1x16xf32, #tpu.memory_space<vmem>>, vector<1x16xf32>
    %15 = vector.broadcast %14 : vector<1x16xf32> to vector<64x16xf32>
    %16 = arith.addf %13, %15 : vector<64x16xf32>
    %c0_16 = arith.constant 0 : index
    %c0_17 = arith.constant 0 : index
    %17 = vector.load %arg12[%c0_16, %c0_17] : memref<32x16xf32, #tpu.memory_space<vmem>>, vector<32x16xf32>
    %cst_18 = arith.constant dense<0.000000e+00> : vector<64x16xf32>
    %18 = tpu.matmul %1, %17, %cst_18 {dimension_numbers = #tpu.dot_dimension_numbers<[1], [0], [0], [1], [0, 0, 1, 1], [], []>} : vector<64x32xf32>, vector<32x16xf32>, vector<64x16xf32> -> vector<64x16xf32>
    %c0_19 = arith.constant 0 : index
    %c0_20 = arith.constant 0 : index
    %19 = vector.load %arg15[%c0_19, %c0_20] : memref<1x16xf32, #tpu.memory_space<vmem>>, vector<1x16xf32>
    %20 = vector.broadcast %19 : vector<1x16xf32> to vector<64x16xf32>
    %21 = arith.addf %18, %20 : vector<64x16xf32>
    %c0_21 = arith.constant 0 : index
    %c0_22 = arith.constant 0 : index
    %22 = vector.load %arg13[%c0_21, %c0_22] : memref<32x16xf32, #tpu.memory_space<vmem>>, vector<32x16xf32>
    %cst_23 = arith.constant dense<0.000000e+00> : vector<64x16xf32>
    %23 = tpu.matmul %1, %22, %cst_23 {dimension_numbers = #tpu.dot_dimension_numbers<[1], [0], [0], [1], [0, 0, 1, 1], [], []>} : vector<64x32xf32>, vector<32x16xf32>, vector<64x16xf32> -> vector<64x16xf32>
    %c0_24 = arith.constant 0 : index
    %c0_25 = arith.constant 0 : index
    %24 = vector.load %arg16[%c0_24, %c0_25] : memref<1x16xf32, #tpu.memory_space<vmem>>, vector<1x16xf32>
    %25 = vector.broadcast %24 : vector<1x16xf32> to vector<64x16xf32>
    %26 = arith.addf %23, %25 : vector<64x16xf32>
    %c0_26 = arith.constant 0 : index
    %c0_27 = arith.constant 0 : index
    %27 = vector.load %arg14[%c0_26, %c0_27] : memref<32x16xf32, #tpu.memory_space<vmem>>, vector<32x16xf32>
    %cst_28 = arith.constant dense<0.000000e+00> : vector<64x16xf32>
    %28 = tpu.matmul %1, %27, %cst_28 {dimension_numbers = #tpu.dot_dimension_numbers<[1], [0], [0], [1], [0, 0, 1, 1], [], []>} : vector<64x32xf32>, vector<32x16xf32>, vector<64x16xf32> -> vector<64x16xf32>
    %c0_29 = arith.constant 0 : index
    %c0_30 = arith.constant 0 : index
    %29 = vector.load %arg17[%c0_29, %c0_30] : memref<1x16xf32, #tpu.memory_space<vmem>>, vector<1x16xf32>
    %30 = vector.broadcast %29 : vector<1x16xf32> to vector<64x16xf32>
    %31 = arith.addf %28, %30 : vector<64x16xf32>
    %c0_31 = arith.constant 0 : index
    %c0_32 = arith.constant 0 : index
    %32 = vector.load %arg8[%c0_31, %c0_32] : memref<16x16xf32, #tpu.memory_space<vmem>>, vector<16x16xf32>
    %c0_33 = arith.constant 0 : index
    %c0_34 = arith.constant 0 : index
    %33 = vector.load %arg9[%c0_33, %c0_34] : memref<16x16xf32, #tpu.memory_space<vmem>>, vector<16x16xf32>
    %c0_35 = arith.constant 0 : index
    %c0_36 = arith.constant 0 : index
    %34 = vector.load %arg10[%c0_35, %c0_36] : memref<16x16xf32, #tpu.memory_space<vmem>>, vector<16x16xf32>
    %c0_37 = arith.constant 0 : index
    %c0_38 = arith.constant 0 : index
    %35 = vector.load %arg11[%c0_37, %c0_38] : memref<1x16xf32, #tpu.memory_space<vmem>>, vector<1x16xf32>
    %c0_39 = arith.constant 0 : index
    %c0_40 = arith.constant 0 : index
    %36 = vector.load %arg18[%c0_39, %c0_40] : memref<16x16xf32, #tpu.memory_space<vmem>>, vector<16x16xf32>
    %c0_41 = arith.constant 0 : index
    %c0_42 = arith.constant 0 : index
    %37 = vector.load %arg19[%c0_41, %c0_42] : memref<16x16xf32, #tpu.memory_space<vmem>>, vector<16x16xf32>
    %c0_43 = arith.constant 0 : index
    %c0_44 = arith.constant 0 : index
    %38 = vector.load %arg20[%c0_43, %c0_44] : memref<16x16xf32, #tpu.memory_space<vmem>>, vector<16x16xf32>
    %c0_45 = arith.constant 0 : index
    %c0_46 = arith.constant 0 : index
    %39 = vector.load %arg21[%c0_45, %c0_46] : memref<1x16xf32, #tpu.memory_space<vmem>>, vector<1x16xf32>
    %cst_47 = arith.constant 0.000000e+00 : f32
    %40 = vector.broadcast %cst_47 : f32 to vector<8x16xf32>
    %cst_48 = arith.constant 0.000000e+00 : f32
    %41 = vector.broadcast %cst_48 : f32 to vector<8x16xf32>
    %42 = vector.extract_strided_slice %6 {offsets = [0, 0], sizes = [8, 16], strides = [1, 1]} : vector<64x16xf32> to vector<8x16xf32>
    %43 = vector.extract_strided_slice %11 {offsets = [0, 0], sizes = [8, 16], strides = [1, 1]} : vector<64x16xf32> to vector<8x16xf32>
    %44 = vector.extract_strided_slice %16 {offsets = [0, 0], sizes = [8, 16], strides = [1, 1]} : vector<64x16xf32> to vector<8x16xf32>
    %cst_49 = arith.constant dense<0.000000e+00> : vector<8x16xf32>
    %45 = tpu.matmul %40, %32, %cst_49 {dimension_numbers = #tpu.dot_dimension_numbers<[1], [0], [0], [1], [0, 0, 1, 1], [], []>} : vector<8x16xf32>, vector<16x16xf32>, vector<8x16xf32> -> vector<8x16xf32>
    %46 = arith.addf %42, %45 : vector<8x16xf32>
    %47 = arith.negf %46 : vector<8x16xf32>
    %48 = math.exp %47 : vector<8x16xf32>
    %cst_50 = arith.constant 1.000000e+00 : f32
    %49 = vector.broadcast %cst_50 : f32 to vector<8x16xf32>
    %50 = arith.addf %49, %48 : vector<8x16xf32>
    %51 = arith.divf %49, %50 : vector<8x16xf32>
    %cst_51 = arith.constant dense<0.000000e+00> : vector<8x16xf32>
    %52 = tpu.matmul %40, %33, %cst_51 {dimension_numbers = #tpu.dot_dimension_numbers<[1], [0], [0], [1], [0, 0, 1, 1], [], []>} : vector<8x16xf32>, vector<16x16xf32>, vector<8x16xf32> -> vector<8x16xf32>
    %53 = arith.addf %43, %52 : vector<8x16xf32>
    %54 = arith.negf %53 : vector<8x16xf32>
    %55 = math.exp %54 : vector<8x16xf32>
    %cst_52 = arith.constant 1.000000e+00 : f32
    %56 = vector.broadcast %cst_52 : f32 to vector<8x16xf32>
    %57 = arith.addf %56, %55 : vector<8x16xf32>
    %58 = arith.divf %56, %57 : vector<8x16xf32>
    %cst_53 = arith.constant dense<0.000000e+00> : vector<8x16xf32>
    %59 = tpu.matmul %40, %34, %cst_53 {dimension_numbers = #tpu.dot_dimension_numbers<[1], [0], [0], [1], [0, 0, 1, 1], [], []>} : vector<8x16xf32>, vector<16x16xf32>, vector<8x16xf32> -> vector<8x16xf32>
    %60 = vector.broadcast %35 : vector<1x16xf32> to vector<8x16xf32>
    %61 = arith.addf %59, %60 : vector<8x16xf32>
    %62 = arith.mulf %51, %61 : vector<8x16xf32>
    %63 = arith.addf %44, %62 : vector<8x16xf32>
    %64 = math.tanh %63 : vector<8x16xf32>
    %cst_54 = arith.constant 1.000000e+00 : f32
    %65 = vector.broadcast %cst_54 : f32 to vector<8x16xf32>
    %66 = arith.subf %65, %58 : vector<8x16xf32>
    %67 = arith.mulf %66, %64 : vector<8x16xf32>
    %68 = arith.mulf %58, %40 : vector<8x16xf32>
    %69 = arith.addf %67, %68 : vector<8x16xf32>
    %70 = vector.extract_strided_slice %21 {offsets = [56, 0], sizes = [8, 16], strides = [1, 1]} : vector<64x16xf32> to vector<8x16xf32>
    %71 = vector.extract_strided_slice %26 {offsets = [56, 0], sizes = [8, 16], strides = [1, 1]} : vector<64x16xf32> to vector<8x16xf32>
    %72 = vector.extract_strided_slice %31 {offsets = [56, 0], sizes = [8, 16], strides = [1, 1]} : vector<64x16xf32> to vector<8x16xf32>
    %cst_55 = arith.constant dense<0.000000e+00> : vector<8x16xf32>
    %73 = tpu.matmul %41, %36, %cst_55 {dimension_numbers = #tpu.dot_dimension_numbers<[1], [0], [0], [1], [0, 0, 1, 1], [], []>} : vector<8x16xf32>, vector<16x16xf32>, vector<8x16xf32> -> vector<8x16xf32>
    %74 = arith.addf %70, %73 : vector<8x16xf32>
    %75 = arith.negf %74 : vector<8x16xf32>
    %76 = math.exp %75 : vector<8x16xf32>
    %cst_56 = arith.constant 1.000000e+00 : f32
    %77 = vector.broadcast %cst_56 : f32 to vector<8x16xf32>
    %78 = arith.addf %77, %76 : vector<8x16xf32>
    %79 = arith.divf %77, %78 : vector<8x16xf32>
    %cst_57 = arith.constant dense<0.000000e+00> : vector<8x16xf32>
    %80 = tpu.matmul %41, %37, %cst_57 {dimension_numbers = #tpu.dot_dimension_numbers<[1], [0], [0], [1], [0, 0, 1, 1], [], []>} : vector<8x16xf32>, vector<16x16xf32>, vector<8x16xf32> -> vector<8x16xf32>
    %81 = arith.addf %71, %80 : vector<8x16xf32>
    %82 = arith.negf %81 : vector<8x16xf32>
    %83 = math.exp %82 : vector<8x16xf32>
    %cst_58 = arith.constant 1.000000e+00 : f32
    %84 = vector.broadcast %cst_58 : f32 to vector<8x16xf32>
    %85 = arith.addf %84, %83 : vector<8x16xf32>
    %86 = arith.divf %84, %85 : vector<8x16xf32>
    %cst_59 = arith.constant dense<0.000000e+00> : vector<8x16xf32>
    %87 = tpu.matmul %41, %38, %cst_59 {dimension_numbers = #tpu.dot_dimension_numbers<[1], [0], [0], [1], [0, 0, 1, 1], [], []>} : vector<8x16xf32>, vector<16x16xf32>, vector<8x16xf32> -> vector<8x16xf32>
    %88 = vector.broadcast %39 : vector<1x16xf32> to vector<8x16xf32>
    %89 = arith.addf %87, %88 : vector<8x16xf32>
    %90 = arith.mulf %79, %89 : vector<8x16xf32>
    %91 = arith.addf %72, %90 : vector<8x16xf32>
    %92 = math.tanh %91 : vector<8x16xf32>
    %cst_60 = arith.constant 1.000000e+00 : f32
    %93 = vector.broadcast %cst_60 : f32 to vector<8x16xf32>
    %94 = arith.subf %93, %86 : vector<8x16xf32>
    %95 = arith.mulf %94, %92 : vector<8x16xf32>
    %96 = arith.mulf %86, %41 : vector<8x16xf32>
    %97 = arith.addf %95, %96 : vector<8x16xf32>
    %98 = vector.extract_strided_slice %6 {offsets = [8, 0], sizes = [8, 16], strides = [1, 1]} : vector<64x16xf32> to vector<8x16xf32>
    %99 = vector.extract_strided_slice %11 {offsets = [8, 0], sizes = [8, 16], strides = [1, 1]} : vector<64x16xf32> to vector<8x16xf32>
    %100 = vector.extract_strided_slice %16 {offsets = [8, 0], sizes = [8, 16], strides = [1, 1]} : vector<64x16xf32> to vector<8x16xf32>
    %cst_61 = arith.constant dense<0.000000e+00> : vector<8x16xf32>
    %101 = tpu.matmul %69, %32, %cst_61 {dimension_numbers = #tpu.dot_dimension_numbers<[1], [0], [0], [1], [0, 0, 1, 1], [], []>} : vector<8x16xf32>, vector<16x16xf32>, vector<8x16xf32> -> vector<8x16xf32>
    %102 = arith.addf %98, %101 : vector<8x16xf32>
    %103 = arith.negf %102 : vector<8x16xf32>
    %104 = math.exp %103 : vector<8x16xf32>
    %cst_62 = arith.constant 1.000000e+00 : f32
    %105 = vector.broadcast %cst_62 : f32 to vector<8x16xf32>
    %106 = arith.addf %105, %104 : vector<8x16xf32>
    %107 = arith.divf %105, %106 : vector<8x16xf32>
    %cst_63 = arith.constant dense<0.000000e+00> : vector<8x16xf32>
    %108 = tpu.matmul %69, %33, %cst_63 {dimension_numbers = #tpu.dot_dimension_numbers<[1], [0], [0], [1], [0, 0, 1, 1], [], []>} : vector<8x16xf32>, vector<16x16xf32>, vector<8x16xf32> -> vector<8x16xf32>
    %109 = arith.addf %99, %108 : vector<8x16xf32>
    %110 = arith.negf %109 : vector<8x16xf32>
    %111 = math.exp %110 : vector<8x16xf32>
    %cst_64 = arith.constant 1.000000e+00 : f32
    %112 = vector.broadcast %cst_64 : f32 to vector<8x16xf32>
    %113 = arith.addf %112, %111 : vector<8x16xf32>
    %114 = arith.divf %112, %113 : vector<8x16xf32>
    %cst_65 = arith.constant dense<0.000000e+00> : vector<8x16xf32>
    %115 = tpu.matmul %69, %34, %cst_65 {dimension_numbers = #tpu.dot_dimension_numbers<[1], [0], [0], [1], [0, 0, 1, 1], [], []>} : vector<8x16xf32>, vector<16x16xf32>, vector<8x16xf32> -> vector<8x16xf32>
    %116 = vector.broadcast %35 : vector<1x16xf32> to vector<8x16xf32>
    %117 = arith.addf %115, %116 : vector<8x16xf32>
    %118 = arith.mulf %107, %117 : vector<8x16xf32>
    %119 = arith.addf %100, %118 : vector<8x16xf32>
    %120 = math.tanh %119 : vector<8x16xf32>
    %cst_66 = arith.constant 1.000000e+00 : f32
    %121 = vector.broadcast %cst_66 : f32 to vector<8x16xf32>
    %122 = arith.subf %121, %114 : vector<8x16xf32>
    %123 = arith.mulf %122, %120 : vector<8x16xf32>
    %124 = arith.mulf %114, %69 : vector<8x16xf32>
    %125 = arith.addf %123, %124 : vector<8x16xf32>
    %126 = vector.extract_strided_slice %21 {offsets = [48, 0], sizes = [8, 16], strides = [1, 1]} : vector<64x16xf32> to vector<8x16xf32>
    %127 = vector.extract_strided_slice %26 {offsets = [48, 0], sizes = [8, 16], strides = [1, 1]} : vector<64x16xf32> to vector<8x16xf32>
    %128 = vector.extract_strided_slice %31 {offsets = [48, 0], sizes = [8, 16], strides = [1, 1]} : vector<64x16xf32> to vector<8x16xf32>
    %cst_67 = arith.constant dense<0.000000e+00> : vector<8x16xf32>
    %129 = tpu.matmul %97, %36, %cst_67 {dimension_numbers = #tpu.dot_dimension_numbers<[1], [0], [0], [1], [0, 0, 1, 1], [], []>} : vector<8x16xf32>, vector<16x16xf32>, vector<8x16xf32> -> vector<8x16xf32>
    %130 = arith.addf %126, %129 : vector<8x16xf32>
    %131 = arith.negf %130 : vector<8x16xf32>
    %132 = math.exp %131 : vector<8x16xf32>
    %cst_68 = arith.constant 1.000000e+00 : f32
    %133 = vector.broadcast %cst_68 : f32 to vector<8x16xf32>
    %134 = arith.addf %133, %132 : vector<8x16xf32>
    %135 = arith.divf %133, %134 : vector<8x16xf32>
    %cst_69 = arith.constant dense<0.000000e+00> : vector<8x16xf32>
    %136 = tpu.matmul %97, %37, %cst_69 {dimension_numbers = #tpu.dot_dimension_numbers<[1], [0], [0], [1], [0, 0, 1, 1], [], []>} : vector<8x16xf32>, vector<16x16xf32>, vector<8x16xf32> -> vector<8x16xf32>
    %137 = arith.addf %127, %136 : vector<8x16xf32>
    %138 = arith.negf %137 : vector<8x16xf32>
    %139 = math.exp %138 : vector<8x16xf32>
    %cst_70 = arith.constant 1.000000e+00 : f32
    %140 = vector.broadcast %cst_70 : f32 to vector<8x16xf32>
    %141 = arith.addf %140, %139 : vector<8x16xf32>
    %142 = arith.divf %140, %141 : vector<8x16xf32>
    %cst_71 = arith.constant dense<0.000000e+00> : vector<8x16xf32>
    %143 = tpu.matmul %97, %38, %cst_71 {dimension_numbers = #tpu.dot_dimension_numbers<[1], [0], [0], [1], [0, 0, 1, 1], [], []>} : vector<8x16xf32>, vector<16x16xf32>, vector<8x16xf32> -> vector<8x16xf32>
    %144 = vector.broadcast %39 : vector<1x16xf32> to vector<8x16xf32>
    %145 = arith.addf %143, %144 : vector<8x16xf32>
    %146 = arith.mulf %135, %145 : vector<8x16xf32>
    %147 = arith.addf %128, %146 : vector<8x16xf32>
    %148 = math.tanh %147 : vector<8x16xf32>
    %cst_72 = arith.constant 1.000000e+00 : f32
    %149 = vector.broadcast %cst_72 : f32 to vector<8x16xf32>
    %150 = arith.subf %149, %142 : vector<8x16xf32>
    %151 = arith.mulf %150, %148 : vector<8x16xf32>
    %152 = arith.mulf %142, %97 : vector<8x16xf32>
    %153 = arith.addf %151, %152 : vector<8x16xf32>
    %154 = vector.extract_strided_slice %6 {offsets = [16, 0], sizes = [8, 16], strides = [1, 1]} : vector<64x16xf32> to vector<8x16xf32>
    %155 = vector.extract_strided_slice %11 {offsets = [16, 0], sizes = [8, 16], strides = [1, 1]} : vector<64x16xf32> to vector<8x16xf32>
    %156 = vector.extract_strided_slice %16 {offsets = [16, 0], sizes = [8, 16], strides = [1, 1]} : vector<64x16xf32> to vector<8x16xf32>
    %cst_73 = arith.constant dense<0.000000e+00> : vector<8x16xf32>
    %157 = tpu.matmul %125, %32, %cst_73 {dimension_numbers = #tpu.dot_dimension_numbers<[1], [0], [0], [1], [0, 0, 1, 1], [], []>} : vector<8x16xf32>, vector<16x16xf32>, vector<8x16xf32> -> vector<8x16xf32>
    %158 = arith.addf %154, %157 : vector<8x16xf32>
    %159 = arith.negf %158 : vector<8x16xf32>
    %160 = math.exp %159 : vector<8x16xf32>
    %cst_74 = arith.constant 1.000000e+00 : f32
    %161 = vector.broadcast %cst_74 : f32 to vector<8x16xf32>
    %162 = arith.addf %161, %160 : vector<8x16xf32>
    %163 = arith.divf %161, %162 : vector<8x16xf32>
    %cst_75 = arith.constant dense<0.000000e+00> : vector<8x16xf32>
    %164 = tpu.matmul %125, %33, %cst_75 {dimension_numbers = #tpu.dot_dimension_numbers<[1], [0], [0], [1], [0, 0, 1, 1], [], []>} : vector<8x16xf32>, vector<16x16xf32>, vector<8x16xf32> -> vector<8x16xf32>
    %165 = arith.addf %155, %164 : vector<8x16xf32>
    %166 = arith.negf %165 : vector<8x16xf32>
    %167 = math.exp %166 : vector<8x16xf32>
    %cst_76 = arith.constant 1.000000e+00 : f32
    %168 = vector.broadcast %cst_76 : f32 to vector<8x16xf32>
    %169 = arith.addf %168, %167 : vector<8x16xf32>
    %170 = arith.divf %168, %169 : vector<8x16xf32>
    %cst_77 = arith.constant dense<0.000000e+00> : vector<8x16xf32>
    %171 = tpu.matmul %125, %34, %cst_77 {dimension_numbers = #tpu.dot_dimension_numbers<[1], [0], [0], [1], [0, 0, 1, 1], [], []>} : vector<8x16xf32>, vector<16x16xf32>, vector<8x16xf32> -> vector<8x16xf32>
    %172 = vector.broadcast %35 : vector<1x16xf32> to vector<8x16xf32>
    %173 = arith.addf %171, %172 : vector<8x16xf32>
    %174 = arith.mulf %163, %173 : vector<8x16xf32>
    %175 = arith.addf %156, %174 : vector<8x16xf32>
    %176 = math.tanh %175 : vector<8x16xf32>
    %cst_78 = arith.constant 1.000000e+00 : f32
    %177 = vector.broadcast %cst_78 : f32 to vector<8x16xf32>
    %178 = arith.subf %177, %170 : vector<8x16xf32>
    %179 = arith.mulf %178, %176 : vector<8x16xf32>
    %180 = arith.mulf %170, %125 : vector<8x16xf32>
    %181 = arith.addf %179, %180 : vector<8x16xf32>
    %182 = vector.extract_strided_slice %21 {offsets = [40, 0], sizes = [8, 16], strides = [1, 1]} : vector<64x16xf32> to vector<8x16xf32>
    %183 = vector.extract_strided_slice %26 {offsets = [40, 0], sizes = [8, 16], strides = [1, 1]} : vector<64x16xf32> to vector<8x16xf32>
    %184 = vector.extract_strided_slice %31 {offsets = [40, 0], sizes = [8, 16], strides = [1, 1]} : vector<64x16xf32> to vector<8x16xf32>
    %cst_79 = arith.constant dense<0.000000e+00> : vector<8x16xf32>
    %185 = tpu.matmul %153, %36, %cst_79 {dimension_numbers = #tpu.dot_dimension_numbers<[1], [0], [0], [1], [0, 0, 1, 1], [], []>} : vector<8x16xf32>, vector<16x16xf32>, vector<8x16xf32> -> vector<8x16xf32>
    %186 = arith.addf %182, %185 : vector<8x16xf32>
    %187 = arith.negf %186 : vector<8x16xf32>
    %188 = math.exp %187 : vector<8x16xf32>
    %cst_80 = arith.constant 1.000000e+00 : f32
    %189 = vector.broadcast %cst_80 : f32 to vector<8x16xf32>
    %190 = arith.addf %189, %188 : vector<8x16xf32>
    %191 = arith.divf %189, %190 : vector<8x16xf32>
    %cst_81 = arith.constant dense<0.000000e+00> : vector<8x16xf32>
    %192 = tpu.matmul %153, %37, %cst_81 {dimension_numbers = #tpu.dot_dimension_numbers<[1], [0], [0], [1], [0, 0, 1, 1], [], []>} : vector<8x16xf32>, vector<16x16xf32>, vector<8x16xf32> -> vector<8x16xf32>
    %193 = arith.addf %183, %192 : vector<8x16xf32>
    %194 = arith.negf %193 : vector<8x16xf32>
    %195 = math.exp %194 : vector<8x16xf32>
    %cst_82 = arith.constant 1.000000e+00 : f32
    %196 = vector.broadcast %cst_82 : f32 to vector<8x16xf32>
    %197 = arith.addf %196, %195 : vector<8x16xf32>
    %198 = arith.divf %196, %197 : vector<8x16xf32>
    %cst_83 = arith.constant dense<0.000000e+00> : vector<8x16xf32>
    %199 = tpu.matmul %153, %38, %cst_83 {dimension_numbers = #tpu.dot_dimension_numbers<[1], [0], [0], [1], [0, 0, 1, 1], [], []>} : vector<8x16xf32>, vector<16x16xf32>, vector<8x16xf32> -> vector<8x16xf32>
    %200 = vector.broadcast %39 : vector<1x16xf32> to vector<8x16xf32>
    %201 = arith.addf %199, %200 : vector<8x16xf32>
    %202 = arith.mulf %191, %201 : vector<8x16xf32>
    %203 = arith.addf %184, %202 : vector<8x16xf32>
    %204 = math.tanh %203 : vector<8x16xf32>
    %cst_84 = arith.constant 1.000000e+00 : f32
    %205 = vector.broadcast %cst_84 : f32 to vector<8x16xf32>
    %206 = arith.subf %205, %198 : vector<8x16xf32>
    %207 = arith.mulf %206, %204 : vector<8x16xf32>
    %208 = arith.mulf %198, %153 : vector<8x16xf32>
    %209 = arith.addf %207, %208 : vector<8x16xf32>
    %210 = vector.extract_strided_slice %6 {offsets = [24, 0], sizes = [8, 16], strides = [1, 1]} : vector<64x16xf32> to vector<8x16xf32>
    %211 = vector.extract_strided_slice %11 {offsets = [24, 0], sizes = [8, 16], strides = [1, 1]} : vector<64x16xf32> to vector<8x16xf32>
    %212 = vector.extract_strided_slice %16 {offsets = [24, 0], sizes = [8, 16], strides = [1, 1]} : vector<64x16xf32> to vector<8x16xf32>
    %cst_85 = arith.constant dense<0.000000e+00> : vector<8x16xf32>
    %213 = tpu.matmul %181, %32, %cst_85 {dimension_numbers = #tpu.dot_dimension_numbers<[1], [0], [0], [1], [0, 0, 1, 1], [], []>} : vector<8x16xf32>, vector<16x16xf32>, vector<8x16xf32> -> vector<8x16xf32>
    %214 = arith.addf %210, %213 : vector<8x16xf32>
    %215 = arith.negf %214 : vector<8x16xf32>
    %216 = math.exp %215 : vector<8x16xf32>
    %cst_86 = arith.constant 1.000000e+00 : f32
    %217 = vector.broadcast %cst_86 : f32 to vector<8x16xf32>
    %218 = arith.addf %217, %216 : vector<8x16xf32>
    %219 = arith.divf %217, %218 : vector<8x16xf32>
    %cst_87 = arith.constant dense<0.000000e+00> : vector<8x16xf32>
    %220 = tpu.matmul %181, %33, %cst_87 {dimension_numbers = #tpu.dot_dimension_numbers<[1], [0], [0], [1], [0, 0, 1, 1], [], []>} : vector<8x16xf32>, vector<16x16xf32>, vector<8x16xf32> -> vector<8x16xf32>
    %221 = arith.addf %211, %220 : vector<8x16xf32>
    %222 = arith.negf %221 : vector<8x16xf32>
    %223 = math.exp %222 : vector<8x16xf32>
    %cst_88 = arith.constant 1.000000e+00 : f32
    %224 = vector.broadcast %cst_88 : f32 to vector<8x16xf32>
    %225 = arith.addf %224, %223 : vector<8x16xf32>
    %226 = arith.divf %224, %225 : vector<8x16xf32>
    %cst_89 = arith.constant dense<0.000000e+00> : vector<8x16xf32>
    %227 = tpu.matmul %181, %34, %cst_89 {dimension_numbers = #tpu.dot_dimension_numbers<[1], [0], [0], [1], [0, 0, 1, 1], [], []>} : vector<8x16xf32>, vector<16x16xf32>, vector<8x16xf32> -> vector<8x16xf32>
    %228 = vector.broadcast %35 : vector<1x16xf32> to vector<8x16xf32>
    %229 = arith.addf %227, %228 : vector<8x16xf32>
    %230 = arith.mulf %219, %229 : vector<8x16xf32>
    %231 = arith.addf %212, %230 : vector<8x16xf32>
    %232 = math.tanh %231 : vector<8x16xf32>
    %cst_90 = arith.constant 1.000000e+00 : f32
    %233 = vector.broadcast %cst_90 : f32 to vector<8x16xf32>
    %234 = arith.subf %233, %226 : vector<8x16xf32>
    %235 = arith.mulf %234, %232 : vector<8x16xf32>
    %236 = arith.mulf %226, %181 : vector<8x16xf32>
    %237 = arith.addf %235, %236 : vector<8x16xf32>
    %238 = vector.extract_strided_slice %21 {offsets = [32, 0], sizes = [8, 16], strides = [1, 1]} : vector<64x16xf32> to vector<8x16xf32>
    %239 = vector.extract_strided_slice %26 {offsets = [32, 0], sizes = [8, 16], strides = [1, 1]} : vector<64x16xf32> to vector<8x16xf32>
    %240 = vector.extract_strided_slice %31 {offsets = [32, 0], sizes = [8, 16], strides = [1, 1]} : vector<64x16xf32> to vector<8x16xf32>
    %cst_91 = arith.constant dense<0.000000e+00> : vector<8x16xf32>
    %241 = tpu.matmul %209, %36, %cst_91 {dimension_numbers = #tpu.dot_dimension_numbers<[1], [0], [0], [1], [0, 0, 1, 1], [], []>} : vector<8x16xf32>, vector<16x16xf32>, vector<8x16xf32> -> vector<8x16xf32>
    %242 = arith.addf %238, %241 : vector<8x16xf32>
    %243 = arith.negf %242 : vector<8x16xf32>
    %244 = math.exp %243 : vector<8x16xf32>
    %cst_92 = arith.constant 1.000000e+00 : f32
    %245 = vector.broadcast %cst_92 : f32 to vector<8x16xf32>
    %246 = arith.addf %245, %244 : vector<8x16xf32>
    %247 = arith.divf %245, %246 : vector<8x16xf32>
    %cst_93 = arith.constant dense<0.000000e+00> : vector<8x16xf32>
    %248 = tpu.matmul %209, %37, %cst_93 {dimension_numbers = #tpu.dot_dimension_numbers<[1], [0], [0], [1], [0, 0, 1, 1], [], []>} : vector<8x16xf32>, vector<16x16xf32>, vector<8x16xf32> -> vector<8x16xf32>
    %249 = arith.addf %239, %248 : vector<8x16xf32>
    %250 = arith.negf %249 : vector<8x16xf32>
    %251 = math.exp %250 : vector<8x16xf32>
    %cst_94 = arith.constant 1.000000e+00 : f32
    %252 = vector.broadcast %cst_94 : f32 to vector<8x16xf32>
    %253 = arith.addf %252, %251 : vector<8x16xf32>
    %254 = arith.divf %252, %253 : vector<8x16xf32>
    %cst_95 = arith.constant dense<0.000000e+00> : vector<8x16xf32>
    %255 = tpu.matmul %209, %38, %cst_95 {dimension_numbers = #tpu.dot_dimension_numbers<[1], [0], [0], [1], [0, 0, 1, 1], [], []>} : vector<8x16xf32>, vector<16x16xf32>, vector<8x16xf32> -> vector<8x16xf32>
    %256 = vector.broadcast %39 : vector<1x16xf32> to vector<8x16xf32>
    %257 = arith.addf %255, %256 : vector<8x16xf32>
    %258 = arith.mulf %247, %257 : vector<8x16xf32>
    %259 = arith.addf %240, %258 : vector<8x16xf32>
    %260 = math.tanh %259 : vector<8x16xf32>
    %cst_96 = arith.constant 1.000000e+00 : f32
    %261 = vector.broadcast %cst_96 : f32 to vector<8x16xf32>
    %262 = arith.subf %261, %254 : vector<8x16xf32>
    %263 = arith.mulf %262, %260 : vector<8x16xf32>
    %264 = arith.mulf %254, %209 : vector<8x16xf32>
    %265 = arith.addf %263, %264 : vector<8x16xf32>
    %266 = vector.extract_strided_slice %6 {offsets = [32, 0], sizes = [8, 16], strides = [1, 1]} : vector<64x16xf32> to vector<8x16xf32>
    %267 = vector.extract_strided_slice %11 {offsets = [32, 0], sizes = [8, 16], strides = [1, 1]} : vector<64x16xf32> to vector<8x16xf32>
    %268 = vector.extract_strided_slice %16 {offsets = [32, 0], sizes = [8, 16], strides = [1, 1]} : vector<64x16xf32> to vector<8x16xf32>
    %cst_97 = arith.constant dense<0.000000e+00> : vector<8x16xf32>
    %269 = tpu.matmul %237, %32, %cst_97 {dimension_numbers = #tpu.dot_dimension_numbers<[1], [0], [0], [1], [0, 0, 1, 1], [], []>} : vector<8x16xf32>, vector<16x16xf32>, vector<8x16xf32> -> vector<8x16xf32>
    %270 = arith.addf %266, %269 : vector<8x16xf32>
    %271 = arith.negf %270 : vector<8x16xf32>
    %272 = math.exp %271 : vector<8x16xf32>
    %cst_98 = arith.constant 1.000000e+00 : f32
    %273 = vector.broadcast %cst_98 : f32 to vector<8x16xf32>
    %274 = arith.addf %273, %272 : vector<8x16xf32>
    %275 = arith.divf %273, %274 : vector<8x16xf32>
    %cst_99 = arith.constant dense<0.000000e+00> : vector<8x16xf32>
    %276 = tpu.matmul %237, %33, %cst_99 {dimension_numbers = #tpu.dot_dimension_numbers<[1], [0], [0], [1], [0, 0, 1, 1], [], []>} : vector<8x16xf32>, vector<16x16xf32>, vector<8x16xf32> -> vector<8x16xf32>
    %277 = arith.addf %267, %276 : vector<8x16xf32>
    %278 = arith.negf %277 : vector<8x16xf32>
    %279 = math.exp %278 : vector<8x16xf32>
    %cst_100 = arith.constant 1.000000e+00 : f32
    %280 = vector.broadcast %cst_100 : f32 to vector<8x16xf32>
    %281 = arith.addf %280, %279 : vector<8x16xf32>
    %282 = arith.divf %280, %281 : vector<8x16xf32>
    %cst_101 = arith.constant dense<0.000000e+00> : vector<8x16xf32>
    %283 = tpu.matmul %237, %34, %cst_101 {dimension_numbers = #tpu.dot_dimension_numbers<[1], [0], [0], [1], [0, 0, 1, 1], [], []>} : vector<8x16xf32>, vector<16x16xf32>, vector<8x16xf32> -> vector<8x16xf32>
    %284 = vector.broadcast %35 : vector<1x16xf32> to vector<8x16xf32>
    %285 = arith.addf %283, %284 : vector<8x16xf32>
    %286 = arith.mulf %275, %285 : vector<8x16xf32>
    %287 = arith.addf %268, %286 : vector<8x16xf32>
    %288 = math.tanh %287 : vector<8x16xf32>
    %cst_102 = arith.constant 1.000000e+00 : f32
    %289 = vector.broadcast %cst_102 : f32 to vector<8x16xf32>
    %290 = arith.subf %289, %282 : vector<8x16xf32>
    %291 = arith.mulf %290, %288 : vector<8x16xf32>
    %292 = arith.mulf %282, %237 : vector<8x16xf32>
    %293 = arith.addf %291, %292 : vector<8x16xf32>
    %294 = vector.extract_strided_slice %21 {offsets = [24, 0], sizes = [8, 16], strides = [1, 1]} : vector<64x16xf32> to vector<8x16xf32>
    %295 = vector.extract_strided_slice %26 {offsets = [24, 0], sizes = [8, 16], strides = [1, 1]} : vector<64x16xf32> to vector<8x16xf32>
    %296 = vector.extract_strided_slice %31 {offsets = [24, 0], sizes = [8, 16], strides = [1, 1]} : vector<64x16xf32> to vector<8x16xf32>
    %cst_103 = arith.constant dense<0.000000e+00> : vector<8x16xf32>
    %297 = tpu.matmul %265, %36, %cst_103 {dimension_numbers = #tpu.dot_dimension_numbers<[1], [0], [0], [1], [0, 0, 1, 1], [], []>} : vector<8x16xf32>, vector<16x16xf32>, vector<8x16xf32> -> vector<8x16xf32>
    %298 = arith.addf %294, %297 : vector<8x16xf32>
    %299 = arith.negf %298 : vector<8x16xf32>
    %300 = math.exp %299 : vector<8x16xf32>
    %cst_104 = arith.constant 1.000000e+00 : f32
    %301 = vector.broadcast %cst_104 : f32 to vector<8x16xf32>
    %302 = arith.addf %301, %300 : vector<8x16xf32>
    %303 = arith.divf %301, %302 : vector<8x16xf32>
    %cst_105 = arith.constant dense<0.000000e+00> : vector<8x16xf32>
    %304 = tpu.matmul %265, %37, %cst_105 {dimension_numbers = #tpu.dot_dimension_numbers<[1], [0], [0], [1], [0, 0, 1, 1], [], []>} : vector<8x16xf32>, vector<16x16xf32>, vector<8x16xf32> -> vector<8x16xf32>
    %305 = arith.addf %295, %304 : vector<8x16xf32>
    %306 = arith.negf %305 : vector<8x16xf32>
    %307 = math.exp %306 : vector<8x16xf32>
    %cst_106 = arith.constant 1.000000e+00 : f32
    %308 = vector.broadcast %cst_106 : f32 to vector<8x16xf32>
    %309 = arith.addf %308, %307 : vector<8x16xf32>
    %310 = arith.divf %308, %309 : vector<8x16xf32>
    %cst_107 = arith.constant dense<0.000000e+00> : vector<8x16xf32>
    %311 = tpu.matmul %265, %38, %cst_107 {dimension_numbers = #tpu.dot_dimension_numbers<[1], [0], [0], [1], [0, 0, 1, 1], [], []>} : vector<8x16xf32>, vector<16x16xf32>, vector<8x16xf32> -> vector<8x16xf32>
    %312 = vector.broadcast %39 : vector<1x16xf32> to vector<8x16xf32>
    %313 = arith.addf %311, %312 : vector<8x16xf32>
    %314 = arith.mulf %303, %313 : vector<8x16xf32>
    %315 = arith.addf %296, %314 : vector<8x16xf32>
    %316 = math.tanh %315 : vector<8x16xf32>
    %cst_108 = arith.constant 1.000000e+00 : f32
    %317 = vector.broadcast %cst_108 : f32 to vector<8x16xf32>
    %318 = arith.subf %317, %310 : vector<8x16xf32>
    %319 = arith.mulf %318, %316 : vector<8x16xf32>
    %320 = arith.mulf %310, %265 : vector<8x16xf32>
    %321 = arith.addf %319, %320 : vector<8x16xf32>
    %322 = vector.extract_strided_slice %6 {offsets = [40, 0], sizes = [8, 16], strides = [1, 1]} : vector<64x16xf32> to vector<8x16xf32>
    %323 = vector.extract_strided_slice %11 {offsets = [40, 0], sizes = [8, 16], strides = [1, 1]} : vector<64x16xf32> to vector<8x16xf32>
    %324 = vector.extract_strided_slice %16 {offsets = [40, 0], sizes = [8, 16], strides = [1, 1]} : vector<64x16xf32> to vector<8x16xf32>
    %cst_109 = arith.constant dense<0.000000e+00> : vector<8x16xf32>
    %325 = tpu.matmul %293, %32, %cst_109 {dimension_numbers = #tpu.dot_dimension_numbers<[1], [0], [0], [1], [0, 0, 1, 1], [], []>} : vector<8x16xf32>, vector<16x16xf32>, vector<8x16xf32> -> vector<8x16xf32>
    %326 = arith.addf %322, %325 : vector<8x16xf32>
    %327 = arith.negf %326 : vector<8x16xf32>
    %328 = math.exp %327 : vector<8x16xf32>
    %cst_110 = arith.constant 1.000000e+00 : f32
    %329 = vector.broadcast %cst_110 : f32 to vector<8x16xf32>
    %330 = arith.addf %329, %328 : vector<8x16xf32>
    %331 = arith.divf %329, %330 : vector<8x16xf32>
    %cst_111 = arith.constant dense<0.000000e+00> : vector<8x16xf32>
    %332 = tpu.matmul %293, %33, %cst_111 {dimension_numbers = #tpu.dot_dimension_numbers<[1], [0], [0], [1], [0, 0, 1, 1], [], []>} : vector<8x16xf32>, vector<16x16xf32>, vector<8x16xf32> -> vector<8x16xf32>
    %333 = arith.addf %323, %332 : vector<8x16xf32>
    %334 = arith.negf %333 : vector<8x16xf32>
    %335 = math.exp %334 : vector<8x16xf32>
    %cst_112 = arith.constant 1.000000e+00 : f32
    %336 = vector.broadcast %cst_112 : f32 to vector<8x16xf32>
    %337 = arith.addf %336, %335 : vector<8x16xf32>
    %338 = arith.divf %336, %337 : vector<8x16xf32>
    %cst_113 = arith.constant dense<0.000000e+00> : vector<8x16xf32>
    %339 = tpu.matmul %293, %34, %cst_113 {dimension_numbers = #tpu.dot_dimension_numbers<[1], [0], [0], [1], [0, 0, 1, 1], [], []>} : vector<8x16xf32>, vector<16x16xf32>, vector<8x16xf32> -> vector<8x16xf32>
    %340 = vector.broadcast %35 : vector<1x16xf32> to vector<8x16xf32>
    %341 = arith.addf %339, %340 : vector<8x16xf32>
    %342 = arith.mulf %331, %341 : vector<8x16xf32>
    %343 = arith.addf %324, %342 : vector<8x16xf32>
    %344 = math.tanh %343 : vector<8x16xf32>
    %cst_114 = arith.constant 1.000000e+00 : f32
    %345 = vector.broadcast %cst_114 : f32 to vector<8x16xf32>
    %346 = arith.subf %345, %338 : vector<8x16xf32>
    %347 = arith.mulf %346, %344 : vector<8x16xf32>
    %348 = arith.mulf %338, %293 : vector<8x16xf32>
    %349 = arith.addf %347, %348 : vector<8x16xf32>
    %350 = vector.extract_strided_slice %21 {offsets = [16, 0], sizes = [8, 16], strides = [1, 1]} : vector<64x16xf32> to vector<8x16xf32>
    %351 = vector.extract_strided_slice %26 {offsets = [16, 0], sizes = [8, 16], strides = [1, 1]} : vector<64x16xf32> to vector<8x16xf32>
    %352 = vector.extract_strided_slice %31 {offsets = [16, 0], sizes = [8, 16], strides = [1, 1]} : vector<64x16xf32> to vector<8x16xf32>
    %cst_115 = arith.constant dense<0.000000e+00> : vector<8x16xf32>
    %353 = tpu.matmul %321, %36, %cst_115 {dimension_numbers = #tpu.dot_dimension_numbers<[1], [0], [0], [1], [0, 0, 1, 1], [], []>} : vector<8x16xf32>, vector<16x16xf32>, vector<8x16xf32> -> vector<8x16xf32>
    %354 = arith.addf %350, %353 : vector<8x16xf32>
    %355 = arith.negf %354 : vector<8x16xf32>
    %356 = math.exp %355 : vector<8x16xf32>
    %cst_116 = arith.constant 1.000000e+00 : f32
    %357 = vector.broadcast %cst_116 : f32 to vector<8x16xf32>
    %358 = arith.addf %357, %356 : vector<8x16xf32>
    %359 = arith.divf %357, %358 : vector<8x16xf32>
    %cst_117 = arith.constant dense<0.000000e+00> : vector<8x16xf32>
    %360 = tpu.matmul %321, %37, %cst_117 {dimension_numbers = #tpu.dot_dimension_numbers<[1], [0], [0], [1], [0, 0, 1, 1], [], []>} : vector<8x16xf32>, vector<16x16xf32>, vector<8x16xf32> -> vector<8x16xf32>
    %361 = arith.addf %351, %360 : vector<8x16xf32>
    %362 = arith.negf %361 : vector<8x16xf32>
    %363 = math.exp %362 : vector<8x16xf32>
    %cst_118 = arith.constant 1.000000e+00 : f32
    %364 = vector.broadcast %cst_118 : f32 to vector<8x16xf32>
    %365 = arith.addf %364, %363 : vector<8x16xf32>
    %366 = arith.divf %364, %365 : vector<8x16xf32>
    %cst_119 = arith.constant dense<0.000000e+00> : vector<8x16xf32>
    %367 = tpu.matmul %321, %38, %cst_119 {dimension_numbers = #tpu.dot_dimension_numbers<[1], [0], [0], [1], [0, 0, 1, 1], [], []>} : vector<8x16xf32>, vector<16x16xf32>, vector<8x16xf32> -> vector<8x16xf32>
    %368 = vector.broadcast %39 : vector<1x16xf32> to vector<8x16xf32>
    %369 = arith.addf %367, %368 : vector<8x16xf32>
    %370 = arith.mulf %359, %369 : vector<8x16xf32>
    %371 = arith.addf %352, %370 : vector<8x16xf32>
    %372 = math.tanh %371 : vector<8x16xf32>
    %cst_120 = arith.constant 1.000000e+00 : f32
    %373 = vector.broadcast %cst_120 : f32 to vector<8x16xf32>
    %374 = arith.subf %373, %366 : vector<8x16xf32>
    %375 = arith.mulf %374, %372 : vector<8x16xf32>
    %376 = arith.mulf %366, %321 : vector<8x16xf32>
    %377 = arith.addf %375, %376 : vector<8x16xf32>
    %378 = vector.extract_strided_slice %6 {offsets = [48, 0], sizes = [8, 16], strides = [1, 1]} : vector<64x16xf32> to vector<8x16xf32>
    %379 = vector.extract_strided_slice %11 {offsets = [48, 0], sizes = [8, 16], strides = [1, 1]} : vector<64x16xf32> to vector<8x16xf32>
    %380 = vector.extract_strided_slice %16 {offsets = [48, 0], sizes = [8, 16], strides = [1, 1]} : vector<64x16xf32> to vector<8x16xf32>
    %cst_121 = arith.constant dense<0.000000e+00> : vector<8x16xf32>
    %381 = tpu.matmul %349, %32, %cst_121 {dimension_numbers = #tpu.dot_dimension_numbers<[1], [0], [0], [1], [0, 0, 1, 1], [], []>} : vector<8x16xf32>, vector<16x16xf32>, vector<8x16xf32> -> vector<8x16xf32>
    %382 = arith.addf %378, %381 : vector<8x16xf32>
    %383 = arith.negf %382 : vector<8x16xf32>
    %384 = math.exp %383 : vector<8x16xf32>
    %cst_122 = arith.constant 1.000000e+00 : f32
    %385 = vector.broadcast %cst_122 : f32 to vector<8x16xf32>
    %386 = arith.addf %385, %384 : vector<8x16xf32>
    %387 = arith.divf %385, %386 : vector<8x16xf32>
    %cst_123 = arith.constant dense<0.000000e+00> : vector<8x16xf32>
    %388 = tpu.matmul %349, %33, %cst_123 {dimension_numbers = #tpu.dot_dimension_numbers<[1], [0], [0], [1], [0, 0, 1, 1], [], []>} : vector<8x16xf32>, vector<16x16xf32>, vector<8x16xf32> -> vector<8x16xf32>
    %389 = arith.addf %379, %388 : vector<8x16xf32>
    %390 = arith.negf %389 : vector<8x16xf32>
    %391 = math.exp %390 : vector<8x16xf32>
    %cst_124 = arith.constant 1.000000e+00 : f32
    %392 = vector.broadcast %cst_124 : f32 to vector<8x16xf32>
    %393 = arith.addf %392, %391 : vector<8x16xf32>
    %394 = arith.divf %392, %393 : vector<8x16xf32>
    %cst_125 = arith.constant dense<0.000000e+00> : vector<8x16xf32>
    %395 = tpu.matmul %349, %34, %cst_125 {dimension_numbers = #tpu.dot_dimension_numbers<[1], [0], [0], [1], [0, 0, 1, 1], [], []>} : vector<8x16xf32>, vector<16x16xf32>, vector<8x16xf32> -> vector<8x16xf32>
    %396 = vector.broadcast %35 : vector<1x16xf32> to vector<8x16xf32>
    %397 = arith.addf %395, %396 : vector<8x16xf32>
    %398 = arith.mulf %387, %397 : vector<8x16xf32>
    %399 = arith.addf %380, %398 : vector<8x16xf32>
    %400 = math.tanh %399 : vector<8x16xf32>
    %cst_126 = arith.constant 1.000000e+00 : f32
    %401 = vector.broadcast %cst_126 : f32 to vector<8x16xf32>
    %402 = arith.subf %401, %394 : vector<8x16xf32>
    %403 = arith.mulf %402, %400 : vector<8x16xf32>
    %404 = arith.mulf %394, %349 : vector<8x16xf32>
    %405 = arith.addf %403, %404 : vector<8x16xf32>
    %406 = vector.extract_strided_slice %21 {offsets = [8, 0], sizes = [8, 16], strides = [1, 1]} : vector<64x16xf32> to vector<8x16xf32>
    %407 = vector.extract_strided_slice %26 {offsets = [8, 0], sizes = [8, 16], strides = [1, 1]} : vector<64x16xf32> to vector<8x16xf32>
    %408 = vector.extract_strided_slice %31 {offsets = [8, 0], sizes = [8, 16], strides = [1, 1]} : vector<64x16xf32> to vector<8x16xf32>
    %cst_127 = arith.constant dense<0.000000e+00> : vector<8x16xf32>
    %409 = tpu.matmul %377, %36, %cst_127 {dimension_numbers = #tpu.dot_dimension_numbers<[1], [0], [0], [1], [0, 0, 1, 1], [], []>} : vector<8x16xf32>, vector<16x16xf32>, vector<8x16xf32> -> vector<8x16xf32>
    %410 = arith.addf %406, %409 : vector<8x16xf32>
    %411 = arith.negf %410 : vector<8x16xf32>
    %412 = math.exp %411 : vector<8x16xf32>
    %cst_128 = arith.constant 1.000000e+00 : f32
    %413 = vector.broadcast %cst_128 : f32 to vector<8x16xf32>
    %414 = arith.addf %413, %412 : vector<8x16xf32>
    %415 = arith.divf %413, %414 : vector<8x16xf32>
    %cst_129 = arith.constant dense<0.000000e+00> : vector<8x16xf32>
    %416 = tpu.matmul %377, %37, %cst_129 {dimension_numbers = #tpu.dot_dimension_numbers<[1], [0], [0], [1], [0, 0, 1, 1], [], []>} : vector<8x16xf32>, vector<16x16xf32>, vector<8x16xf32> -> vector<8x16xf32>
    %417 = arith.addf %407, %416 : vector<8x16xf32>
    %418 = arith.negf %417 : vector<8x16xf32>
    %419 = math.exp %418 : vector<8x16xf32>
    %cst_130 = arith.constant 1.000000e+00 : f32
    %420 = vector.broadcast %cst_130 : f32 to vector<8x16xf32>
    %421 = arith.addf %420, %419 : vector<8x16xf32>
    %422 = arith.divf %420, %421 : vector<8x16xf32>
    %cst_131 = arith.constant dense<0.000000e+00> : vector<8x16xf32>
    %423 = tpu.matmul %377, %38, %cst_131 {dimension_numbers = #tpu.dot_dimension_numbers<[1], [0], [0], [1], [0, 0, 1, 1], [], []>} : vector<8x16xf32>, vector<16x16xf32>, vector<8x16xf32> -> vector<8x16xf32>
    %424 = vector.broadcast %39 : vector<1x16xf32> to vector<8x16xf32>
    %425 = arith.addf %423, %424 : vector<8x16xf32>
    %426 = arith.mulf %415, %425 : vector<8x16xf32>
    %427 = arith.addf %408, %426 : vector<8x16xf32>
    %428 = math.tanh %427 : vector<8x16xf32>
    %cst_132 = arith.constant 1.000000e+00 : f32
    %429 = vector.broadcast %cst_132 : f32 to vector<8x16xf32>
    %430 = arith.subf %429, %422 : vector<8x16xf32>
    %431 = arith.mulf %430, %428 : vector<8x16xf32>
    %432 = arith.mulf %422, %377 : vector<8x16xf32>
    %433 = arith.addf %431, %432 : vector<8x16xf32>
    %434 = vector.extract_strided_slice %6 {offsets = [56, 0], sizes = [8, 16], strides = [1, 1]} : vector<64x16xf32> to vector<8x16xf32>
    %435 = vector.extract_strided_slice %11 {offsets = [56, 0], sizes = [8, 16], strides = [1, 1]} : vector<64x16xf32> to vector<8x16xf32>
    %436 = vector.extract_strided_slice %16 {offsets = [56, 0], sizes = [8, 16], strides = [1, 1]} : vector<64x16xf32> to vector<8x16xf32>
    %cst_133 = arith.constant dense<0.000000e+00> : vector<8x16xf32>
    %437 = tpu.matmul %405, %32, %cst_133 {dimension_numbers = #tpu.dot_dimension_numbers<[1], [0], [0], [1], [0, 0, 1, 1], [], []>} : vector<8x16xf32>, vector<16x16xf32>, vector<8x16xf32> -> vector<8x16xf32>
    %438 = arith.addf %434, %437 : vector<8x16xf32>
    %439 = arith.negf %438 : vector<8x16xf32>
    %440 = math.exp %439 : vector<8x16xf32>
    %cst_134 = arith.constant 1.000000e+00 : f32
    %441 = vector.broadcast %cst_134 : f32 to vector<8x16xf32>
    %442 = arith.addf %441, %440 : vector<8x16xf32>
    %443 = arith.divf %441, %442 : vector<8x16xf32>
    %cst_135 = arith.constant dense<0.000000e+00> : vector<8x16xf32>
    %444 = tpu.matmul %405, %33, %cst_135 {dimension_numbers = #tpu.dot_dimension_numbers<[1], [0], [0], [1], [0, 0, 1, 1], [], []>} : vector<8x16xf32>, vector<16x16xf32>, vector<8x16xf32> -> vector<8x16xf32>
    %445 = arith.addf %435, %444 : vector<8x16xf32>
    %446 = arith.negf %445 : vector<8x16xf32>
    %447 = math.exp %446 : vector<8x16xf32>
    %cst_136 = arith.constant 1.000000e+00 : f32
    %448 = vector.broadcast %cst_136 : f32 to vector<8x16xf32>
    %449 = arith.addf %448, %447 : vector<8x16xf32>
    %450 = arith.divf %448, %449 : vector<8x16xf32>
    %cst_137 = arith.constant dense<0.000000e+00> : vector<8x16xf32>
    %451 = tpu.matmul %405, %34, %cst_137 {dimension_numbers = #tpu.dot_dimension_numbers<[1], [0], [0], [1], [0, 0, 1, 1], [], []>} : vector<8x16xf32>, vector<16x16xf32>, vector<8x16xf32> -> vector<8x16xf32>
    %452 = vector.broadcast %35 : vector<1x16xf32> to vector<8x16xf32>
    %453 = arith.addf %451, %452 : vector<8x16xf32>
    %454 = arith.mulf %443, %453 : vector<8x16xf32>
    %455 = arith.addf %436, %454 : vector<8x16xf32>
    %456 = math.tanh %455 : vector<8x16xf32>
    %cst_138 = arith.constant 1.000000e+00 : f32
    %457 = vector.broadcast %cst_138 : f32 to vector<8x16xf32>
    %458 = arith.subf %457, %450 : vector<8x16xf32>
    %459 = arith.mulf %458, %456 : vector<8x16xf32>
    %460 = arith.mulf %450, %405 : vector<8x16xf32>
    %461 = arith.addf %459, %460 : vector<8x16xf32>
    %462 = vector.extract_strided_slice %21 {offsets = [0, 0], sizes = [8, 16], strides = [1, 1]} : vector<64x16xf32> to vector<8x16xf32>
    %463 = vector.extract_strided_slice %26 {offsets = [0, 0], sizes = [8, 16], strides = [1, 1]} : vector<64x16xf32> to vector<8x16xf32>
    %464 = vector.extract_strided_slice %31 {offsets = [0, 0], sizes = [8, 16], strides = [1, 1]} : vector<64x16xf32> to vector<8x16xf32>
    %cst_139 = arith.constant dense<0.000000e+00> : vector<8x16xf32>
    %465 = tpu.matmul %433, %36, %cst_139 {dimension_numbers = #tpu.dot_dimension_numbers<[1], [0], [0], [1], [0, 0, 1, 1], [], []>} : vector<8x16xf32>, vector<16x16xf32>, vector<8x16xf32> -> vector<8x16xf32>
    %466 = arith.addf %462, %465 : vector<8x16xf32>
    %467 = arith.negf %466 : vector<8x16xf32>
    %468 = math.exp %467 : vector<8x16xf32>
    %cst_140 = arith.constant 1.000000e+00 : f32
    %469 = vector.broadcast %cst_140 : f32 to vector<8x16xf32>
    %470 = arith.addf %469, %468 : vector<8x16xf32>
    %471 = arith.divf %469, %470 : vector<8x16xf32>
    %cst_141 = arith.constant dense<0.000000e+00> : vector<8x16xf32>
    %472 = tpu.matmul %433, %37, %cst_141 {dimension_numbers = #tpu.dot_dimension_numbers<[1], [0], [0], [1], [0, 0, 1, 1], [], []>} : vector<8x16xf32>, vector<16x16xf32>, vector<8x16xf32> -> vector<8x16xf32>
    %473 = arith.addf %463, %472 : vector<8x16xf32>
    %474 = arith.negf %473 : vector<8x16xf32>
    %475 = math.exp %474 : vector<8x16xf32>
    %cst_142 = arith.constant 1.000000e+00 : f32
    %476 = vector.broadcast %cst_142 : f32 to vector<8x16xf32>
    %477 = arith.addf %476, %475 : vector<8x16xf32>
    %478 = arith.divf %476, %477 : vector<8x16xf32>
    %cst_143 = arith.constant dense<0.000000e+00> : vector<8x16xf32>
    %479 = tpu.matmul %433, %38, %cst_143 {dimension_numbers = #tpu.dot_dimension_numbers<[1], [0], [0], [1], [0, 0, 1, 1], [], []>} : vector<8x16xf32>, vector<16x16xf32>, vector<8x16xf32> -> vector<8x16xf32>
    %480 = vector.broadcast %39 : vector<1x16xf32> to vector<8x16xf32>
    %481 = arith.addf %479, %480 : vector<8x16xf32>
    %482 = arith.mulf %471, %481 : vector<8x16xf32>
    %483 = arith.addf %464, %482 : vector<8x16xf32>
    %484 = math.tanh %483 : vector<8x16xf32>
    %cst_144 = arith.constant 1.000000e+00 : f32
    %485 = vector.broadcast %cst_144 : f32 to vector<8x16xf32>
    %486 = arith.subf %485, %478 : vector<8x16xf32>
    %487 = arith.mulf %486, %484 : vector<8x16xf32>
    %488 = arith.mulf %478, %433 : vector<8x16xf32>
    %489 = arith.addf %487, %488 : vector<8x16xf32>
    %490 = tpu.concatenate %69, %125, %181, %237, %293, %349, %405, %461 in 0 : vector<8x16xf32>, vector<8x16xf32>, vector<8x16xf32>, vector<8x16xf32>, vector<8x16xf32>, vector<8x16xf32>, vector<8x16xf32>, vector<8x16xf32> -> vector<64x16xf32>
    %491 = tpu.concatenate %489, %433, %377, %321, %265, %209, %153, %97 in 0 : vector<8x16xf32>, vector<8x16xf32>, vector<8x16xf32>, vector<8x16xf32>, vector<8x16xf32>, vector<8x16xf32>, vector<8x16xf32>, vector<8x16xf32> -> vector<64x16xf32>
    %c0_145 = arith.constant 0 : index
    %c0_146 = arith.constant 0 : index
    %492 = vector.load %arg22[%c0_145, %c0_146] : memref<16x32xf32, #tpu.memory_space<vmem>>, vector<16x32xf32>
    %cst_147 = arith.constant dense<0.000000e+00> : vector<64x32xf32>
    %493 = tpu.matmul %490, %492, %cst_147 {dimension_numbers = #tpu.dot_dimension_numbers<[1], [0], [0], [1], [0, 0, 1, 1], [], []>} : vector<64x16xf32>, vector<16x32xf32>, vector<64x32xf32> -> vector<64x32xf32>
    %c0_148 = arith.constant 0 : index
    %c0_149 = arith.constant 0 : index
    %494 = vector.load %arg23[%c0_148, %c0_149] : memref<16x32xf32, #tpu.memory_space<vmem>>, vector<16x32xf32>
    %cst_150 = arith.constant dense<0.000000e+00> : vector<64x32xf32>
    %495 = tpu.matmul %491, %494, %cst_150 {dimension_numbers = #tpu.dot_dimension_numbers<[1], [0], [0], [1], [0, 0, 1, 1], [], []>} : vector<64x16xf32>, vector<16x32xf32>, vector<64x32xf32> -> vector<64x32xf32>
    %496 = arith.addf %493, %495 : vector<64x32xf32>
    %c0_151 = arith.constant 0 : index
    %c0_152 = arith.constant 0 : index
    %497 = vector.load %arg24[%c0_151, %c0_152] : memref<1x32xf32, #tpu.memory_space<vmem>>, vector<1x32xf32>
    %498 = vector.broadcast %497 : vector<1x32xf32> to vector<64x32xf32>
    %499 = arith.addf %496, %498 : vector<64x32xf32>
    %500 = math.tanh %499 : vector<64x32xf32>
    %c0_153 = arith.constant 0 : index
    %c0_154 = arith.constant 0 : index
    %501 = vector.load %arg25[%c0_153, %c0_154] : memref<1x32xf32, #tpu.memory_space<vmem>>, vector<1x32xf32>
    %502 = vector.broadcast %501 : vector<1x32xf32> to vector<64x32xf32>
    %503 = arith.mulf %500, %502 : vector<64x32xf32>
    %cst_155 = arith.constant dense<0.000000e+00> : vector<64xf32>
    %504 = vector.multi_reduction <add>, %503, %cst_155 [1] : vector<64x32xf32> to vector<64xf32>
    %505 = vector.shape_cast %504 : vector<64xf32> to vector<64x1xf32>
    %506 = math.tanh %505 : vector<64x1xf32>
    %507 = vector.shape_cast %506 : vector<64x1xf32> to vector<8x8x1xf32>
    %cst_156 = arith.constant dense<0xFF800000> : vector<8x1xf32>
    %508 = vector.multi_reduction <maximumf>, %507, %cst_156 [0] : vector<8x8x1xf32> to vector<8x1xf32>
    %509 = vector.shape_cast %508 : vector<8x1xf32> to vector<1x8x1xf32>
    %510 = vector.broadcast %509 : vector<1x8x1xf32> to vector<8x8x1xf32>
    %511 = arith.subf %507, %510 : vector<8x8x1xf32>
    %512 = math.exp %511 : vector<8x8x1xf32>
    %cst_157 = arith.constant dense<0.000000e+00> : vector<8x1xf32>
    %513 = vector.multi_reduction <add>, %512, %cst_157 [0] : vector<8x8x1xf32> to vector<8x1xf32>
    %514 = vector.shape_cast %513 : vector<8x1xf32> to vector<1x8x1xf32>
    %515 = tpu.reciprocal %514 {approx = true} : vector<1x8x1xf32> -> vector<1x8x1xf32>
    %516 = vector.broadcast %515 : vector<1x8x1xf32> to vector<8x8x1xf32>
    %517 = arith.mulf %512, %516 : vector<8x8x1xf32>
    %518 = vector.broadcast %517 : vector<8x8x1xf32> to vector<8x8x32xf32>
    %519 = arith.mulf %0, %518 : vector<8x8x32xf32>
    %cst_158 = arith.constant dense<0.000000e+00> : vector<8x32xf32>
    %520 = vector.multi_reduction <add>, %519, %cst_158 [0] : vector<8x8x32xf32> to vector<8x32xf32>
    %c0_159 = arith.constant 0 : index
    %c0_160 = arith.constant 0 : index
    %521 = vector.load %arg26[%c0_159, %c0_160] : memref<32x16xf32, #tpu.memory_space<vmem>>, vector<32x16xf32>
    %cst_161 = arith.constant dense<0.000000e+00> : vector<8x16xf32>
    %522 = tpu.matmul %520, %521, %cst_161 {dimension_numbers = #tpu.dot_dimension_numbers<[1], [0], [0], [1], [0, 0, 1, 1], [], []>} : vector<8x32xf32>, vector<32x16xf32>, vector<8x16xf32> -> vector<8x16xf32>
    %c0_162 = arith.constant 0 : index
    %c0_163 = arith.constant 0 : index
    %523 = vector.load %arg27[%c0_162, %c0_163] : memref<1x16xf32, #tpu.memory_space<vmem>>, vector<1x16xf32>
    %524 = vector.broadcast %523 : vector<1x16xf32> to vector<8x16xf32>
    %525 = arith.addf %522, %524 : vector<8x16xf32>
    %cst_164 = arith.constant 0.000000e+00 : f32
    %526 = vector.broadcast %cst_164 : f32 to vector<8x16xf32>
    %527 = arith.maximumf %525, %526 : vector<8x16xf32>
    %c0_165 = arith.constant 0 : index
    %c0_166 = arith.constant 0 : index
    %528 = vector.load %arg28[%c0_165, %c0_166] : memref<16x4xf32, #tpu.memory_space<vmem>>, vector<16x4xf32>
    %cst_167 = arith.constant dense<0.000000e+00> : vector<8x4xf32>
    %529 = tpu.matmul %527, %528, %cst_167 {dimension_numbers = #tpu.dot_dimension_numbers<[1], [0], [0], [1], [0, 0, 1, 1], [], []>} : vector<8x16xf32>, vector<16x4xf32>, vector<8x4xf32> -> vector<8x4xf32>
    %c0_168 = arith.constant 0 : index
    %c0_169 = arith.constant 0 : index
    %530 = vector.load %arg29[%c0_168, %c0_169] : memref<1x4xf32, #tpu.memory_space<vmem>>, vector<1x4xf32>
    %531 = vector.broadcast %530 : vector<1x4xf32> to vector<8x4xf32>
    %532 = arith.addf %529, %531 : vector<8x4xf32>
    %533 = arith.negf %532 : vector<8x4xf32>
    %534 = math.exp %533 : vector<8x4xf32>
    %cst_170 = arith.constant 1.000000e+00 : f32
    %535 = vector.broadcast %cst_170 : f32 to vector<8x4xf32>
    %536 = arith.addf %535, %534 : vector<8x4xf32>
    %537 = arith.divf %535, %536 : vector<8x4xf32>
    %c0_171 = arith.constant 0 : index
    %c0_172 = arith.constant 0 : index
    %538 = vector.load %arg30[%c0_171, %c0_172] : memref<8x4xf32, #tpu.memory_space<vmem>>, vector<8x4xf32>
    tpu.vector_store %arg30[%c0_171, %c0_172], %537 {strides = array<i32>} : memref<8x4xf32, #tpu.memory_space<vmem>>, vector<8x4xf32>,
    return
  }
  func.func @transform_0(%arg0: i32) -> (i32, i32, i32) {
    %c0_i32 = arith.constant 0 : i32
    %c0_i32_0 = arith.constant 0 : i32
    %c0_i32_1 = arith.constant 0 : i32
    return %c0_i32, %arg0, %c0_i32_0 : i32, i32, i32
  }
  func.func @transform_1(%arg0: i32) -> (i32, i32) {
    %c0_i32 = arith.constant 0 : i32
    %c0_i32_0 = arith.constant 0 : i32
    %c0_i32_1 = arith.constant 0 : i32
    return %c0_i32, %c0_i32_0 : i32, i32
  }
  func.func @transform_2(%arg0: i32) -> (i32, i32) {
    %c0_i32 = arith.constant 0 : i32
    %c0_i32_0 = arith.constant 0 : i32
    %c0_i32_1 = arith.constant 0 : i32
    return %c0_i32, %c0_i32_0 : i32, i32
  }
  func.func @transform_3(%arg0: i32) -> (i32, i32) {
    %c0_i32 = arith.constant 0 : i32
    %c0_i32_0 = arith.constant 0 : i32
    %c0_i32_1 = arith.constant 0 : i32
    return %c0_i32, %c0_i32_0 : i32, i32
  }
  func.func @transform_4(%arg0: i32) -> (i32, i32) {
    %c0_i32 = arith.constant 0 : i32
    %c0_i32_0 = arith.constant 0 : i32
    %c0_i32_1 = arith.constant 0 : i32
    return %c0_i32, %c0_i32_0 : i32, i32
  }
  func.func @transform_5(%arg0: i32) -> (i32, i32) {
    %c0_i32 = arith.constant 0 : i32
    %c0_i32_0 = arith.constant 0 : i32
    %c0_i32_1 = arith.constant 0 : i32
    return %c0_i32, %c0_i32_0 : i32, i32
  }
  func.func @transform_6(%arg0: i32) -> (i32, i32) {
    %c0_i32 = arith.constant 0 : i32
    %c0_i32_0 = arith.constant 0 : i32
    %c0_i32_1 = arith.constant 0 : i32
    return %c0_i32, %c0_i32_0 : i32, i32
  }
  func.func @transform_7(%arg0: i32) -> (i32, i32) {
    %c0_i32 = arith.constant 0 : i32
    %c0_i32_0 = arith.constant 0 : i32
    %c0_i32_1 = arith.constant 0 : i32
    return %c0_i32, %c0_i32_0 : i32, i32
  }
  func.func @transform_8(%arg0: i32) -> (i32, i32) {
    %c0_i32 = arith.constant 0 : i32
    %c0_i32_0 = arith.constant 0 : i32
    %c0_i32_1 = arith.constant 0 : i32
    return %c0_i32, %c0_i32_0 : i32, i32
  }
  func.func @transform_9(%arg0: i32) -> (i32, i32) {
    %c0_i32 = arith.constant 0 : i32
    %c0_i32_0 = arith.constant 0 : i32
    %c0_i32_1 = arith.constant 0 : i32
    return %c0_i32, %c0_i32_0 : i32, i32
  }
  func.func @transform_10(%arg0: i32) -> (i32, i32) {
    %c0_i32 = arith.constant 0 : i32
    %c0_i32_0 = arith.constant 0 : i32
    %c0_i32_1 = arith.constant 0 : i32
    return %c0_i32, %c0_i32_0 : i32, i32
  }
  func.func @transform_11(%arg0: i32) -> (i32, i32) {
    %c0_i32 = arith.constant 0 : i32
    %c0_i32_0 = arith.constant 0 : i32
    %c0_i32_1 = arith.constant 0 : i32
    return %c0_i32, %c0_i32_0 : i32, i32
  }
  func.func @transform_12(%arg0: i32) -> (i32, i32) {
    %c0_i32 = arith.constant 0 : i32
    %c0_i32_0 = arith.constant 0 : i32
    %c0_i32_1 = arith.constant 0 : i32
    return %c0_i32, %c0_i32_0 : i32, i32
  }
  func.func @transform_13(%arg0: i32) -> (i32, i32) {
    %c0_i32 = arith.constant 0 : i32
    %c0_i32_0 = arith.constant 0 : i32
    %c0_i32_1 = arith.constant 0 : i32
    return %c0_i32, %c0_i32_0 : i32, i32
  }
  func.func @transform_14(%arg0: i32) -> (i32, i32) {
    %c0_i32 = arith.constant 0 : i32
    %c0_i32_0 = arith.constant 0 : i32
    %c0_i32_1 = arith.constant 0 : i32
    return %c0_i32, %c0_i32_0 : i32, i32
  }
  func.func @transform_15(%arg0: i32) -> (i32, i32) {
    %c0_i32 = arith.constant 0 : i32
    %c0_i32_0 = arith.constant 0 : i32
    %c0_i32_1 = arith.constant 0 : i32
    return %c0_i32, %c0_i32_0 : i32, i32
  }
  func.func @transform_16(%arg0: i32) -> (i32, i32) {
    %c0_i32 = arith.constant 0 : i32
    %c0_i32_0 = arith.constant 0 : i32
    %c0_i32_1 = arith.constant 0 : i32
    return %c0_i32, %c0_i32_0 : i32, i32
  }
  func.func @transform_17(%arg0: i32) -> (i32, i32) {
    %c0_i32 = arith.constant 0 : i32
    %c0_i32_0 = arith.constant 0 : i32
    %c0_i32_1 = arith.constant 0 : i32
    return %c0_i32, %c0_i32_0 : i32, i32
  }
  func.func @transform_18(%arg0: i32) -> (i32, i32) {
    %c0_i32 = arith.constant 0 : i32
    %c0_i32_0 = arith.constant 0 : i32
    %c0_i32_1 = arith.constant 0 : i32
    return %c0_i32, %c0_i32_0 : i32, i32
  }
  func.func @transform_19(%arg0: i32) -> (i32, i32) {
    %c0_i32 = arith.constant 0 : i32
    %c0_i32_0 = arith.constant 0 : i32
    %c0_i32_1 = arith.constant 0 : i32
    return %c0_i32, %c0_i32_0 : i32, i32
  }
  func.func @transform_20(%arg0: i32) -> (i32, i32) {
    %c0_i32 = arith.constant 0 : i32
    %c0_i32_0 = arith.constant 0 : i32
    %c0_i32_1 = arith.constant 0 : i32
    return %c0_i32, %c0_i32_0 : i32, i32
  }
  func.func @transform_21(%arg0: i32) -> (i32, i32) {
    %c0_i32 = arith.constant 0 : i32
    %c0_i32_0 = arith.constant 0 : i32
    %c0_i32_1 = arith.constant 0 : i32
    return %c0_i32, %c0_i32_0 : i32, i32
  }
  func.func @transform_22(%arg0: i32) -> (i32, i32) {
    %c0_i32 = arith.constant 0 : i32
    %c0_i32_0 = arith.constant 0 : i32
    %c0_i32_1 = arith.constant 0 : i32
    return %c0_i32, %c0_i32_0 : i32, i32
  }
  func.func @transform_23(%arg0: i32) -> (i32, i32) {
    %c0_i32 = arith.constant 0 : i32
    %c0_i32_0 = arith.constant 0 : i32
    %c0_i32_1 = arith.constant 0 : i32
    return %c0_i32, %c0_i32_0 : i32, i32
  }
  func.func @transform_24(%arg0: i32) -> (i32, i32) {
    %c0_i32 = arith.constant 0 : i32
    %c0_i32_0 = arith.constant 0 : i32
    %c0_i32_1 = arith.constant 0 : i32
    return %c0_i32, %c0_i32_0 : i32, i32
  }
  func.func @transform_25(%arg0: i32) -> (i32, i32) {
    %c0_i32 = arith.constant 0 : i32
    %c0_i32_0 = arith.constant 0 : i32
    %c0_i32_1 = arith.constant 0 : i32
    return %c0_i32, %c0_i32_0 : i32, i32
  }
  func.func @transform_26(%arg0: i32) -> (i32, i32) {
    %c0_i32 = arith.constant 0 : i32
    %c0_i32_0 = arith.constant 0 : i32
    %c0_i32_1 = arith.constant 0 : i32
    return %c0_i32, %c0_i32_0 : i32, i32
  }
  func.func @transform_27(%arg0: i32) -> (i32, i32) {
    %c0_i32 = arith.constant 0 : i32
    %c0_i32_0 = arith.constant 0 : i32
    %c0_i32_1 = arith.constant 0 : i32
    return %c0_i32, %c0_i32_0 : i32, i32
  }
  func.func @transform_28(%arg0: i32) -> (i32, i32) {
    %c0_i32 = arith.constant 0 : i32
    %c0_i32_0 = arith.constant 0 : i32
    %c0_i32_1 = arith.constant 0 : i32
    return %c0_i32, %c0_i32_0 : i32, i32
  }
  func.func @transform_29(%arg0: i32) -> (i32, i32) {
    %c0_i32 = arith.constant 0 : i32
    %c0_i32_0 = arith.constant 0 : i32
    return %arg0, %c0_i32 : i32, i32
  }
}

</mosaic_0001>

<llo_original>
// kernel: tpu_custom_call.1
$region0: #{tpu_custom_call.1}
  #allocation0 [shape = 'u32[]', space=smem, size = 0x4, offset = 0x4, fixed_abs, tag = 'smem constant byte address 0x4 - core index']
  #allocation1 [shape = 'u32[72,128]{1,0:T(1,128)}', space=vmem, size = 0x9000, scoped, tag = 'internal scratch']
  %s0 = inlined_call_operand.smem [shape: u32[30], index: -1, kind: input, shape index: {}]
  %s1 = sld [smem:[%s0]]
  %s2 = scalar_lea.smem %s0, 1
  %s3 = sld [smem:[%s2]]
  %s4 = scalar_lea.smem %s0, 2
  %s5 = sld [smem:[%s4]]
  %s6 = scalar_lea.smem %s0, 3
  %s7 = sld [smem:[%s6]]
  %s8 = scalar_lea.smem %s0, 4
  %s9 = sld [smem:[%s8]]
  %s10 = scalar_lea.smem %s0, 5
  %s11 = sld [smem:[%s10]]
  %s12 = scalar_lea.smem %s0, 6
  %s13 = sld [smem:[%s12]]
  %s14 = scalar_lea.smem %s0, 7
  %s15 = sld [smem:[%s14]]
  %s16 = scalar_lea.smem %s0, 8
  %s17 = sld [smem:[%s16]]
  %s18 = scalar_lea.smem %s0, 9
  %s19 = sld [smem:[%s18]]
  %s20 = scalar_lea.smem %s0, 10
  %s21 = sld [smem:[%s20]]
  %s22 = scalar_lea.smem %s0, 11
  %s23 = sld [smem:[%s22]]
  %s24 = scalar_lea.smem %s0, 12
  %s25 = sld [smem:[%s24]]
  %s26 = scalar_lea.smem %s0, 13
  %s27 = sld [smem:[%s26]]
  %s28 = scalar_lea.smem %s0, 14
  %s29 = sld [smem:[%s28]]
  %s30 = scalar_lea.smem %s0, 15
  %s31 = sld [smem:[%s30]]
  %s32 = scalar_lea.smem %s0, 16
  %s33 = sld [smem:[%s32]]
  %s34 = scalar_lea.smem %s0, 17
  %s35 = sld [smem:[%s34]]
  %s36 = scalar_lea.smem %s0, 18
  %s37 = sld [smem:[%s36]]
  %s38 = scalar_lea.smem %s0, 19
  %s39 = sld [smem:[%s38]]
  %s40 = scalar_lea.smem %s0, 20
  %s41 = sld [smem:[%s40]]
  %s42 = scalar_lea.smem %s0, 21
  %s43 = sld [smem:[%s42]]
  %s44 = scalar_lea.smem %s0, 22
  %s45 = sld [smem:[%s44]]
  %s46 = scalar_lea.smem %s0, 23
  %s47 = sld [smem:[%s46]]
  %s48 = scalar_lea.smem %s0, 24
  %s49 = sld [smem:[%s48]]
  %s50 = scalar_lea.smem %s0, 25
  %s51 = sld [smem:[%s50]]
  %s52 = scalar_lea.smem %s0, 26
  %s53 = sld [smem:[%s52]]
  %s54 = scalar_lea.smem %s0, 27
  %s55 = sld [smem:[%s54]]
  %s56 = scalar_lea.smem %s0, 28
  %s57 = sld [smem:[%s56]]
  %s58 = scalar_lea.smem %s0, 29
  %s59 = sld [smem:[%s58]]
  %s60 = sld [smem:[#allocation0]]
  $region153: #{tpu_custom_call.1} parent=0
    _
  %s62 = ssub.s32 1, %s60
  %s63 = scalar_select 0, %s62, %s60
  $region1: #{tpu_custom_call.1} parent=0
    #allocation2 [shape = 'u8[65536]{0}', space=vmem, size = 0x10000, scoped, tag = 'input window, operand 0']
    #allocation3 [shape = 's32[2]{0}', space=sflag, size = 0x8, scoped, tag = 'scoped memory for tpu_custom_call.1']
    %64 = vsyncpa [#allocation3], 0
    %s65 = scalar_lea.sflag [#allocation3], 1
    %66 = vsyncpa %s65, 0
    loop: start=0, step=1, limit=4
    $region2: #{tpu_custom_call.1} parent=1 // loop_pre_header
      _
    $region3: #{tpu_custom_call.1} parent=1 // loop_header
      %s68 = sphi 0, %s72
      %p69 = scmp.ge.s32.totalorder %s68, 4
      %s78 = sphi 0, %s80
      %s81 = sphi 0, %s78
      %s82 = sphi 0, %s81
      %s98 = sphi 0, %s82
      %s102 = sphi 0, %s102
      %s104 = sphi 0, %s102
      %s105 = sphi 0, %s104
      %s119 = sphi 0, %s105
      %s123 = sphi 0, %s123
      %s125 = sphi 0, %s123
      %s126 = sphi 0, %s125
      %s140 = sphi 0, %s126
      %s144 = sphi 0, %s144
      %s146 = sphi 0, %s144
      %s147 = sphi 0, %s146
      %s161 = sphi 0, %s147
      %s165 = sphi 0, %s165
      %s167 = sphi 0, %s165
      %s168 = sphi 0, %s167
      %s182 = sphi 0, %s168
      %s186 = sphi 0, %s186
      %s188 = sphi 0, %s186
      %s189 = sphi 0, %s188
      %s203 = sphi 0, %s189
      %s207 = sphi 0, %s207
      %s209 = sphi 0, %s207
      %s210 = sphi 0, %s209
      %s224 = sphi 0, %s210
      %s228 = sphi 0, %s228
      %s230 = sphi 0, %s228
      %s231 = sphi 0, %s230
      %s245 = sphi 0, %s231
      %s249 = sphi 0, %s249
      %s251 = sphi 0, %s249
      %s252 = sphi 0, %s251
      %s266 = sphi 0, %s252
      %s270 = sphi 0, %s270
      %s272 = sphi 0, %s270
      %s273 = sphi 0, %s272
      %s287 = sphi 0, %s273
      %s291 = sphi 0, %s291
      %s293 = sphi 0, %s291
      %s294 = sphi 0, %s293
      %s308 = sphi 0, %s294
      %s312 = sphi 0, %s312
      %s314 = sphi 0, %s312
      %s315 = sphi 0, %s314
      %s329 = sphi 0, %s315
      %s333 = sphi 0, %s333
      %s335 = sphi 0, %s333
      %s336 = sphi 0, %s335
      %s350 = sphi 0, %s336
      %s354 = sphi 0, %s354
      %s356 = sphi 0, %s354
      %s357 = sphi 0, %s356
      %s371 = sphi 0, %s357
      %s375 = sphi 0, %s375
      %s377 = sphi 0, %s375
      %s378 = sphi 0, %s377
      %s392 = sphi 0, %s378
      %s396 = sphi 0, %s396
      %s398 = sphi 0, %s396
      %s399 = sphi 0, %s398
      %s413 = sphi 0, %s399
      %s417 = sphi 0, %s417
      %s419 = sphi 0, %s417
      %s420 = sphi 0, %s419
      %s434 = sphi 0, %s420
      %s438 = sphi 0, %s438
      %s440 = sphi 0, %s438
      %s441 = sphi 0, %s440
      %s455 = sphi 0, %s441
      %s459 = sphi 0, %s459
      %s461 = sphi 0, %s459
      %s462 = sphi 0, %s461
      %s476 = sphi 0, %s462
      %s480 = sphi 0, %s480
      %s482 = sphi 0, %s480
      %s483 = sphi 0, %s482
      %s497 = sphi 0, %s483
      %s501 = sphi 0, %s501
      %s503 = sphi 0, %s501
      %s504 = sphi 0, %s503
      %s518 = sphi 0, %s504
      %s522 = sphi 0, %s522
      %s524 = sphi 0, %s522
      %s525 = sphi 0, %s524
      %s539 = sphi 0, %s525
      %s543 = sphi 0, %s543
      %s545 = sphi 0, %s543
      %s546 = sphi 0, %s545
      %s560 = sphi 0, %s546
      %s564 = sphi 0, %s564
      %s566 = sphi 0, %s564
      %s567 = sphi 0, %s566
      %s581 = sphi 0, %s567
      %s585 = sphi 0, %s585
      %s587 = sphi 0, %s585
      %s588 = sphi 0, %s587
      %s602 = sphi 0, %s588
      %s606 = sphi 0, %s606
      %s608 = sphi 0, %s606
      %s609 = sphi 0, %s608
      %s623 = sphi 0, %s609
      %s627 = sphi 0, %s627
      %s629 = sphi 0, %s627
      %s630 = sphi 0, %s629
      %s644 = sphi 0, %s630
      %s648 = sphi 0, %s648
      %s650 = sphi 0, %s648
      %s651 = sphi 0, %s650
      %s665 = sphi 0, %s651
      %s669 = sphi 0, %s669
      %s671 = sphi 0, %s669
      %s672 = sphi 0, %s671
      %s686 = sphi 0, %s672
      %s692 = sphi 0, %s694
      %s695 = sphi 0, %s692
      %s696 = sphi 0, %s695
      %s712 = sphi 0, %s696
    $region4: #{tpu_custom_call.1} parent=1 // loop_header_branch
      %71 = sbr.rel (%p69) target = $region8
    $region5: #{tpu_custom_call.1} parent=1 // loop_body
      %s73 = ssub.s32 %s68, 1
      %s74 = ssub.s32 %s68, 2
      %s75 = sadd.s32 %s68, 1
      %s76 = ssub.s32 %s68, %s75
      %p77 = scmp.eq.s32.totalorder %s76, 0
      %s79 = sadd.s32 %s78, 1
      %s80 = scalar_select %p77, %s78, %s79
      %p83 = pneg %p77
      %p84 = scmp.eq.s32.totalorder %s68, 1
      %p85 = por %p83, %p84
      %p86 = scmp.ne.s32.totalorder %s78, %s81
      %p87 = scmp.eq.s32.totalorder %s68, 0
      %p88 = por %p86, %p87
      %p89 = scmp.ne.s32.totalorder %s78, %s81
      %p90 = scmp.eq.s32.totalorder %s73, 1
      %p91 = por %p89, %p90
      %p92 = scmp.ne.s32.totalorder %s81, %s82
      %p93 = scmp.eq.s32.totalorder %s73, 0
      %p94 = por %p92, %p93
      %p95 = scmp.ne.s32.totalorder %s81, %s82
      %p96 = scmp.eq.s32.totalorder %s74, 1
      %p97 = por %p95, %p96
      %p99 = scmp.ne.s32.totalorder %s82, %s98
      %p100 = scmp.eq.s32.totalorder %s74, 0
      %p101 = por %p99, %p100
      %s103 = sadd.s32 %s102, 1
      %p106 = scmp.eq.s32.totalorder %s68, 1
      %p107 = scmp.ne.s32.totalorder %s102, %s104
      %p108 = scmp.eq.s32.totalorder %s68, 0
      %p109 = por %p107, %p108
      %p110 = scmp.ne.s32.totalorder %s102, %s104
      %p111 = scmp.eq.s32.totalorder %s73, 1
      %p112 = por %p110, %p111
      %p113 = scmp.ne.s32.totalorder %s104, %s105
      %p114 = scmp.eq.s32.totalorder %s73, 0
      %p115 = por %p113, %p114
      %p116 = scmp.ne.s32.totalorder %s104, %s105
      %p117 = scmp.eq.s32.totalorder %s74, 1
      %p118 = por %p116, %p117
      %p120 = scmp.ne.s32.totalorder %s105, %s119
      %p121 = scmp.eq.s32.totalorder %s74, 0
      %p122 = por %p120, %p121
      %s124 = sadd.s32 %s123, 1
      %p127 = scmp.eq.s32.totalorder %s68, 1
      %p128 = scmp.ne.s32.totalorder %s123, %s125
      %p129 = scmp.eq.s32.totalorder %s68, 0
      %p130 = por %p128, %p129
      %p131 = scmp.ne.s32.totalorder %s123, %s125
      %p132 = scmp.eq.s32.totalorder %s73, 1
      %p133 = por %p131, %p132
      %p134 = scmp.ne.s32.totalorder %s125, %s126
      %p135 = scmp.eq.s32.totalorder %s73, 0
      %p136 = por %p134, %p135
      %p137 = scmp.ne.s32.totalorder %s125, %s126
      %p138 = scmp.eq.s32.totalorder %s74, 1
      %p139 = por %p137, %p138
      %p141 = scmp.ne.s32.totalorder %s126, %s140
      %p142 = scmp.eq.s32.totalorder %s74, 0
      %p143 = por %p141, %p142
      %s145 = sadd.s32 %s144, 1
      %p148 = scmp.eq.s32.totalorder %s68, 1
      %p149 = scmp.ne.s32.totalorder %s144, %s146
      %p150 = scmp.eq.s32.totalorder %s68, 0
      %p151 = por %p149, %p150
      %p152 = scmp.ne.s32.totalorder %s144, %s146
      %p153 = scmp.eq.s32.totalorder %s73, 1
      %p154 = por %p152, %p153
      %p155 = scmp.ne.s32.totalorder %s146, %s147
      %p156 = scmp.eq.s32.totalorder %s73, 0
      %p157 = por %p155, %p156
      %p158 = scmp.ne.s32.totalorder %s146, %s147
      %p159 = scmp.eq.s32.totalorder %s74, 1
      %p160 = por %p158, %p159
      %p162 = scmp.ne.s32.totalorder %s147, %s161
      %p163 = scmp.eq.s32.totalorder %s74, 0
      %p164 = por %p162, %p163
      %s166 = sadd.s32 %s165, 1
      %p169 = scmp.eq.s32.totalorder %s68, 1
      %p170 = scmp.ne.s32.totalorder %s165, %s167
      %p171 = scmp.eq.s32.totalorder %s68, 0
      %p172 = por %p170, %p171
      %p173 = scmp.ne.s32.totalorder %s165, %s167
      %p174 = scmp.eq.s32.totalorder %s73, 1
      %p175 = por %p173, %p174
      %p176 = scmp.ne.s32.totalorder %s167, %s168
      %p177 = scmp.eq.s32.totalorder %s73, 0
      %p178 = por %p176, %p177
      %p179 = scmp.ne.s32.totalorder %s167, %s168
      %p180 = scmp.eq.s32.totalorder %s74, 1
      %p181 = por %p179, %p180
      %p183 = scmp.ne.s32.totalorder %s168, %s182
      %p184 = scmp.eq.s32.totalorder %s74, 0
      %p185 = por %p183, %p184
      %s187 = sadd.s32 %s186, 1
      %p190 = scmp.eq.s32.totalorder %s68, 1
      %p191 = scmp.ne.s32.totalorder %s186, %s188
      %p192 = scmp.eq.s32.totalorder %s68, 0
      %p193 = por %p191, %p192
      %p194 = scmp.ne.s32.totalorder %s186, %s188
      %p195 = scmp.eq.s32.totalorder %s73, 1
      %p196 = por %p194, %p195
      %p197 = scmp.ne.s32.totalorder %s188, %s189
      %p198 = scmp.eq.s32.totalorder %s73, 0
      %p199 = por %p197, %p198
      %p200 = scmp.ne.s32.totalorder %s188, %s189
      %p201 = scmp.eq.s32.totalorder %s74, 1
      %p202 = por %p200, %p201
      %p204 = scmp.ne.s32.totalorder %s189, %s203
      %p205 = scmp.eq.s32.totalorder %s74, 0
      %p206 = por %p204, %p205
      %s208 = sadd.s32 %s207, 1
      %p211 = scmp.eq.s32.totalorder %s68, 1
      %p212 = scmp.ne.s32.totalorder %s207, %s209
      %p213 = scmp.eq.s32.totalorder %s68, 0
      %p214 = por %p212, %p213
      %p215 = scmp.ne.s32.totalorder %s207, %s209
      %p216 = scmp.eq.s32.totalorder %s73, 1
      %p217 = por %p215, %p216
      %p218 = scmp.ne.s32.totalorder %s209, %s210
      %p219 = scmp.eq.s32.totalorder %s73, 0
      %p220 = por %p218, %p219
      %p221 = scmp.ne.s32.totalorder %s209, %s210
      %p222 = scmp.eq.s32.totalorder %s74, 1
      %p223 = por %p221, %p222
      %p225 = scmp.ne.s32.totalorder %s210, %s224
      %p226 = scmp.eq.s32.totalorder %s74, 0
      %p227 = por %p225, %p226
      %s229 = sadd.s32 %s228, 1
      %p232 = scmp.eq.s32.totalorder %s68, 1
      %p233 = scmp.ne.s32.totalorder %s228, %s230
      %p234 = scmp.eq.s32.totalorder %s68, 0
      %p235 = por %p233, %p234
      %p236 = scmp.ne.s32.totalorder %s228, %s230
      %p237 = scmp.eq.s32.totalorder %s73, 1
      %p238 = por %p236, %p237
      %p239 = scmp.ne.s32.totalorder %s230, %s231
      %p240 = scmp.eq.s32.totalorder %s73, 0
      %p241 = por %p239, %p240
      %p242 = scmp.ne.s32.totalorder %s230, %s231
      %p243 = scmp.eq.s32.totalorder %s74, 1
      %p244 = por %p242, %p243
      %p246 = scmp.ne.s32.totalorder %s231, %s245
      %p247 = scmp.eq.s32.totalorder %s74, 0
      %p248 = por %p246, %p247
      %s250 = sadd.s32 %s249, 1
      %p253 = scmp.eq.s32.totalorder %s68, 1
      %p254 = scmp.ne.s32.totalorder %s249, %s251
      %p255 = scmp.eq.s32.totalorder %s68, 0
      %p256 = por %p254, %p255
      %p257 = scmp.ne.s32.totalorder %s249, %s251
      %p258 = scmp.eq.s32.totalorder %s73, 1
      %p259 = por %p257, %p258
      %p260 = scmp.ne.s32.totalorder %s251, %s252
      %p261 = scmp.eq.s32.totalorder %s73, 0
      %p262 = por %p260, %p261
      %p263 = scmp.ne.s32.totalorder %s251, %s252
      %p264 = scmp.eq.s32.totalorder %s74, 1
      %p265 = por %p263, %p264
      %p267 = scmp.ne.s32.totalorder %s252, %s266
      %p268 = scmp.eq.s32.totalorder %s74, 0
      %p269 = por %p267, %p268
      %s271 = sadd.s32 %s270, 1
      %p274 = scmp.eq.s32.totalorder %s68, 1
      %p275 = scmp.ne.s32.totalorder %s270, %s272
      %p276 = scmp.eq.s32.totalorder %s68, 0
      %p277 = por %p275, %p276
      %p278 = scmp.ne.s32.totalorder %s270, %s272
      %p279 = scmp.eq.s32.totalorder %s73, 1
      %p280 = por %p278, %p279
      %p281 = scmp.ne.s32.totalorder %s272, %s273
      %p282 = scmp.eq.s32.totalorder %s73, 0
      %p283 = por %p281, %p282
      %p284 = scmp.ne.s32.totalorder %s272, %s273
      %p285 = scmp.eq.s32.totalorder %s74, 1
      %p286 = por %p284, %p285
      %p288 = scmp.ne.s32.totalorder %s273, %s287
      %p289 = scmp.eq.s32.totalorder %s74, 0
      %p290 = por %p288, %p289
      %s292 = sadd.s32 %s291, 1
      %p295 = scmp.eq.s32.totalorder %s68, 1
      %p296 = scmp.ne.s32.totalorder %s291, %s293
      %p297 = scmp.eq.s32.totalorder %s68, 0
      %p298 = por %p296, %p297
      %p299 = scmp.ne.s32.totalorder %s291, %s293
      %p300 = scmp.eq.s32.totalorder %s73, 1
      %p301 = por %p299, %p300
      %p302 = scmp.ne.s32.totalorder %s293, %s294
      %p303 = scmp.eq.s32.totalorder %s73, 0
      %p304 = por %p302, %p303
      %p305 = scmp.ne.s32.totalorder %s293, %s294
      %p306 = scmp.eq.s32.totalorder %s74, 1
      %p307 = por %p305, %p306
      %p309 = scmp.ne.s32.totalorder %s294, %s308
      %p310 = scmp.eq.s32.totalorder %s74, 0
      %p311 = por %p309, %p310
      %s313 = sadd.s32 %s312, 1
      %p316 = scmp.eq.s32.totalorder %s68, 1
      %p317 = scmp.ne.s32.totalorder %s312, %s314
      %p318 = scmp.eq.s32.totalorder %s68, 0
      %p319 = por %p317, %p318
      %p320 = scmp.ne.s32.totalorder %s312, %s314
      %p321 = scmp.eq.s32.totalorder %s73, 1
      %p322 = por %p320, %p321
      %p323 = scmp.ne.s32.totalorder %s314, %s315
      %p324 = scmp.eq.s32.totalorder %s73, 0
      %p325 = por %p323, %p324
      %p326 = scmp.ne.s32.totalorder %s314, %s315
      %p327 = scmp.eq.s32.totalorder %s74, 1
      %p328 = por %p326, %p327
      %p330 = scmp.ne.s32.totalorder %s315, %s329
      %p331 = scmp.eq.s32.totalorder %s74, 0
      %p332 = por %p330, %p331
      %s334 = sadd.s32 %s333, 1
      %p337 = scmp.eq.s32.totalorder %s68, 1
      %p338 = scmp.ne.s32.totalorder %s333, %s335
      %p339 = scmp.eq.s32.totalorder %s68, 0
      %p340 = por %p338, %p339
      %p341 = scmp.ne.s32.totalorder %s333, %s335
      %p342 = scmp.eq.s32.totalorder %s73, 1
      %p343 = por %p341, %p342
      %p344 = scmp.ne.s32.totalorder %s335, %s336
      %p345 = scmp.eq.s32.totalorder %s73, 0
      %p346 = por %p344, %p345
      %p347 = scmp.ne.s32.totalorder %s335, %s336
      %p348 = scmp.eq.s32.totalorder %s74, 1
      %p349 = por %p347, %p348
      %p351 = scmp.ne.s32.totalorder %s336, %s350
      %p352 = scmp.eq.s32.totalorder %s74, 0
      %p353 = por %p351, %p352
      %s355 = sadd.s32 %s354, 1
      %p358 = scmp.eq.s32.totalorder %s68, 1
      %p359 = scmp.ne.s32.totalorder %s354, %s356
      %p360 = scmp.eq.s32.totalorder %s68, 0
      %p361 = por %p359, %p360
      %p362 = scmp.ne.s32.totalorder %s354, %s356
      %p363 = scmp.eq.s32.totalorder %s73, 1
      %p364 = por %p362, %p363
      %p365 = scmp.ne.s32.totalorder %s356, %s357
      %p366 = scmp.eq.s32.totalorder %s73, 0
      %p367 = por %p365, %p366
      %p368 = scmp.ne.s32.totalorder %s356, %s357
      %p369 = scmp.eq.s32.totalorder %s74, 1
      %p370 = por %p368, %p369
      %p372 = scmp.ne.s32.totalorder %s357, %s371
      %p373 = scmp.eq.s32.totalorder %s74, 0
      %p374 = por %p372, %p373
      %s376 = sadd.s32 %s375, 1
      %p379 = scmp.eq.s32.totalorder %s68, 1
      %p380 = scmp.ne.s32.totalorder %s375, %s377
      %p381 = scmp.eq.s32.totalorder %s68, 0
      %p382 = por %p380, %p381
      %p383 = scmp.ne.s32.totalorder %s375, %s377
      %p384 = scmp.eq.s32.totalorder %s73, 1
      %p385 = por %p383, %p384
      %p386 = scmp.ne.s32.totalorder %s377, %s378
      %p387 = scmp.eq.s32.totalorder %s73, 0
      %p388 = por %p386, %p387
      %p389 = scmp.ne.s32.totalorder %s377, %s378
      %p390 = scmp.eq.s32.totalorder %s74, 1
      %p391 = por %p389, %p390
      %p393 = scmp.ne.s32.totalorder %s378, %s392
      %p394 = scmp.eq.s32.totalorder %s74, 0
      %p395 = por %p393, %p394
      %s397 = sadd.s32 %s396, 1
      %p400 = scmp.eq.s32.totalorder %s68, 1
      %p401 = scmp.ne.s32.totalorder %s396, %s398
      %p402 = scmp.eq.s32.totalorder %s68, 0
      %p403 = por %p401, %p402
      %p404 = scmp.ne.s32.totalorder %s396, %s398
      %p405 = scmp.eq.s32.totalorder %s73, 1
      %p406 = por %p404, %p405
      %p407 = scmp.ne.s32.totalorder %s398, %s399
      %p408 = scmp.eq.s32.totalorder %s73, 0
      %p409 = por %p407, %p408
      %p410 = scmp.ne.s32.totalorder %s398, %s399
      %p411 = scmp.eq.s32.totalorder %s74, 1
      %p412 = por %p410, %p411
      %p414 = scmp.ne.s32.totalorder %s399, %s413
      %p415 = scmp.eq.s32.totalorder %s74, 0
      %p416 = por %p414, %p415
      %s418 = sadd.s32 %s417, 1
      %p421 = scmp.eq.s32.totalorder %s68, 1
      %p422 = scmp.ne.s32.totalorder %s417, %s419
      %p423 = scmp.eq.s32.totalorder %s68, 0
      %p424 = por %p422, %p423
      %p425 = scmp.ne.s32.totalorder %s417, %s419
      %p426 = scmp.eq.s32.totalorder %s73, 1
      %p427 = por %p425, %p426
      %p428 = scmp.ne.s32.totalorder %s419, %s420
      %p429 = scmp.eq.s32.totalorder %s73, 0
      %p430 = por %p428, %p429
      %p431 = scmp.ne.s32.totalorder %s419, %s420
      %p432 = scmp.eq.s32.totalorder %s74, 1
      %p433 = por %p431, %p432
      %p435 = scmp.ne.s32.totalorder %s420, %s434
      %p436 = scmp.eq.s32.totalorder %s74, 0
      %p437 = por %p435, %p436
      %s439 = sadd.s32 %s438, 1
      %p442 = scmp.eq.s32.totalorder %s68, 1
      %p443 = scmp.ne.s32.totalorder %s438, %s440
      %p444 = scmp.eq.s32.totalorder %s68, 0
      %p445 = por %p443, %p444
      %p446 = scmp.ne.s32.totalorder %s438, %s440
      %p447 = scmp.eq.s32.totalorder %s73, 1
      %p448 = por %p446, %p447
      %p449 = scmp.ne.s32.totalorder %s440, %s441
      %p450 = scmp.eq.s32.totalorder %s73, 0
      %p451 = por %p449, %p450
      %p452 = scmp.ne.s32.totalorder %s440, %s441
      %p453 = scmp.eq.s32.totalorder %s74, 1
      %p454 = por %p452, %p453
      %p456 = scmp.ne.s32.totalorder %s441, %s455
      %p457 = scmp.eq.s32.totalorder %s74, 0
      %p458 = por %p456, %p457
      %s460 = sadd.s32 %s459, 1
      %p463 = scmp.eq.s32.totalorder %s68, 1
      %p464 = scmp.ne.s32.totalorder %s459, %s461
      %p465 = scmp.eq.s32.totalorder %s68, 0
      %p466 = por %p464, %p465
      %p467 = scmp.ne.s32.totalorder %s459, %s461
      %p468 = scmp.eq.s32.totalorder %s73, 1
      %p469 = por %p467, %p468
      %p470 = scmp.ne.s32.totalorder %s461, %s462
      %p471 = scmp.eq.s32.totalorder %s73, 0
      %p472 = por %p470, %p471
      %p473 = scmp.ne.s32.totalorder %s461, %s462
      %p474 = scmp.eq.s32.totalorder %s74, 1
      %p475 = por %p473, %p474
      %p477 = scmp.ne.s32.totalorder %s462, %s476
      %p478 = scmp.eq.s32.totalorder %s74, 0
      %p479 = por %p477, %p478
      %s481 = sadd.s32 %s480, 1
      %p484 = scmp.eq.s32.totalorder %s68, 1
      %p485 = scmp.ne.s32.totalorder %s480, %s482
      %p486 = scmp.eq.s32.totalorder %s68, 0
      %p487 = por %p485, %p486
      %p488 = scmp.ne.s32.totalorder %s480, %s482
      %p489 = scmp.eq.s32.totalorder %s73, 1
      %p490 = por %p488, %p489
      %p491 = scmp.ne.s32.totalorder %s482, %s483
      %p492 = scmp.eq.s32.totalorder %s73, 0
      %p493 = por %p491, %p492
      %p494 = scmp.ne.s32.totalorder %s482, %s483
      %p495 = scmp.eq.s32.totalorder %s74, 1
      %p496 = por %p494, %p495
      %p498 = scmp.ne.s32.totalorder %s483, %s497
      %p499 = scmp.eq.s32.totalorder %s74, 0
      %p500 = por %p498, %p499
      %s502 = sadd.s32 %s501, 1
      %p505 = scmp.eq.s32.totalorder %s68, 1
      %p506 = scmp.ne.s32.totalorder %s501, %s503
      %p507 = scmp.eq.s32.totalorder %s68, 0
      %p508 = por %p506, %p507
      %p509 = scmp.ne.s32.totalorder %s501, %s503
      %p510 = scmp.eq.s32.totalorder %s73, 1
      %p511 = por %p509, %p510
      %p512 = scmp.ne.s32.totalorder %s503, %s504
      %p513 = scmp.eq.s32.totalorder %s73, 0
      %p514 = por %p512, %p513
      %p515 = scmp.ne.s32.totalorder %s503, %s504
      %p516 = scmp.eq.s32.totalorder %s74, 1
      %p517 = por %p515, %p516
      %p519 = scmp.ne.s32.totalorder %s504, %s518
      %p520 = scmp.eq.s32.totalorder %s74, 0
      %p521 = por %p519, %p520
      %s523 = sadd.s32 %s522, 1
      %p526 = scmp.eq.s32.totalorder %s68, 1
      %p527 = scmp.ne.s32.totalorder %s522, %s524
      %p528 = scmp.eq.s32.totalorder %s68, 0
      %p529 = por %p527, %p528
      %p530 = scmp.ne.s32.totalorder %s522, %s524
      %p531 = scmp.eq.s32.totalorder %s73, 1
      %p532 = por %p530, %p531
      %p533 = scmp.ne.s32.totalorder %s524, %s525
      %p534 = scmp.eq.s32.totalorder %s73, 0
      %p535 = por %p533, %p534
      %p536 = scmp.ne.s32.totalorder %s524, %s525
      %p537 = scmp.eq.s32.totalorder %s74, 1
      %p538 = por %p536, %p537
      %p540 = scmp.ne.s32.totalorder %s525, %s539
      %p541 = scmp.eq.s32.totalorder %s74, 0
      %p542 = por %p540, %p541
      %s544 = sadd.s32 %s543, 1
      %p547 = scmp.eq.s32.totalorder %s68, 1
      %p548 = scmp.ne.s32.totalorder %s543, %s545
      %p549 = scmp.eq.s32.totalorder %s68, 0
      %p550 = por %p548, %p549
      %p551 = scmp.ne.s32.totalorder %s543, %s545
      %p552 = scmp.eq.s32.totalorder %s73, 1
      %p553 = por %p551, %p552
      %p554 = scmp.ne.s32.totalorder %s545, %s546
      %p555 = scmp.eq.s32.totalorder %s73, 0
      %p556 = por %p554, %p555
      %p557 = scmp.ne.s32.totalorder %s545, %s546
      %p558 = scmp.eq.s32.totalorder %s74, 1
      %p559 = por %p557, %p558
      %p561 = scmp.ne.s32.totalorder %s546, %s560
      %p562 = scmp.eq.s32.totalorder %s74, 0
      %p563 = por %p561, %p562
      %s565 = sadd.s32 %s564, 1
      %p568 = scmp.eq.s32.totalorder %s68, 1
      %p569 = scmp.ne.s32.totalorder %s564, %s566
      %p570 = scmp.eq.s32.totalorder %s68, 0
      %p571 = por %p569, %p570
      %p572 = scmp.ne.s32.totalorder %s564, %s566
      %p573 = scmp.eq.s32.totalorder %s73, 1
      %p574 = por %p572, %p573
      %p575 = scmp.ne.s32.totalorder %s566, %s567
      %p576 = scmp.eq.s32.totalorder %s73, 0
      %p577 = por %p575, %p576
      %p578 = scmp.ne.s32.totalorder %s566, %s567
      %p579 = scmp.eq.s32.totalorder %s74, 1
      %p580 = por %p578, %p579
      %p582 = scmp.ne.s32.totalorder %s567, %s581
      %p583 = scmp.eq.s32.totalorder %s74, 0
      %p584 = por %p582, %p583
      %s586 = sadd.s32 %s585, 1
      %p589 = scmp.eq.s32.totalorder %s68, 1
      %p590 = scmp.ne.s32.totalorder %s585, %s587
      %p591 = scmp.eq.s32.totalorder %s68, 0
      %p592 = por %p590, %p591
      %p593 = scmp.ne.s32.totalorder %s585, %s587
      %p594 = scmp.eq.s32.totalorder %s73, 1
      %p595 = por %p593, %p594
      %p596 = scmp.ne.s32.totalorder %s587, %s588
      %p597 = scmp.eq.s32.totalorder %s73, 0
      %p598 = por %p596, %p597
      %p599 = scmp.ne.s32.totalorder %s587, %s588
      %p600 = scmp.eq.s32.totalorder %s74, 1
      %p601 = por %p599, %p600
      %p603 = scmp.ne.s32.totalorder %s588, %s602
      %p604 = scmp.eq.s32.totalorder %s74, 0
      %p605 = por %p603, %p604
      %s607 = sadd.s32 %s606, 1
      %p610 = scmp.eq.s32.totalorder %s68, 1
      %p611 = scmp.ne.s32.totalorder %s606, %s608
      %p612 = scmp.eq.s32.totalorder %s68, 0
      %p613 = por %p611, %p612
      %p614 = scmp.ne.s32.totalorder %s606, %s608
      %p615 = scmp.eq.s32.totalorder %s73, 1
      %p616 = por %p614, %p615
      %p617 = scmp.ne.s32.totalorder %s608, %s609
      %p618 = scmp.eq.s32.totalorder %s73, 0
      %p619 = por %p617, %p618
      %p620 = scmp.ne.s32.totalorder %s608, %s609
      %p621 = scmp.eq.s32.totalorder %s74, 1
      %p622 = por %p620, %p621
      %p624 = scmp.ne.s32.totalorder %s609, %s623
      %p625 = scmp.eq.s32.totalorder %s74, 0
      %p626 = por %p624, %p625
      %s628 = sadd.s32 %s627, 1
      %p631 = scmp.eq.s32.totalorder %s68, 1
      %p632 = scmp.ne.s32.totalorder %s627, %s629
      %p633 = scmp.eq.s32.totalorder %s68, 0
      %p634 = por %p632, %p633
      %p635 = scmp.ne.s32.totalorder %s627, %s629
      %p636 = scmp.eq.s32.totalorder %s73, 1
      %p637 = por %p635, %p636
      %p638 = scmp.ne.s32.totalorder %s629, %s630
      %p639 = scmp.eq.s32.totalorder %s73, 0
      %p640 = por %p638, %p639
      %p641 = scmp.ne.s32.totalorder %s629, %s630
      %p642 = scmp.eq.s32.totalorder %s74, 1
      %p643 = por %p641, %p642
      %p645 = scmp.ne.s32.totalorder %s630, %s644
      %p646 = scmp.eq.s32.totalorder %s74, 0
      %p647 = por %p645, %p646
      %s649 = sadd.s32 %s648, 1
      %p652 = scmp.eq.s32.totalorder %s68, 1
      %p653 = scmp.ne.s32.totalorder %s648, %s650
      %p654 = scmp.eq.s32.totalorder %s68, 0
      %p655 = por %p653, %p654
      %p656 = scmp.ne.s32.totalorder %s648, %s650
      %p657 = scmp.eq.s32.totalorder %s73, 1
      %p658 = por %p656, %p657
      %p659 = scmp.ne.s32.totalorder %s650, %s651
      %p660 = scmp.eq.s32.totalorder %s73, 0
      %p661 = por %p659, %p660
      %p662 = scmp.ne.s32.totalorder %s650, %s651
      %p663 = scmp.eq.s32.totalorder %s74, 1
      %p664 = por %p662, %p663
      %p666 = scmp.ne.s32.totalorder %s651, %s665
      %p667 = scmp.eq.s32.totalorder %s74, 0
      %p668 = por %p666, %p667
      %s670 = sadd.s32 %s669, 1
      %p673 = scmp.eq.s32.totalorder %s68, 1
      %p674 = scmp.ne.s32.totalorder %s669, %s671
      %p675 = scmp.eq.s32.totalorder %s68, 0
      %p676 = por %p674, %p675
      %p677 = scmp.ne.s32.totalorder %s669, %s671
      %p678 = scmp.eq.s32.totalorder %s73, 1
      %p679 = por %p677, %p678
      %p680 = scmp.ne.s32.totalorder %s671, %s672
      %p681 = scmp.eq.s32.totalorder %s73, 0
      %p682 = por %p680, %p681
      %p683 = scmp.ne.s32.totalorder %s671, %s672
      %p684 = scmp.eq.s32.totalorder %s74, 1
      %p685 = por %p683, %p684
      %p687 = scmp.ne.s32.totalorder %s672, %s686
      %p688 = scmp.eq.s32.totalorder %s74, 0
      %p689 = por %p687, %p688
      %s690 = ssub.s32 %s68, %s75
      %p691 = scmp.eq.s32.totalorder %s690, 0
      %s693 = sadd.s32 %s692, 1
      %s694 = scalar_select %p691, %s692, %s693
      %p697 = pneg %p691
      %p698 = scmp.eq.s32.totalorder %s68, 1
      %p699 = por %p697, %p698
      %p700 = scmp.ne.s32.totalorder %s692, %s695
      %p701 = scmp.eq.s32.totalorder %s68, 0
      %p702 = por %p700, %p701
      %p703 = scmp.ne.s32.totalorder %s692, %s695
      %p704 = scmp.eq.s32.totalorder %s73, 1
      %p705 = por %p703, %p704
      %p706 = scmp.ne.s32.totalorder %s695, %s696
      %p707 = scmp.eq.s32.totalorder %s73, 0
      %p708 = por %p706, %p707
      %p709 = scmp.ne.s32.totalorder %s695, %s696
      %p710 = scmp.eq.s32.totalorder %s74, 1
      %p711 = por %p709, %p710
      %p713 = scmp.ne.s32.totalorder %s696, %s712
      %p714 = scmp.eq.s32.totalorder %s74, 0
      %p715 = por %p713, %p714
      %p716 = scmp.le.s32.totalorder 1, %s68
      %p717 = scmp.lt.s32.totalorder %s68, 3
      %p718 = pnand %p716, %p717
      %p719 = pneg %p718
      // Predicated region
      $region9: #{tpu_custom_call.1} parent=5 // pred_check
        _
      $region10: #{tpu_custom_call.1} parent=5 // pred_check_branch
        %721 = sbr.rel (%p718) target = $region12
      $region11: #{tpu_custom_call.1} parent=5 // pred_region
        %s722 = ssub.s32 %s68, 1
        // Predicated region
        $region13: #{tpu_custom_call.1} parent=11 // pred_check
          %p723 = pneg %p115
        $region14: #{tpu_custom_call.1} parent=11 // pred_check_branch
          %725 = sbr.rel (%p723) target = $region16
        $region15: #{tpu_custom_call.1} parent=11 // pred_region
          _
        $region16: #{tpu_custom_call.1} parent=11 // pred_fallthru
          _
        // Predicated region
        $region17: #{tpu_custom_call.1} parent=11 // pred_check
          %p726 = pneg %p136
        $region18: #{tpu_custom_call.1} parent=11 // pred_check_branch
          %728 = sbr.rel (%p726) target = $region20
        $region19: #{tpu_custom_call.1} parent=11 // pred_region
          _
        $region20: #{tpu_custom_call.1} parent=11 // pred_fallthru
          _
        // Predicated region
        $region21: #{tpu_custom_call.1} parent=11 // pred_check
          %p729 = pneg %p157
        $region22: #{tpu_custom_call.1} parent=11 // pred_check_branch
          %731 = sbr.rel (%p729) target = $region24
        $region23: #{tpu_custom_call.1} parent=11 // pred_region
          _
        $region24: #{tpu_custom_call.1} parent=11 // pred_fallthru
          _
        // Predicated region
        $region25: #{tpu_custom_call.1} parent=11 // pred_check
          %p732 = pneg %p178
        $region26: #{tpu_custom_call.1} parent=11 // pred_check_branch
          %734 = sbr.rel (%p732) target = $region28
        $region27: #{tpu_custom_call.1} parent=11 // pred_region
          _
        $region28: #{tpu_custom_call.1} parent=11 // pred_fallthru
          _
        // Predicated region
        $region29: #{tpu_custom_call.1} parent=11 // pred_check
          %p735 = pneg %p199
        $region30: #{tpu_custom_call.1} parent=11 // pred_check_branch
          %737 = sbr.rel (%p735) target = $region32
        $region31: #{tpu_custom_call.1} parent=11 // pred_region
          _
        $region32: #{tpu_custom_call.1} parent=11 // pred_fallthru
          _
        // Predicated region
        $region33: #{tpu_custom_call.1} parent=11 // pred_check
          %p738 = pneg %p220
        $region34: #{tpu_custom_call.1} parent=11 // pred_check_branch
          %740 = sbr.rel (%p738) target = $region36
        $region35: #{tpu_custom_call.1} parent=11 // pred_region
          _
        $region36: #{tpu_custom_call.1} parent=11 // pred_fallthru
          _
        // Predicated region
        $region37: #{tpu_custom_call.1} parent=11 // pred_check
          %p741 = pneg %p241
        $region38: #{tpu_custom_call.1} parent=11 // pred_check_branch
          %743 = sbr.rel (%p741) target = $region40
        $region39: #{tpu_custom_call.1} parent=11 // pred_region
          _
        $region40: #{tpu_custom_call.1} parent=11 // pred_fallthru
          _
        // Predicated region
        $region41: #{tpu_custom_call.1} parent=11 // pred_check
          %p744 = pneg %p262
        $region42: #{tpu_custom_call.1} parent=11 // pred_check_branch
          %746 = sbr.rel (%p744) target = $region44
        $region43: #{tpu_custom_call.1} parent=11 // pred_region
          _
        $region44: #{tpu_custom_call.1} parent=11 // pred_fallthru
          _
        // Predicated region
        $region45: #{tpu_custom_call.1} parent=11 // pred_check
          %p747 = pneg %p283
        $region46: #{tpu_custom_call.1} parent=11 // pred_check_branch
          %749 = sbr.rel (%p747) target = $region48
        $region47: #{tpu_custom_call.1} parent=11 // pred_region
          _
        $region48: #{tpu_custom_call.1} parent=11 // pred_fallthru
          _
        // Predicated region
        $region49: #{tpu_custom_call.1} parent=11 // pred_check
          %p750 = pneg %p304
        $region50: #{tpu_custom_call.1} parent=11 // pred_check_branch
          %752 = sbr.rel (%p750) target = $region52
        $region51: #{tpu_custom_call.1} parent=11 // pred_region
          _
        $region52: #{tpu_custom_call.1} parent=11 // pred_fallthru
          _
        // Predicated region
        $region53: #{tpu_custom_call.1} parent=11 // pred_check
          %p753 = pneg %p325
        $region54: #{tpu_custom_call.1} parent=11 // pred_check_branch
          %755 = sbr.rel (%p753) target = $region56
        $region55: #{tpu_custom_call.1} parent=11 // pred_region
          _
        $region56: #{tpu_custom_call.1} parent=11 // pred_fallthru
          _
        // Predicated region
        $region57: #{tpu_custom_call.1} parent=11 // pred_check
          %p756 = pneg %p346
        $region58: #{tpu_custom_call.1} parent=11 // pred_check_branch
          %758 = sbr.rel (%p756) target = $region60
        $region59: #{tpu_custom_call.1} parent=11 // pred_region
          _
        $region60: #{tpu_custom_call.1} parent=11 // pred_fallthru
          _
        // Predicated region
        $region61: #{tpu_custom_call.1} parent=11 // pred_check
          %p759 = pneg %p367
        $region62: #{tpu_custom_call.1} parent=11 // pred_check_branch
          %761 = sbr.rel (%p759) target = $region64
        $region63: #{tpu_custom_call.1} parent=11 // pred_region
          _
        $region64: #{tpu_custom_call.1} parent=11 // pred_fallthru
          _
        // Predicated region
        $region65: #{tpu_custom_call.1} parent=11 // pred_check
          %p762 = pneg %p388
        $region66: #{tpu_custom_call.1} parent=11 // pred_check_branch
          %764 = sbr.rel (%p762) target = $region68
        $region67: #{tpu_custom_call.1} parent=11 // pred_region
          _
        $region68: #{tpu_custom_call.1} parent=11 // pred_fallthru
          _
        // Predicated region
        $region69: #{tpu_custom_call.1} parent=11 // pred_check
          %p765 = pneg %p409
        $region70: #{tpu_custom_call.1} parent=11 // pred_check_branch
          %767 = sbr.rel (%p765) target = $region72
        $region71: #{tpu_custom_call.1} parent=11 // pred_region
          _
        $region72: #{tpu_custom_call.1} parent=11 // pred_fallthru
          _
        // Predicated region
        $region73: #{tpu_custom_call.1} parent=11 // pred_check
          %p768 = pneg %p430
        $region74: #{tpu_custom_call.1} parent=11 // pred_check_branch
          %770 = sbr.rel (%p768) target = $region76
        $region75: #{tpu_custom_call.1} parent=11 // pred_region
          _
        $region76: #{tpu_custom_call.1} parent=11 // pred_fallthru
          _
        // Predicated region
        $region77: #{tpu_custom_call.1} parent=11 // pred_check
          %p771 = pneg %p451
        $region78: #{tpu_custom_call.1} parent=11 // pred_check_branch
          %773 = sbr.rel (%p771) target = $region80
        $region79: #{tpu_custom_call.1} parent=11 // pred_region
          _
        $region80: #{tpu_custom_call.1} parent=11 // pred_fallthru
          _
        // Predicated region
        $region81: #{tpu_custom_call.1} parent=11 // pred_check
          %p774 = pneg %p472
        $region82: #{tpu_custom_call.1} parent=11 // pred_check_branch
          %776 = sbr.rel (%p774) target = $region84
        $region83: #{tpu_custom_call.1} parent=11 // pred_region
          _
        $region84: #{tpu_custom_call.1} parent=11 // pred_fallthru
          _
        // Predicated region
        $region85: #{tpu_custom_call.1} parent=11 // pred_check
          %p777 = pneg %p493
        $region86: #{tpu_custom_call.1} parent=11 // pred_check_branch
          %779 = sbr.rel (%p777) target = $region88
        $region87: #{tpu_custom_call.1} parent=11 // pred_region
          _
        $region88: #{tpu_custom_call.1} parent=11 // pred_fallthru
          _
        // Predicated region
        $region89: #{tpu_custom_call.1} parent=11 // pred_check
          %p780 = pneg %p514
        $region90: #{tpu_custom_call.1} parent=11 // pred_check_branch
          %782 = sbr.rel (%p780) target = $region92
        $region91: #{tpu_custom_call.1} parent=11 // pred_region
          _
        $region92: #{tpu_custom_call.1} parent=11 // pred_fallthru
          _
        // Predicated region
        $region93: #{tpu_custom_call.1} parent=11 // pred_check
          %p783 = pneg %p535
        $region94: #{tpu_custom_call.1} parent=11 // pred_check_branch
          %785 = sbr.rel (%p783) target = $region96
        $region95: #{tpu_custom_call.1} parent=11 // pred_region
          _
        $region96: #{tpu_custom_call.1} parent=11 // pred_fallthru
          _
        // Predicated region
        $region97: #{tpu_custom_call.1} parent=11 // pred_check
          %p786 = pneg %p556
        $region98: #{tpu_custom_call.1} parent=11 // pred_check_branch
          %788 = sbr.rel (%p786) target = $region100
        $region99: #{tpu_custom_call.1} parent=11 // pred_region
          _
        $region100: #{tpu_custom_call.1} parent=11 // pred_fallthru
          _
        // Predicated region
        $region101: #{tpu_custom_call.1} parent=11 // pred_check
          %p789 = pneg %p577
        $region102: #{tpu_custom_call.1} parent=11 // pred_check_branch
          %791 = sbr.rel (%p789) target = $region104
        $region103: #{tpu_custom_call.1} parent=11 // pred_region
          _
        $region104: #{tpu_custom_call.1} parent=11 // pred_fallthru
          _
        // Predicated region
        $region105: #{tpu_custom_call.1} parent=11 // pred_check
          %p792 = pneg %p598
        $region106: #{tpu_custom_call.1} parent=11 // pred_check_branch
          %794 = sbr.rel (%p792) target = $region108
        $region107: #{tpu_custom_call.1} parent=11 // pred_region
          _
        $region108: #{tpu_custom_call.1} parent=11 // pred_fallthru
          _
        // Predicated region
        $region109: #{tpu_custom_call.1} parent=11 // pred_check
          %p795 = pneg %p619
        $region110: #{tpu_custom_call.1} parent=11 // pred_check_branch
          %797 = sbr.rel (%p795) target = $region112
        $region111: #{tpu_custom_call.1} parent=11 // pred_region
          _
        $region112: #{tpu_custom_call.1} parent=11 // pred_fallthru
          _
        // Predicated region
        $region113: #{tpu_custom_call.1} parent=11 // pred_check
          %p798 = pneg %p640
        $region114: #{tpu_custom_call.1} parent=11 // pred_check_branch
          %800 = sbr.rel (%p798) target = $region116
        $region115: #{tpu_custom_call.1} parent=11 // pred_region
          _
        $region116: #{tpu_custom_call.1} parent=11 // pred_fallthru
          _
        // Predicated region
        $region117: #{tpu_custom_call.1} parent=11 // pred_check
          %p801 = pneg %p661
        $region118: #{tpu_custom_call.1} parent=11 // pred_check_branch
          %803 = sbr.rel (%p801) target = $region120
        $region119: #{tpu_custom_call.1} parent=11 // pred_region
          _
        $region120: #{tpu_custom_call.1} parent=11 // pred_fallthru
          _
        // Predicated region
        $region121: #{tpu_custom_call.1} parent=11 // pred_check
          %p804 = pneg %p682
        $region122: #{tpu_custom_call.1} parent=11 // pred_check_branch
          %806 = sbr.rel (%p804) target = $region124
        $region123: #{tpu_custom_call.1} parent=11 // pred_region
          _
        $region124: #{tpu_custom_call.1} parent=11 // pred_fallthru
          _
      $region12: #{tpu_custom_call.1} parent=5 // pred_fallthru
        _
      %p807 = scmp.lt.s32.totalorder %s68, 2
      // Predicated region
      $region125: #{tpu_custom_call.1} parent=5 // pred_check
        %p808 = pneg %p807
      $region126: #{tpu_custom_call.1} parent=5 // pred_check_branch
        %810 = sbr.rel (%p808) target = $region128
      $region127: #{tpu_custom_call.1} parent=5 // pred_region
        // Predicated region
        $region129: #{tpu_custom_call.1} parent=127 // pred_check
          %p811 = pneg %p88
        $region130: #{tpu_custom_call.1} parent=127 // pred_check_branch
          %813 = sbr.rel (%p811) target = $region132
        $region131: #{tpu_custom_call.1} parent=127 // pred_region
          %s814 = sand.u32 %s78, 1
          %s815 = scalar_lea.sflag [#allocation3], %s814
          %s816 = sand.u32 %s78, 1
          %s817 = smul.addr %s816, 64
          %s818 = scalar_lea.vmem [#allocation2], %s817
          %820 = vsyncadd %s815, 0
          %s821 = smul.addr %s68, 8
          %s822 = scalar_lea.hbm %s1, %s821
          %s823 = sshll.u32 %s822, 4
          %s824 = int_to_ptr.hbm [resolvable:$true] %s823
          %s825 = sshll.u32 %s818, 4
          %s826 = int_to_ptr.vmem [resolvable:$true] %s825
          %831 = dma.hbm_to_vmem [thread:$0]  %s824, 1024, %s826, %s815, 256, 128, 8
        $region132: #{tpu_custom_call.1} parent=127 // pred_fallthru
          _
      $region128: #{tpu_custom_call.1} parent=5 // pred_fallthru
        _
      %p832 = scmp.le.s32.totalorder 1, %s68
      %p833 = scmp.lt.s32.totalorder %s68, 3
      %p834 = pnand %p832, %p833
      %p835 = pneg %p834
      // Predicated region
      $region133: #{tpu_custom_call.1} parent=5 // pred_check
        _
      $region134: #{tpu_custom_call.1} parent=5 // pred_check_branch
        %837 = sbr.rel (%p834) target = $region136
      $region135: #{tpu_custom_call.1} parent=5 // pred_region
        %s838 = ssub.s32 %s68, 1
        %s839 = sand.u32 %s81, 1
        %s840 = scalar_lea.sflag [#allocation3], %s839
        %s841 = sand.u32 %s81, 1
        %s842 = smul.addr %s841, 64
        %s843 = scalar_lea.vmem [#allocation2], %s842
        // Predicated region
        $region137: #{tpu_custom_call.1} parent=135 // pred_check
          %p844 = pneg %p94
        $region138: #{tpu_custom_call.1} parent=135 // pred_check_branch
          %846 = sbr.rel (%p844) target = $region140
        $region139: #{tpu_custom_call.1} parent=135 // pred_region
          %848 = dma.done %s840, 1024
        $region140: #{tpu_custom_call.1} parent=135 // pred_fallthru
          _
        %s849 = sand.u32 %s81, 1
        %s850 = scalar_lea.sflag [#allocation3], %s849
        %s851 = sand.u32 %s81, 1
        %s852 = smul.addr %s851, 64
        %s853 = scalar_lea.vmem [#allocation2], %s852
        %p854 = pneg %p94
        %p855 = pneg %p91
        %p856 = pneg %p115
        %p857 = pneg %p112
        %p858 = pneg %p136
        %p859 = pneg %p133
        %p860 = pneg %p157
        %p861 = pneg %p154
        %p862 = pneg %p178
        %p863 = pneg %p175
        %p864 = pneg %p199
        %p865 = pneg %p196
        %p866 = pneg %p220
        %p867 = pneg %p217
        %p868 = pneg %p241
        %p869 = pneg %p238
        %p870 = pneg %p262
        %p871 = pneg %p259
        %p872 = pneg %p283
        %p873 = pneg %p280
        %p874 = pneg %p304
        %p875 = pneg %p301
        %p876 = pneg %p325
        %p877 = pneg %p322
        %p878 = pneg %p346
        %p879 = pneg %p343
        %p880 = pneg %p367
        %p881 = pneg %p364
        %p882 = pneg %p388
        %p883 = pneg %p385
        %p884 = pneg %p409
        %p885 = pneg %p406
        %p886 = pneg %p430
        %p887 = pneg %p427
        %p888 = pneg %p451
        %p889 = pneg %p448
        %p890 = pneg %p472
        %p891 = pneg %p469
        %p892 = pneg %p493
        %p893 = pneg %p490
        %p894 = pneg %p514
        %p895 = pneg %p511
        %p896 = pneg %p535
        %p897 = pneg %p532
        %p898 = pneg %p556
        %p899 = pneg %p553
        %p900 = pneg %p577
        %p901 = pneg %p574
        %p902 = pneg %p598
        %p903 = pneg %p595
        %p904 = pneg %p619
        %p905 = pneg %p616
        %p906 = pneg %p640
        %p907 = pneg %p637
        %p908 = pneg %p661
        %p909 = pneg %p658
        %p910 = pneg %p682
        %p911 = pneg %p679
        %p912 = pneg %p708
        %p913 = pneg %p705
        %p914 = scmp.lt.s32.totalorder %s73, 1
        %s915 = scalar_select %p914, %s73, 1
        %s916 = smul.addr %s915, 8
        %s917 = scalar_lea.vmem %s59, %s916
        %p918 = scmp.lt.s32.totalorder %s73, 1
        %s919 = scalar_select %p918, %s73, 1
        %s920 = smul.addr %s919, 8
        %s921 = scalar_lea.vmem %s59, %s920
        %v922 = vld [vmem:[%s843] sm:$0xff]
        %v923 = vld [vmem:[%s843 + $0x8] sm:$0xff]
        %v924 = vld [vmem:[%s843 + $0x10] sm:$0xff]
        %v925 = vld [vmem:[%s843 + $0x18] sm:$0xff]
        %v926 = vld [vmem:[%s843 + $0x20] sm:$0xff]
        %v927 = vld [vmem:[%s843 + $0x28] sm:$0xff]
        %v928 = vld [vmem:[%s843 + $0x30] sm:$0xff]
        %v929 = vld [vmem:[%s843 + $0x38] sm:$0xff]
        %v930 = vld [vmem:[%s3] sm:$0xff]
        %v931 = vld [vmem:[%s3 + $0x8] sm:$0xff]
        %v932 = vld [vmem:[%s3 + $0x10] sm:$0xff]
        %v933 = vld [vmem:[%s3 + $0x18] sm:$0xff]
        %v934 = vld [vmem:[%s9] sm:$0x1]
        %v936 = vperm.slane %v934, 0
        %vm938 = vcmask 261120
        %v940 = vsel %vm938, %v922, 0
        %v943 = vsel %vm938, %v923, 0
        %v946 = vsel %vm938, %v924, 0
        %v949 = vsel %vm938, %v925, 0
        %v952 = vsel %vm938, %v926, 0
        %v955 = vsel %vm938, %v927, 0
        %v958 = vsel %vm938, %v928, 0
        %v961 = vsel %vm938, %v929, 0
        %963 = vmatpush.msra.mxu0 0.0
        %964 = vmatpush.msra.mxu0 0.0
        %965 = vmatpush.msra.mxu0 0.0
        %966 = vmatpush.msra.mxu0 0.0
        %967 = vmatpush.msra.mxu0 0.0
        %968 = vmatpush.msra.mxu0 0.0
        %969 = vmatpush.msra.mxu0 0.0
        %970 = vmatpush.msra.mxu0 0.0
        %971 = vmatpush.msra.mxu0 0.0
        %972 = vmatpush.msra.mxu0 0.0
        %973 = vmatpush.msra.mxu0 0.0
        %974 = vmatpush.msra.mxu0 0.0
        %975 = vmatpush.msra.mxu0 %v933
        %976 = vmatpush.msra.mxu0 %v932
        %977 = vmatpush.msra.mxu0 %v931
        %978 = vmatpush.msra.mxu0 %v930
        %979 = vmatmul.f32.gmra.mxu0 %v940
        %v980 = vpop.f32.mrf.mxu0
        %v981 = vadd.f32 %v936, %v980
        %982 = vmatmul.f32.gmra.mxu0 %v943
        %v983 = vpop.f32.mrf.mxu0
        %v984 = vadd.f32 %v936, %v983
        %985 = vmatmul.f32.gmra.mxu0 %v946
        %v986 = vpop.f32.mrf.mxu0
        %v987 = vadd.f32 %v936, %v986
        %988 = vmatmul.f32.gmra.mxu0 %v949
        %v989 = vpop.f32.mrf.mxu0
        %v990 = vadd.f32 %v936, %v989
        %991 = vmatmul.f32.gmra.mxu0 %v952
        %v992 = vpop.f32.mrf.mxu0
        %v993 = vadd.f32 %v936, %v992
        %994 = vmatmul.f32.gmra.mxu0 %v955
        %v995 = vpop.f32.mrf.mxu0
        %v996 = vadd.f32 %v936, %v995
        %997 = vmatmul.f32.gmra.mxu0 %v958
        %v998 = vpop.f32.mrf.mxu0
        %v999 = vadd.f32 %v936, %v998
        %1000 = vmatmul.f32.gmra.mxu0 %v961
        %v1001 = vpop.f32.mrf.mxu0
        %v1002 = vadd.f32 %v936, %v1001
        %1003 = vdwg.mxu0
        %v1004 = vld [vmem:[%s5] sm:$0xff]
        %v1005 = vld [vmem:[%s5 + $0x8] sm:$0xff]
        %v1006 = vld [vmem:[%s5 + $0x10] sm:$0xff]
        %v1007 = vld [vmem:[%s5 + $0x18] sm:$0xff]
        %v1008 = vld [vmem:[%s11] sm:$0x1]
        %v1010 = vperm.slane %v1008, 0
        %1012 = vmatpush.msra.mxu0 0.0
        %1013 = vmatpush.msra.mxu0 0.0
        %1014 = vmatpush.msra.mxu0 0.0
        %1015 = vmatpush.msra.mxu0 0.0
        %1016 = vmatpush.msra.mxu0 0.0
        %1017 = vmatpush.msra.mxu0 0.0
        %1018 = vmatpush.msra.mxu0 0.0
        %1019 = vmatpush.msra.mxu0 0.0
        %1020 = vmatpush.msra.mxu0 0.0
        %1021 = vmatpush.msra.mxu0 0.0
        %1022 = vmatpush.msra.mxu0 0.0
        %1023 = vmatpush.msra.mxu0 0.0
        %1024 = vmatpush.msra.mxu0 %v1007
        %1025 = vmatpush.msra.mxu0 %v1006
        %1026 = vmatpush.msra.mxu0 %v1005
        %1027 = vmatpush.msra.mxu0 %v1004
        %1028 = vmatmul.f32.gmra.mxu0 %v940
        %v1029 = vpop.f32.mrf.mxu0
        %v1030 = vadd.f32 %v1010, %v1029
        %1031 = vmatmul.f32.gmra.mxu0 %v943
        %v1032 = vpop.f32.mrf.mxu0
        %v1033 = vadd.f32 %v1010, %v1032
        %1034 = vmatmul.f32.gmra.mxu0 %v946
        %v1035 = vpop.f32.mrf.mxu0
        %v1036 = vadd.f32 %v1010, %v1035
        %1037 = vmatmul.f32.gmra.mxu0 %v949
        %v1038 = vpop.f32.mrf.mxu0
        %v1039 = vadd.f32 %v1010, %v1038
        %1040 = vmatmul.f32.gmra.mxu0 %v952
        %v1041 = vpop.f32.mrf.mxu0
        %v1042 = vadd.f32 %v1010, %v1041
        %1043 = vmatmul.f32.gmra.mxu0 %v955
        %v1044 = vpop.f32.mrf.mxu0
        %v1045 = vadd.f32 %v1010, %v1044
        %1046 = vmatmul.f32.gmra.mxu0 %v958
        %v1047 = vpop.f32.mrf.mxu0
        %v1048 = vadd.f32 %v1010, %v1047
        %1049 = vmatmul.f32.gmra.mxu0 %v961
        %v1050 = vpop.f32.mrf.mxu0
        %v1051 = vadd.f32 %v1010, %v1050
        %1052 = vdwg.mxu0
        %v1053 = vld [vmem:[%s7] sm:$0xff]
        %v1054 = vld [vmem:[%s7 + $0x8] sm:$0xff]
        %v1055 = vld [vmem:[%s7 + $0x10] sm:$0xff]
        %v1056 = vld [vmem:[%s7 + $0x18] sm:$0xff]
        %v1057 = vld [vmem:[%s13] sm:$0x1]
        %v1059 = vperm.slane %v1057, 0
        %1061 = vmatpush.msra.mxu0 0.0
        %1062 = vmatpush.msra.mxu0 0.0
        %1063 = vmatpush.msra.mxu0 0.0
        %1064 = vmatpush.msra.mxu0 0.0
        %1065 = vmatpush.msra.mxu0 0.0
        %1066 = vmatpush.msra.mxu0 0.0
        %1067 = vmatpush.msra.mxu0 0.0
        %1068 = vmatpush.msra.mxu0 0.0
        %1069 = vmatpush.msra.mxu0 0.0
        %1070 = vmatpush.msra.mxu0 0.0
        %1071 = vmatpush.msra.mxu0 0.0
        %1072 = vmatpush.msra.mxu0 0.0
        %1073 = vmatpush.msra.mxu0 %v1056
        %1074 = vmatpush.msra.mxu0 %v1055
        %1075 = vmatpush.msra.mxu0 %v1054
        %1076 = vmatpush.msra.mxu0 %v1053
        %1077 = vmatmul.f32.gmra.mxu0 %v940
        %v1078 = vpop.f32.mrf.mxu0
        %v1079 = vadd.f32 %v1059, %v1078
        %1080 = vmatmul.f32.gmra.mxu0 %v943
        %v1081 = vpop.f32.mrf.mxu0
        %v1082 = vadd.f32 %v1059, %v1081
        %1083 = vmatmul.f32.gmra.mxu0 %v946
        %v1084 = vpop.f32.mrf.mxu0
        %v1085 = vadd.f32 %v1059, %v1084
        %1086 = vmatmul.f32.gmra.mxu0 %v949
        %v1087 = vpop.f32.mrf.mxu0
        %v1088 = vadd.f32 %v1059, %v1087
        %1089 = vmatmul.f32.gmra.mxu0 %v952
        %v1090 = vpop.f32.mrf.mxu0
        %v1091 = vadd.f32 %v1059, %v1090
        %1092 = vmatmul.f32.gmra.mxu0 %v955
        %v1093 = vpop.f32.mrf.mxu0
        %v1094 = vadd.f32 %v1059, %v1093
        %1095 = vmatmul.f32.gmra.mxu0 %v958
        %v1096 = vpop.f32.mrf.mxu0
        %v1097 = vadd.f32 %v1059, %v1096
        %1098 = vmatmul.f32.gmra.mxu0 %v961
        %v1099 = vpop.f32.mrf.mxu0
        %v1100 = vadd.f32 %v1059, %v1099
        %1101 = vdwg.mxu0
        %v1102 = vld [vmem:[%s23] sm:$0xff]
        %v1103 = vld [vmem:[%s23 + $0x8] sm:$0xff]
        %v1104 = vld [vmem:[%s23 + $0x10] sm:$0xff]
        %v1105 = vld [vmem:[%s23 + $0x18] sm:$0xff]
        %v1106 = vld [vmem:[%s29] sm:$0x1]
        %v1108 = vperm.slane %v1106, 0
        %1110 = vmatpush.msra.mxu0 0.0
        %1111 = vmatpush.msra.mxu0 0.0
        %1112 = vmatpush.msra.mxu0 0.0
        %1113 = vmatpush.msra.mxu0 0.0
        %1114 = vmatpush.msra.mxu0 0.0
        %1115 = vmatpush.msra.mxu0 0.0
        %1116 = vmatpush.msra.mxu0 0.0
        %1117 = vmatpush.msra.mxu0 0.0
        %1118 = vmatpush.msra.mxu0 0.0
        %1119 = vmatpush.msra.mxu0 0.0
        %1120 = vmatpush.msra.mxu0 0.0
        %1121 = vmatpush.msra.mxu0 0.0
        %1122 = vmatpush.msra.mxu0 %v1105
        %1123 = vmatpush.msra.mxu0 %v1104
        %1124 = vmatpush.msra.mxu0 %v1103
        %1125 = vmatpush.msra.mxu0 %v1102
        %1126 = vmatmul.f32.gmra.mxu0 %v940
        %v1127 = vpop.f32.mrf.mxu0
        %v1128 = vadd.f32 %v1108, %v1127
        %1129 = vmatmul.f32.gmra.mxu0 %v943
        %v1130 = vpop.f32.mrf.mxu0
        %v1131 = vadd.f32 %v1108, %v1130
        %1132 = vmatmul.f32.gmra.mxu0 %v946
        %v1133 = vpop.f32.mrf.mxu0
        %v1134 = vadd.f32 %v1108, %v1133
        %1135 = vmatmul.f32.gmra.mxu0 %v949
        %v1136 = vpop.f32.mrf.mxu0
        %v1137 = vadd.f32 %v1108, %v1136
        %1138 = vmatmul.f32.gmra.mxu0 %v952
        %v1139 = vpop.f32.mrf.mxu0
        %v1140 = vadd.f32 %v1108, %v1139
        %1141 = vmatmul.f32.gmra.mxu0 %v955
        %v1142 = vpop.f32.mrf.mxu0
        %v1143 = vadd.f32 %v1108, %v1142
        %1144 = vmatmul.f32.gmra.mxu0 %v958
        %v1145 = vpop.f32.mrf.mxu0
        %v1146 = vadd.f32 %v1108, %v1145
        %1147 = vmatmul.f32.gmra.mxu0 %v961
        %v1148 = vpop.f32.mrf.mxu0
        %v1149 = vadd.f32 %v1108, %v1148
        %1150 = vdwg.mxu0
        %v1151 = vld [vmem:[%s25] sm:$0xff]
        %v1152 = vld [vmem:[%s25 + $0x8] sm:$0xff]
        %v1153 = vld [vmem:[%s25 + $0x10] sm:$0xff]
        %v1154 = vld [vmem:[%s25 + $0x18] sm:$0xff]
        %v1155 = vld [vmem:[%s31] sm:$0x1]
        %v1157 = vperm.slane %v1155, 0
        %1159 = vmatpush.msra.mxu0 0.0
        %1160 = vmatpush.msra.mxu0 0.0
        %1161 = vmatpush.msra.mxu0 0.0
        %1162 = vmatpush.msra.mxu0 0.0
        %1163 = vmatpush.msra.mxu0 0.0
        %1164 = vmatpush.msra.mxu0 0.0
        %1165 = vmatpush.msra.mxu0 0.0
        %1166 = vmatpush.msra.mxu0 0.0
        %1167 = vmatpush.msra.mxu0 0.0
        %1168 = vmatpush.msra.mxu0 0.0
        %1169 = vmatpush.msra.mxu0 0.0
        %1170 = vmatpush.msra.mxu0 0.0
        %1171 = vmatpush.msra.mxu0 %v1154
        %1172 = vmatpush.msra.mxu0 %v1153
        %1173 = vmatpush.msra.mxu0 %v1152
        %1174 = vmatpush.msra.mxu0 %v1151
        %1175 = vmatmul.f32.gmra.mxu0 %v940
        %v1176 = vpop.f32.mrf.mxu0
        %v1177 = vadd.f32 %v1157, %v1176
        %1178 = vmatmul.f32.gmra.mxu0 %v943
        %v1179 = vpop.f32.mrf.mxu0
        %v1180 = vadd.f32 %v1157, %v1179
        %1181 = vmatmul.f32.gmra.mxu0 %v946
        %v1182 = vpop.f32.mrf.mxu0
        %v1183 = vadd.f32 %v1157, %v1182
        %1184 = vmatmul.f32.gmra.mxu0 %v949
        %v1185 = vpop.f32.mrf.mxu0
        %v1186 = vadd.f32 %v1157, %v1185
        %1187 = vmatmul.f32.gmra.mxu0 %v952
        %v1188 = vpop.f32.mrf.mxu0
        %v1189 = vadd.f32 %v1157, %v1188
        %1190 = vmatmul.f32.gmra.mxu0 %v955
        %v1191 = vpop.f32.mrf.mxu0
        %v1192 = vadd.f32 %v1157, %v1191
        %1193 = vmatmul.f32.gmra.mxu0 %v958
        %v1194 = vpop.f32.mrf.mxu0
        %v1195 = vadd.f32 %v1157, %v1194
        %1196 = vmatmul.f32.gmra.mxu0 %v961
        %v1197 = vpop.f32.mrf.mxu0
        %v1198 = vadd.f32 %v1157, %v1197
        %1199 = vdwg.mxu0
        %v1200 = vld [vmem:[%s27] sm:$0xff]
        %v1201 = vld [vmem:[%s27 + $0x8] sm:$0xff]
        %v1202 = vld [vmem:[%s27 + $0x10] sm:$0xff]
        %v1203 = vld [vmem:[%s27 + $0x18] sm:$0xff]
        %v1204 = vld [vmem:[%s33] sm:$0x1]
        %v1206 = vperm.slane %v1204, 0
        %1208 = vmatpush.msra.mxu0 0.0
        %1209 = vmatpush.msra.mxu0 0.0
        %1210 = vmatpush.msra.mxu0 0.0
        %1211 = vmatpush.msra.mxu0 0.0
        %1212 = vmatpush.msra.mxu0 0.0
        %1213 = vmatpush.msra.mxu0 0.0
        %1214 = vmatpush.msra.mxu0 0.0
        %1215 = vmatpush.msra.mxu0 0.0
        %1216 = vmatpush.msra.mxu0 0.0
        %1217 = vmatpush.msra.mxu0 0.0
        %1218 = vmatpush.msra.mxu0 0.0
        %1219 = vmatpush.msra.mxu0 0.0
        %1220 = vmatpush.msra.mxu0 %v1203
        %1221 = vmatpush.msra.mxu0 %v1202
        %1222 = vmatpush.msra.mxu0 %v1201
        %1223 = vmatpush.msra.mxu0 %v1200
        %1224 = vmatmul.f32.gmra.mxu0 %v940
        %v1225 = vpop.f32.mrf.mxu0
        %v1226 = vadd.f32 %v1206, %v1225
        %1227 = vmatmul.f32.gmra.mxu0 %v943
        %v1228 = vpop.f32.mrf.mxu0
        %v1229 = vadd.f32 %v1206, %v1228
        %1230 = vmatmul.f32.gmra.mxu0 %v946
        %v1231 = vpop.f32.mrf.mxu0
        %v1232 = vadd.f32 %v1206, %v1231
        %1233 = vmatmul.f32.gmra.mxu0 %v949
        %v1234 = vpop.f32.mrf.mxu0
        %v1235 = vadd.f32 %v1206, %v1234
        %1236 = vmatmul.f32.gmra.mxu0 %v952
        %v1237 = vpop.f32.mrf.mxu0
        %v1238 = vadd.f32 %v1206, %v1237
        %1239 = vmatmul.f32.gmra.mxu0 %v955
        %v1240 = vpop.f32.mrf.mxu0
        %v1241 = vadd.f32 %v1206, %v1240
        %1242 = vmatmul.f32.gmra.mxu0 %v958
        %v1243 = vpop.f32.mrf.mxu0
        %v1244 = vadd.f32 %v1206, %v1243
        %1245 = vmatmul.f32.gmra.mxu0 %v961
        %v1246 = vpop.f32.mrf.mxu0
        %v1247 = vadd.f32 %v1206, %v1246
        %1248 = vdwg.mxu0
        %v1249 = vld [vmem:[%s15] sm:$0xff]
        %v1250 = vld [vmem:[%s15 + $0x8] sm:$0xff]
        %v1251 = vld [vmem:[%s17] sm:$0xff]
        %v1252 = vld [vmem:[%s17 + $0x8] sm:$0xff]
        %v1253 = vld [vmem:[%s19] sm:$0xff]
        %v1254 = vld [vmem:[%s19 + $0x8] sm:$0xff]
        %v1255 = vld [vmem:[%s21] sm:$0x1]
        %v1256 = vld [vmem:[%s35] sm:$0xff]
        %v1257 = vld [vmem:[%s35 + $0x8] sm:$0xff]
        %v1258 = vld [vmem:[%s37] sm:$0xff]
        %v1259 = vld [vmem:[%s37 + $0x8] sm:$0xff]
        %v1260 = vld [vmem:[%s39] sm:$0xff]
        %v1261 = vld [vmem:[%s39 + $0x8] sm:$0xff]
        %v1262 = vld [vmem:[%s41] sm:$0x1]
        %vm1263 = vcmask 130048
        %v1265 = vsel %vm1263, 0.0, 0
        %1267 = vmatpush.msra.mxu0 0.0
        %1268 = vmatpush.msra.mxu0 0.0
        %1269 = vmatpush.msra.mxu0 0.0
        %1270 = vmatpush.msra.mxu0 0.0
        %1271 = vmatpush.msra.mxu0 0.0
        %1272 = vmatpush.msra.mxu0 0.0
        %1273 = vmatpush.msra.mxu0 0.0
        %1274 = vmatpush.msra.mxu0 0.0
        %1275 = vmatpush.msra.mxu0 0.0
        %1276 = vmatpush.msra.mxu0 0.0
        %1277 = vmatpush.msra.mxu0 0.0
        %1278 = vmatpush.msra.mxu0 0.0
        %1279 = vmatpush.msra.mxu0 0.0
        %1280 = vmatpush.msra.mxu0 0.0
        %1281 = vmatpush.msra.mxu0 %v1250
        %1282 = vmatpush.msra.mxu0 %v1249
        %1283 = vmatmul.f32.gmra.mxu0 %v1265
        %v1284 = vpop.f32.mrf.mxu0
        %v1285 = vadd.f32 0.0, %v1284
        %1286 = vdwg.mxu0
        %v1287 = vadd.f32 %v981, %v1285
        %v1288 = vxor.u32 %v1287, 2147483648
        %v1289 = vmul.f32 %v1288, 1.442695
        %v1290 = vpow.pop %v1289
        %v1291 = vadd.f32 %v1290, 1.0
        %v1292 = vrcp.pop %v1291
        %v1293 = vmul.f32 %v1291, %v1292
        %v1294 = vsub.f32 1.0, %v1293
        %v1295 = vmul.f32 %v1292, %v1294
        %v1296 = vadd.f32 %v1292, %v1295
        %vm1297 = vweird.f32 %v1291
        %vm1298 = vweird.f32 %v1292
        %vm1299 = vmor %vm1297, %vm1298
        %v1300 = vsel %vm1299, %v1292, %v1296
        %v1301 = vand.u32 2147483647, %v1291
        %vm1302 = vcmp.eq.f32.partialorder %v1301, 8.507059e+37
        %v1303 = vand.u32 %v1291, 2147483648
        %v1304 = vor.u32 1.1754944e-38, %v1303
        %v1305 = vsel %vm1302, %v1304, %v1300
        %v1306 = vmul.f32 1.0, %v1305
        %1307 = vmatpush.msra.mxu0 0.0
        %1308 = vmatpush.msra.mxu0 0.0
        %1309 = vmatpush.msra.mxu0 0.0
        %1310 = vmatpush.msra.mxu0 0.0
        %1311 = vmatpush.msra.mxu0 0.0
        %1312 = vmatpush.msra.mxu0 0.0
        %1313 = vmatpush.msra.mxu0 0.0
        %1314 = vmatpush.msra.mxu0 0.0
        %1315 = vmatpush.msra.mxu0 0.0
        %1316 = vmatpush.msra.mxu0 0.0
        %1317 = vmatpush.msra.mxu0 0.0
        %1318 = vmatpush.msra.mxu0 0.0
        %1319 = vmatpush.msra.mxu0 0.0
        %1320 = vmatpush.msra.mxu0 0.0
        %1321 = vmatpush.msra.mxu0 %v1252
        %1322 = vmatpush.msra.mxu0 %v1251
        %1323 = vmatmul.f32.gmra.mxu0 %v1265
        %v1324 = vpop.f32.mrf.mxu0
        %v1325 = vadd.f32 0.0, %v1324
        %1326 = vdwg.mxu0
        %v1327 = vadd.f32 %v1030, %v1325
        %v1328 = vxor.u32 %v1327, 2147483648
        %v1329 = vmul.f32 %v1328, 1.442695
        %v1330 = vpow.pop %v1329
        %v1331 = vadd.f32 %v1330, 1.0
        %v1332 = vrcp.pop %v1331
        %v1333 = vmul.f32 %v1331, %v1332
        %v1334 = vsub.f32 1.0, %v1333
        %v1335 = vmul.f32 %v1332, %v1334
        %v1336 = vadd.f32 %v1332, %v1335
        %vm1337 = vweird.f32 %v1331
        %vm1338 = vweird.f32 %v1332
        %vm1339 = vmor %vm1337, %vm1338
        %v1340 = vsel %vm1339, %v1332, %v1336
        %v1341 = vand.u32 2147483647, %v1331
        %vm1342 = vcmp.eq.f32.partialorder %v1341, 8.507059e+37
        %v1343 = vand.u32 %v1331, 2147483648
        %v1344 = vor.u32 1.1754944e-38, %v1343
        %v1345 = vsel %vm1342, %v1344, %v1340
        %v1346 = vmul.f32 1.0, %v1345
        %v1348 = vperm.slane %v1255, 0
        %1350 = vmatpush.msra.mxu0 0.0
        %1351 = vmatpush.msra.mxu0 0.0
        %1352 = vmatpush.msra.mxu0 0.0
        %1353 = vmatpush.msra.mxu0 0.0
        %1354 = vmatpush.msra.mxu0 0.0
        %1355 = vmatpush.msra.mxu0 0.0
        %1356 = vmatpush.msra.mxu0 0.0
        %1357 = vmatpush.msra.mxu0 0.0
        %1358 = vmatpush.msra.mxu0 0.0
        %1359 = vmatpush.msra.mxu0 0.0
        %1360 = vmatpush.msra.mxu0 0.0
        %1361 = vmatpush.msra.mxu0 0.0
        %1362 = vmatpush.msra.mxu0 0.0
        %1363 = vmatpush.msra.mxu0 0.0
        %1364 = vmatpush.msra.mxu0 %v1254
        %1365 = vmatpush.msra.mxu0 %v1253
        %1366 = vmatmul.f32.gmra.mxu0 %v1265
        %v1367 = vpop.f32.mrf.mxu0
        %v1368 = vadd.f32 %v1348, %v1367
        %1369 = vdwg.mxu0
        %v1370 = vmul.f32 %v1306, %v1368
        %v1371 = vadd.f32 %v1079, %v1370
        %v1372 = vtanh.pop %v1371
        %v1373 = vsub.f32 1.0, %v1346
        %v1374 = vmul.f32 %v1373, %v1372
        %v1375 = vmul.f32 %v1346, 0.0
        %v1376 = vadd.f32 %v1374, %v1375
        %1377 = vmatpush.msra.mxu0 0.0
        %1378 = vmatpush.msra.mxu0 0.0
        %1379 = vmatpush.msra.mxu0 0.0
        %1380 = vmatpush.msra.mxu0 0.0
        %1381 = vmatpush.msra.mxu0 0.0
        %1382 = vmatpush.msra.mxu0 0.0
        %1383 = vmatpush.msra.mxu0 0.0
        %1384 = vmatpush.msra.mxu0 0.0
        %1385 = vmatpush.msra.mxu0 0.0
        %1386 = vmatpush.msra.mxu0 0.0
        %1387 = vmatpush.msra.mxu0 0.0
        %1388 = vmatpush.msra.mxu0 0.0
        %1389 = vmatpush.msra.mxu0 0.0
        %1390 = vmatpush.msra.mxu0 0.0
        %1391 = vmatpush.msra.mxu0 %v1257
        %1392 = vmatpush.msra.mxu0 %v1256
        %1393 = vmatmul.f32.gmra.mxu0 %v1265
        %v1394 = vpop.f32.mrf.mxu0
        %v1395 = vadd.f32 0.0, %v1394
        %1396 = vdwg.mxu0
        %v1397 = vadd.f32 %v1149, %v1395
        %v1398 = vxor.u32 %v1397, 2147483648
        %v1399 = vmul.f32 %v1398, 1.442695
        %v1400 = vpow.pop %v1399
        %v1401 = vadd.f32 %v1400, 1.0
        %v1402 = vrcp.pop %v1401
        %v1403 = vmul.f32 %v1401, %v1402
        %v1404 = vsub.f32 1.0, %v1403
        %v1405 = vmul.f32 %v1402, %v1404
        %v1406 = vadd.f32 %v1402, %v1405
        %vm1407 = vweird.f32 %v1401
        %vm1408 = vweird.f32 %v1402
        %vm1409 = vmor %vm1407, %vm1408
        %v1410 = vsel %vm1409, %v1402, %v1406
        %v1411 = vand.u32 2147483647, %v1401
        %vm1412 = vcmp.eq.f32.partialorder %v1411, 8.507059e+37
        %v1413 = vand.u32 %v1401, 2147483648
        %v1414 = vor.u32 1.1754944e-38, %v1413
        %v1415 = vsel %vm1412, %v1414, %v1410
        %v1416 = vmul.f32 1.0, %v1415
        %1417 = vmatpush.msra.mxu0 0.0
        %1418 = vmatpush.msra.mxu0 0.0
        %1419 = vmatpush.msra.mxu0 0.0
        %1420 = vmatpush.msra.mxu0 0.0
        %1421 = vmatpush.msra.mxu0 0.0
        %1422 = vmatpush.msra.mxu0 0.0
        %1423 = vmatpush.msra.mxu0 0.0
        %1424 = vmatpush.msra.mxu0 0.0
        %1425 = vmatpush.msra.mxu0 0.0
        %1426 = vmatpush.msra.mxu0 0.0
        %1427 = vmatpush.msra.mxu0 0.0
        %1428 = vmatpush.msra.mxu0 0.0
        %1429 = vmatpush.msra.mxu0 0.0
        %1430 = vmatpush.msra.mxu0 0.0
        %1431 = vmatpush.msra.mxu0 %v1259
        %1432 = vmatpush.msra.mxu0 %v1258
        %1433 = vmatmul.f32.gmra.mxu0 %v1265
        %v1434 = vpop.f32.mrf.mxu0
        %v1435 = vadd.f32 0.0, %v1434
        %1436 = vdwg.mxu0
        %v1437 = vadd.f32 %v1198, %v1435
        %v1438 = vxor.u32 %v1437, 2147483648
        %v1439 = vmul.f32 %v1438, 1.442695
        %v1440 = vpow.pop %v1439
        %v1441 = vadd.f32 %v1440, 1.0
        %v1442 = vrcp.pop %v1441
        %v1443 = vmul.f32 %v1441, %v1442
        %v1444 = vsub.f32 1.0, %v1443
        %v1445 = vmul.f32 %v1442, %v1444
        %v1446 = vadd.f32 %v1442, %v1445
        %vm1447 = vweird.f32 %v1441
        %vm1448 = vweird.f32 %v1442
        %vm1449 = vmor %vm1447, %vm1448
        %v1450 = vsel %vm1449, %v1442, %v1446
        %v1451 = vand.u32 2147483647, %v1441
        %vm1452 = vcmp.eq.f32.partialorder %v1451, 8.507059e+37
        %v1453 = vand.u32 %v1441, 2147483648
        %v1454 = vor.u32 1.1754944e-38, %v1453
        %v1455 = vsel %vm1452, %v1454, %v1450
        %v1456 = vmul.f32 1.0, %v1455
        %v1458 = vperm.slane %v1262, 0
        %1460 = vmatpush.msra.mxu0 0.0
        %1461 = vmatpush.msra.mxu0 0.0
        %1462 = vmatpush.msra.mxu0 0.0
        %1463 = vmatpush.msra.mxu0 0.0
        %1464 = vmatpush.msra.mxu0 0.0
        %1465 = vmatpush.msra.mxu0 0.0
        %1466 = vmatpush.msra.mxu0 0.0
        %1467 = vmatpush.msra.mxu0 0.0
        %1468 = vmatpush.msra.mxu0 0.0
        %1469 = vmatpush.msra.mxu0 0.0
        %1470 = vmatpush.msra.mxu0 0.0
        %1471 = vmatpush.msra.mxu0 0.0
        %1472 = vmatpush.msra.mxu0 0.0
        %1473 = vmatpush.msra.mxu0 0.0
        %1474 = vmatpush.msra.mxu0 %v1261
        %1475 = vmatpush.msra.mxu0 %v1260
        %1476 = vmatmul.f32.gmra.mxu0 %v1265
        %v1477 = vpop.f32.mrf.mxu0
        %v1478 = vadd.f32 %v1458, %v1477
        %1479 = vdwg.mxu0
        %v1480 = vmul.f32 %v1416, %v1478
        %v1481 = vadd.f32 %v1247, %v1480
        %v1482 = vtanh.pop %v1481
        %v1483 = vsub.f32 1.0, %v1456
        %v1484 = vmul.f32 %v1483, %v1482
        %v1485 = vmul.f32 %v1456, 0.0
        %v1486 = vadd.f32 %v1484, %v1485
        %v1488 = vsel %vm1263, %v1376, 0
        %1490 = vmatpush.msra.mxu0 0.0
        %1491 = vmatpush.msra.mxu0 0.0
        %1492 = vmatpush.msra.mxu0 0.0
        %1493 = vmatpush.msra.mxu0 0.0
        %1494 = vmatpush.msra.mxu0 0.0
        %1495 = vmatpush.msra.mxu0 0.0
        %1496 = vmatpush.msra.mxu0 0.0
        %1497 = vmatpush.msra.mxu0 0.0
        %1498 = vmatpush.msra.mxu0 0.0
        %1499 = vmatpush.msra.mxu0 0.0
        %1500 = vmatpush.msra.mxu0 0.0
        %1501 = vmatpush.msra.mxu0 0.0
        %1502 = vmatpush.msra.mxu0 0.0
        %1503 = vmatpush.msra.mxu0 0.0
        %1504 = vmatpush.msra.mxu0 %v1250
        %1505 = vmatpush.msra.mxu0 %v1249
        %1506 = vmatmul.f32.gmra.mxu0 %v1488
        %v1507 = vpop.f32.mrf.mxu0
        %v1508 = vadd.f32 0.0, %v1507
        %1509 = vdwg.mxu0
        %v1510 = vadd.f32 %v984, %v1508
        %v1511 = vxor.u32 %v1510, 2147483648
        %v1512 = vmul.f32 %v1511, 1.442695
        %v1513 = vpow.pop %v1512
        %v1514 = vadd.f32 %v1513, 1.0
        %v1515 = vrcp.pop %v1514
        %v1516 = vmul.f32 %v1514, %v1515
        %v1517 = vsub.f32 1.0, %v1516
        %v1518 = vmul.f32 %v1515, %v1517
        %v1519 = vadd.f32 %v1515, %v1518
        %vm1520 = vweird.f32 %v1514
        %vm1521 = vweird.f32 %v1515
        %vm1522 = vmor %vm1520, %vm1521
        %v1523 = vsel %vm1522, %v1515, %v1519
        %v1524 = vand.u32 2147483647, %v1514
        %vm1525 = vcmp.eq.f32.partialorder %v1524, 8.507059e+37
        %v1526 = vand.u32 %v1514, 2147483648
        %v1527 = vor.u32 1.1754944e-38, %v1526
        %v1528 = vsel %vm1525, %v1527, %v1523
        %v1529 = vmul.f32 1.0, %v1528
        %1530 = vmatpush.msra.mxu0 0.0
        %1531 = vmatpush.msra.mxu0 0.0
        %1532 = vmatpush.msra.mxu0 0.0
        %1533 = vmatpush.msra.mxu0 0.0
        %1534 = vmatpush.msra.mxu0 0.0
        %1535 = vmatpush.msra.mxu0 0.0
        %1536 = vmatpush.msra.mxu0 0.0
        %1537 = vmatpush.msra.mxu0 0.0
        %1538 = vmatpush.msra.mxu0 0.0
        %1539 = vmatpush.msra.mxu0 0.0
        %1540 = vmatpush.msra.mxu0 0.0
        %1541 = vmatpush.msra.mxu0 0.0
        %1542 = vmatpush.msra.mxu0 0.0
        %1543 = vmatpush.msra.mxu0 0.0
        %1544 = vmatpush.msra.mxu0 %v1252
        %1545 = vmatpush.msra.mxu0 %v1251
        %1546 = vmatmul.f32.gmra.mxu0 %v1488
        %v1547 = vpop.f32.mrf.mxu0
        %v1548 = vadd.f32 0.0, %v1547
        %1549 = vdwg.mxu0
        %v1550 = vadd.f32 %v1033, %v1548
        %v1551 = vxor.u32 %v1550, 2147483648
        %v1552 = vmul.f32 %v1551, 1.442695
        %v1553 = vpow.pop %v1552
        %v1554 = vadd.f32 %v1553, 1.0
        %v1555 = vrcp.pop %v1554
        %v1556 = vmul.f32 %v1554, %v1555
        %v1557 = vsub.f32 1.0, %v1556
        %v1558 = vmul.f32 %v1555, %v1557
        %v1559 = vadd.f32 %v1555, %v1558
        %vm1560 = vweird.f32 %v1554
        %vm1561 = vweird.f32 %v1555
        %vm1562 = vmor %vm1560, %vm1561
        %v1563 = vsel %vm1562, %v1555, %v1559
        %v1564 = vand.u32 2147483647, %v1554
        %vm1565 = vcmp.eq.f32.partialorder %v1564, 8.507059e+37
        %v1566 = vand.u32 %v1554, 2147483648
        %v1567 = vor.u32 1.1754944e-38, %v1566
        %v1568 = vsel %vm1565, %v1567, %v1563
        %v1569 = vmul.f32 1.0, %v1568
        %1570 = vmatpush.msra.mxu0 0.0
        %1571 = vmatpush.msra.mxu0 0.0
        %1572 = vmatpush.msra.mxu0 0.0
        %1573 = vmatpush.msra.mxu0 0.0
        %1574 = vmatpush.msra.mxu0 0.0
        %1575 = vmatpush.msra.mxu0 0.0
        %1576 = vmatpush.msra.mxu0 0.0
        %1577 = vmatpush.msra.mxu0 0.0
        %1578 = vmatpush.msra.mxu0 0.0
        %1579 = vmatpush.msra.mxu0 0.0
        %1580 = vmatpush.msra.mxu0 0.0
        %1581 = vmatpush.msra.mxu0 0.0
        %1582 = vmatpush.msra.mxu0 0.0
        %1583 = vmatpush.msra.mxu0 0.0
        %1584 = vmatpush.msra.mxu0 %v1254
        %1585 = vmatpush.msra.mxu0 %v1253
        %1586 = vmatmul.f32.gmra.mxu0 %v1488
        %v1587 = vpop.f32.mrf.mxu0
        %v1588 = vadd.f32 %v1348, %v1587
        %1589 = vdwg.mxu0
        %v1590 = vmul.f32 %v1529, %v1588
        %v1591 = vadd.f32 %v1082, %v1590
        %v1592 = vtanh.pop %v1591
        %v1593 = vsub.f32 1.0, %v1569
        %v1594 = vmul.f32 %v1593, %v1592
        %v1595 = vmul.f32 %v1569, %v1376
        %v1596 = vadd.f32 %v1594, %v1595
        %v1598 = vsel %vm1263, %v1486, 0
        %1600 = vmatpush.msra.mxu0 0.0
        %1601 = vmatpush.msra.mxu0 0.0
        %1602 = vmatpush.msra.mxu0 0.0
        %1603 = vmatpush.msra.mxu0 0.0
        %1604 = vmatpush.msra.mxu0 0.0
        %1605 = vmatpush.msra.mxu0 0.0
        %1606 = vmatpush.msra.mxu0 0.0
        %1607 = vmatpush.msra.mxu0 0.0
        %1608 = vmatpush.msra.mxu0 0.0
        %1609 = vmatpush.msra.mxu0 0.0
        %1610 = vmatpush.msra.mxu0 0.0
        %1611 = vmatpush.msra.mxu0 0.0
        %1612 = vmatpush.msra.mxu0 0.0
        %1613 = vmatpush.msra.mxu0 0.0
        %1614 = vmatpush.msra.mxu0 %v1257
        %1615 = vmatpush.msra.mxu0 %v1256
        %1616 = vmatmul.f32.gmra.mxu0 %v1598
        %v1617 = vpop.f32.mrf.mxu0
        %v1618 = vadd.f32 0.0, %v1617
        %1619 = vdwg.mxu0
        %v1620 = vadd.f32 %v1146, %v1618
        %v1621 = vxor.u32 %v1620, 2147483648
        %v1622 = vmul.f32 %v1621, 1.442695
        %v1623 = vpow.pop %v1622
        %v1624 = vadd.f32 %v1623, 1.0
        %v1625 = vrcp.pop %v1624
        %v1626 = vmul.f32 %v1624, %v1625
        %v1627 = vsub.f32 1.0, %v1626
        %v1628 = vmul.f32 %v1625, %v1627
        %v1629 = vadd.f32 %v1625, %v1628
        %vm1630 = vweird.f32 %v1624
        %vm1631 = vweird.f32 %v1625
        %vm1632 = vmor %vm1630, %vm1631
        %v1633 = vsel %vm1632, %v1625, %v1629
        %v1634 = vand.u32 2147483647, %v1624
        %vm1635 = vcmp.eq.f32.partialorder %v1634, 8.507059e+37
        %v1636 = vand.u32 %v1624, 2147483648
        %v1637 = vor.u32 1.1754944e-38, %v1636
        %v1638 = vsel %vm1635, %v1637, %v1633
        %v1639 = vmul.f32 1.0, %v1638
        %1640 = vmatpush.msra.mxu0 0.0
        %1641 = vmatpush.msra.mxu0 0.0
        %1642 = vmatpush.msra.mxu0 0.0
        %1643 = vmatpush.msra.mxu0 0.0
        %1644 = vmatpush.msra.mxu0 0.0
        %1645 = vmatpush.msra.mxu0 0.0
        %1646 = vmatpush.msra.mxu0 0.0
        %1647 = vmatpush.msra.mxu0 0.0
        %1648 = vmatpush.msra.mxu0 0.0
        %1649 = vmatpush.msra.mxu0 0.0
        %1650 = vmatpush.msra.mxu0 0.0
        %1651 = vmatpush.msra.mxu0 0.0
        %1652 = vmatpush.msra.mxu0 0.0
        %1653 = vmatpush.msra.mxu0 0.0
        %1654 = vmatpush.msra.mxu0 %v1259
        %1655 = vmatpush.msra.mxu0 %v1258
        %1656 = vmatmul.f32.gmra.mxu0 %v1598
        %v1657 = vpop.f32.mrf.mxu0
        %v1658 = vadd.f32 0.0, %v1657
        %1659 = vdwg.mxu0
        %v1660 = vadd.f32 %v1195, %v1658
        %v1661 = vxor.u32 %v1660, 2147483648
        %v1662 = vmul.f32 %v1661, 1.442695
        %v1663 = vpow.pop %v1662
        %v1664 = vadd.f32 %v1663, 1.0
        %v1665 = vrcp.pop %v1664
        %v1666 = vmul.f32 %v1664, %v1665
        %v1667 = vsub.f32 1.0, %v1666
        %v1668 = vmul.f32 %v1665, %v1667
        %v1669 = vadd.f32 %v1665, %v1668
        %vm1670 = vweird.f32 %v1664
        %vm1671 = vweird.f32 %v1665
        %vm1672 = vmor %vm1670, %vm1671
        %v1673 = vsel %vm1672, %v1665, %v1669
        %v1674 = vand.u32 2147483647, %v1664
        %vm1675 = vcmp.eq.f32.partialorder %v1674, 8.507059e+37
        %v1676 = vand.u32 %v1664, 2147483648
        %v1677 = vor.u32 1.1754944e-38, %v1676
        %v1678 = vsel %vm1675, %v1677, %v1673
        %v1679 = vmul.f32 1.0, %v1678
        %1680 = vmatpush.msra.mxu0 0.0
        %1681 = vmatpush.msra.mxu0 0.0
        %1682 = vmatpush.msra.mxu0 0.0
        %1683 = vmatpush.msra.mxu0 0.0
        %1684 = vmatpush.msra.mxu0 0.0
        %1685 = vmatpush.msra.mxu0 0.0
        %1686 = vmatpush.msra.mxu0 0.0
        %1687 = vmatpush.msra.mxu0 0.0
        %1688 = vmatpush.msra.mxu0 0.0
        %1689 = vmatpush.msra.mxu0 0.0
        %1690 = vmatpush.msra.mxu0 0.0
        %1691 = vmatpush.msra.mxu0 0.0
        %1692 = vmatpush.msra.mxu0 0.0
        %1693 = vmatpush.msra.mxu0 0.0
        %1694 = vmatpush.msra.mxu0 %v1261
        %1695 = vmatpush.msra.mxu0 %v1260
        %1696 = vmatmul.f32.gmra.mxu0 %v1598
        %v1697 = vpop.f32.mrf.mxu0
        %v1698 = vadd.f32 %v1458, %v1697
        %1699 = vdwg.mxu0
        %v1700 = vmul.f32 %v1639, %v1698
        %v1701 = vadd.f32 %v1244, %v1700
        %v1702 = vtanh.pop %v1701
        %v1703 = vsub.f32 1.0, %v1679
        %v1704 = vmul.f32 %v1703, %v1702
        %v1705 = vmul.f32 %v1679, %v1486
        %v1706 = vadd.f32 %v1704, %v1705
        %v1708 = vsel %vm1263, %v1596, 0
        %1710 = vmatpush.msra.mxu0 0.0
        %1711 = vmatpush.msra.mxu0 0.0
        %1712 = vmatpush.msra.mxu0 0.0
        %1713 = vmatpush.msra.mxu0 0.0
        %1714 = vmatpush.msra.mxu0 0.0
        %1715 = vmatpush.msra.mxu0 0.0
        %1716 = vmatpush.msra.mxu0 0.0
        %1717 = vmatpush.msra.mxu0 0.0
        %1718 = vmatpush.msra.mxu0 0.0
        %1719 = vmatpush.msra.mxu0 0.0
        %1720 = vmatpush.msra.mxu0 0.0
        %1721 = vmatpush.msra.mxu0 0.0
        %1722 = vmatpush.msra.mxu0 0.0
        %1723 = vmatpush.msra.mxu0 0.0
        %1724 = vmatpush.msra.mxu0 %v1250
        %1725 = vmatpush.msra.mxu0 %v1249
        %1726 = vmatmul.f32.gmra.mxu0 %v1708
        %v1727 = vpop.f32.mrf.mxu0
        %v1728 = vadd.f32 0.0, %v1727
        %1729 = vdwg.mxu0
        %v1730 = vadd.f32 %v987, %v1728
        %v1731 = vxor.u32 %v1730, 2147483648
        %v1732 = vmul.f32 %v1731, 1.442695
        %v1733 = vpow.pop %v1732
        %v1734 = vadd.f32 %v1733, 1.0
        %v1735 = vrcp.pop %v1734
        %v1736 = vmul.f32 %v1734, %v1735
        %v1737 = vsub.f32 1.0, %v1736
        %v1738 = vmul.f32 %v1735, %v1737
        %v1739 = vadd.f32 %v1735, %v1738
        %vm1740 = vweird.f32 %v1734
        %vm1741 = vweird.f32 %v1735
        %vm1742 = vmor %vm1740, %vm1741
        %v1743 = vsel %vm1742, %v1735, %v1739
        %v1744 = vand.u32 2147483647, %v1734
        %vm1745 = vcmp.eq.f32.partialorder %v1744, 8.507059e+37
        %v1746 = vand.u32 %v1734, 2147483648
        %v1747 = vor.u32 1.1754944e-38, %v1746
        %v1748 = vsel %vm1745, %v1747, %v1743
        %v1749 = vmul.f32 1.0, %v1748
        %1750 = vmatpush.msra.mxu0 0.0
        %1751 = vmatpush.msra.mxu0 0.0
        %1752 = vmatpush.msra.mxu0 0.0
        %1753 = vmatpush.msra.mxu0 0.0
        %1754 = vmatpush.msra.mxu0 0.0
        %1755 = vmatpush.msra.mxu0 0.0
        %1756 = vmatpush.msra.mxu0 0.0
        %1757 = vmatpush.msra.mxu0 0.0
        %1758 = vmatpush.msra.mxu0 0.0
        %1759 = vmatpush.msra.mxu0 0.0
        %1760 = vmatpush.msra.mxu0 0.0
        %1761 = vmatpush.msra.mxu0 0.0
        %1762 = vmatpush.msra.mxu0 0.0
        %1763 = vmatpush.msra.mxu0 0.0
        %1764 = vmatpush.msra.mxu0 %v1252
        %1765 = vmatpush.msra.mxu0 %v1251
        %1766 = vmatmul.f32.gmra.mxu0 %v1708
        %v1767 = vpop.f32.mrf.mxu0
        %v1768 = vadd.f32 0.0, %v1767
        %1769 = vdwg.mxu0
        %v1770 = vadd.f32 %v1036, %v1768
        %v1771 = vxor.u32 %v1770, 2147483648
        %v1772 = vmul.f32 %v1771, 1.442695
        %v1773 = vpow.pop %v1772
        %v1774 = vadd.f32 %v1773, 1.0
        %v1775 = vrcp.pop %v1774
        %v1776 = vmul.f32 %v1774, %v1775
        %v1777 = vsub.f32 1.0, %v1776
        %v1778 = vmul.f32 %v1775, %v1777
        %v1779 = vadd.f32 %v1775, %v1778
        %vm1780 = vweird.f32 %v1774
        %vm1781 = vweird.f32 %v1775
        %vm1782 = vmor %vm1780, %vm1781
        %v1783 = vsel %vm1782, %v1775, %v1779
        %v1784 = vand.u32 2147483647, %v1774
        %vm1785 = vcmp.eq.f32.partialorder %v1784, 8.507059e+37
        %v1786 = vand.u32 %v1774, 2147483648
        %v1787 = vor.u32 1.1754944e-38, %v1786
        %v1788 = vsel %vm1785, %v1787, %v1783
        %v1789 = vmul.f32 1.0, %v1788
        %1790 = vmatpush.msra.mxu0 0.0
        %1791 = vmatpush.msra.mxu0 0.0
        %1792 = vmatpush.msra.mxu0 0.0
        %1793 = vmatpush.msra.mxu0 0.0
        %1794 = vmatpush.msra.mxu0 0.0
        %1795 = vmatpush.msra.mxu0 0.0
        %1796 = vmatpush.msra.mxu0 0.0
        %1797 = vmatpush.msra.mxu0 0.0
        %1798 = vmatpush.msra.mxu0 0.0
        %1799 = vmatpush.msra.mxu0 0.0
        %1800 = vmatpush.msra.mxu0 0.0
        %1801 = vmatpush.msra.mxu0 0.0
        %1802 = vmatpush.msra.mxu0 0.0
        %1803 = vmatpush.msra.mxu0 0.0
        %1804 = vmatpush.msra.mxu0 %v1254
        %1805 = vmatpush.msra.mxu0 %v1253
        %1806 = vmatmul.f32.gmra.mxu0 %v1708
        %v1807 = vpop.f32.mrf.mxu0
        %v1808 = vadd.f32 %v1348, %v1807
        %1809 = vdwg.mxu0
        %v1810 = vmul.f32 %v1749, %v1808
        %v1811 = vadd.f32 %v1085, %v1810
        %v1812 = vtanh.pop %v1811
        %v1813 = vsub.f32 1.0, %v1789
        %v1814 = vmul.f32 %v1813, %v1812
        %v1815 = vmul.f32 %v1789, %v1596
        %v1816 = vadd.f32 %v1814, %v1815
        %v1818 = vsel %vm1263, %v1706, 0
        %1820 = vmatpush.msra.mxu0 0.0
        %1821 = vmatpush.msra.mxu0 0.0
        %1822 = vmatpush.msra.mxu0 0.0
        %1823 = vmatpush.msra.mxu0 0.0
        %1824 = vmatpush.msra.mxu0 0.0
        %1825 = vmatpush.msra.mxu0 0.0
        %1826 = vmatpush.msra.mxu0 0.0
        %1827 = vmatpush.msra.mxu0 0.0
        %1828 = vmatpush.msra.mxu0 0.0
        %1829 = vmatpush.msra.mxu0 0.0
        %1830 = vmatpush.msra.mxu0 0.0
        %1831 = vmatpush.msra.mxu0 0.0
        %1832 = vmatpush.msra.mxu0 0.0
        %1833 = vmatpush.msra.mxu0 0.0
        %1834 = vmatpush.msra.mxu0 %v1257
        %1835 = vmatpush.msra.mxu0 %v1256
        %1836 = vmatmul.f32.gmra.mxu0 %v1818
        %v1837 = vpop.f32.mrf.mxu0
        %v1838 = vadd.f32 0.0, %v1837
        %1839 = vdwg.mxu0
        %v1840 = vadd.f32 %v1143, %v1838
        %v1841 = vxor.u32 %v1840, 2147483648
        %v1842 = vmul.f32 %v1841, 1.442695
        %v1843 = vpow.pop %v1842
        %v1844 = vadd.f32 %v1843, 1.0
        %v1845 = vrcp.pop %v1844
        %v1846 = vmul.f32 %v1844, %v1845
        %v1847 = vsub.f32 1.0, %v1846
        %v1848 = vmul.f32 %v1845, %v1847
        %v1849 = vadd.f32 %v1845, %v1848
        %vm1850 = vweird.f32 %v1844
        %vm1851 = vweird.f32 %v1845
        %vm1852 = vmor %vm1850, %vm1851
        %v1853 = vsel %vm1852, %v1845, %v1849
        %v1854 = vand.u32 2147483647, %v1844
        %vm1855 = vcmp.eq.f32.partialorder %v1854, 8.507059e+37
        %v1856 = vand.u32 %v1844, 2147483648
        %v1857 = vor.u32 1.1754944e-38, %v1856
        %v1858 = vsel %vm1855, %v1857, %v1853
        %v1859 = vmul.f32 1.0, %v1858
        %1860 = vmatpush.msra.mxu0 0.0
        %1861 = vmatpush.msra.mxu0 0.0
        %1862 = vmatpush.msra.mxu0 0.0
        %1863 = vmatpush.msra.mxu0 0.0
        %1864 = vmatpush.msra.mxu0 0.0
        %1865 = vmatpush.msra.mxu0 0.0
        %1866 = vmatpush.msra.mxu0 0.0
        %1867 = vmatpush.msra.mxu0 0.0
        %1868 = vmatpush.msra.mxu0 0.0
        %1869 = vmatpush.msra.mxu0 0.0
        %1870 = vmatpush.msra.mxu0 0.0
        %1871 = vmatpush.msra.mxu0 0.0
        %1872 = vmatpush.msra.mxu0 0.0
        %1873 = vmatpush.msra.mxu0 0.0
        %1874 = vmatpush.msra.mxu0 %v1259
        %1875 = vmatpush.msra.mxu0 %v1258
        %1876 = vmatmul.f32.gmra.mxu0 %v1818
        %v1877 = vpop.f32.mrf.mxu0
        %v1878 = vadd.f32 0.0, %v1877
        %1879 = vdwg.mxu0
        %v1880 = vadd.f32 %v1192, %v1878
        %v1881 = vxor.u32 %v1880, 2147483648
        %v1882 = vmul.f32 %v1881, 1.442695
        %v1883 = vpow.pop %v1882
        %v1884 = vadd.f32 %v1883, 1.0
        %v1885 = vrcp.pop %v1884
        %v1886 = vmul.f32 %v1884, %v1885
        %v1887 = vsub.f32 1.0, %v1886
        %v1888 = vmul.f32 %v1885, %v1887
        %v1889 = vadd.f32 %v1885, %v1888
        %vm1890 = vweird.f32 %v1884
        %vm1891 = vweird.f32 %v1885
        %vm1892 = vmor %vm1890, %vm1891
        %v1893 = vsel %vm1892, %v1885, %v1889
        %v1894 = vand.u32 2147483647, %v1884
        %vm1895 = vcmp.eq.f32.partialorder %v1894, 8.507059e+37
        %v1896 = vand.u32 %v1884, 2147483648
        %v1897 = vor.u32 1.1754944e-38, %v1896
        %v1898 = vsel %vm1895, %v1897, %v1893
        %v1899 = vmul.f32 1.0, %v1898
        %1900 = vmatpush.msra.mxu0 0.0
        %1901 = vmatpush.msra.mxu0 0.0
        %1902 = vmatpush.msra.mxu0 0.0
        %1903 = vmatpush.msra.mxu0 0.0
        %1904 = vmatpush.msra.mxu0 0.0
        %1905 = vmatpush.msra.mxu0 0.0
        %1906 = vmatpush.msra.mxu0 0.0
        %1907 = vmatpush.msra.mxu0 0.0
        %1908 = vmatpush.msra.mxu0 0.0
        %1909 = vmatpush.msra.mxu0 0.0
        %1910 = vmatpush.msra.mxu0 0.0
        %1911 = vmatpush.msra.mxu0 0.0
        %1912 = vmatpush.msra.mxu0 0.0
        %1913 = vmatpush.msra.mxu0 0.0
        %1914 = vmatpush.msra.mxu0 %v1261
        %1915 = vmatpush.msra.mxu0 %v1260
        %1916 = vmatmul.f32.gmra.mxu0 %v1818
        %v1917 = vpop.f32.mrf.mxu0
        %v1918 = vadd.f32 %v1458, %v1917
        %1919 = vdwg.mxu0
        %v1920 = vmul.f32 %v1859, %v1918
        %v1921 = vadd.f32 %v1241, %v1920
        %v1922 = vtanh.pop %v1921
        %v1923 = vsub.f32 1.0, %v1899
        %v1924 = vmul.f32 %v1923, %v1922
        %v1925 = vmul.f32 %v1899, %v1706
        %v1926 = vadd.f32 %v1924, %v1925
        %v1928 = vsel %vm1263, %v1816, 0
        %1930 = vmatpush.msra.mxu0 0.0
        %1931 = vmatpush.msra.mxu0 0.0
        %1932 = vmatpush.msra.mxu0 0.0
        %1933 = vmatpush.msra.mxu0 0.0
        %1934 = vmatpush.msra.mxu0 0.0
        %1935 = vmatpush.msra.mxu0 0.0
        %1936 = vmatpush.msra.mxu0 0.0
        %1937 = vmatpush.msra.mxu0 0.0
        %1938 = vmatpush.msra.mxu0 0.0
        %1939 = vmatpush.msra.mxu0 0.0
        %1940 = vmatpush.msra.mxu0 0.0
        %1941 = vmatpush.msra.mxu0 0.0
        %1942 = vmatpush.msra.mxu0 0.0
        %1943 = vmatpush.msra.mxu0 0.0
        %1944 = vmatpush.msra.mxu0 %v1250
        %1945 = vmatpush.msra.mxu0 %v1249
        %1946 = vmatmul.f32.gmra.mxu0 %v1928
        %v1947 = vpop.f32.mrf.mxu0
        %v1948 = vadd.f32 0.0, %v1947
        %1949 = vdwg.mxu0
        %v1950 = vadd.f32 %v990, %v1948
        %v1951 = vxor.u32 %v1950, 2147483648
        %v1952 = vmul.f32 %v1951, 1.442695
        %v1953 = vpow.pop %v1952
        %v1954 = vadd.f32 %v1953, 1.0
        %v1955 = vrcp.pop %v1954
        %v1956 = vmul.f32 %v1954, %v1955
        %v1957 = vsub.f32 1.0, %v1956
        %v1958 = vmul.f32 %v1955, %v1957
        %v1959 = vadd.f32 %v1955, %v1958
        %vm1960 = vweird.f32 %v1954
        %vm1961 = vweird.f32 %v1955
        %vm1962 = vmor %vm1960, %vm1961
        %v1963 = vsel %vm1962, %v1955, %v1959
        %v1964 = vand.u32 2147483647, %v1954
        %vm1965 = vcmp.eq.f32.partialorder %v1964, 8.507059e+37
        %v1966 = vand.u32 %v1954, 2147483648
        %v1967 = vor.u32 1.1754944e-38, %v1966
        %v1968 = vsel %vm1965, %v1967, %v1963
        %v1969 = vmul.f32 1.0, %v1968
        %1970 = vmatpush.msra.mxu0 0.0
        %1971 = vmatpush.msra.mxu0 0.0
        %1972 = vmatpush.msra.mxu0 0.0
        %1973 = vmatpush.msra.mxu0 0.0
        %1974 = vmatpush.msra.mxu0 0.0
        %1975 = vmatpush.msra.mxu0 0.0
        %1976 = vmatpush.msra.mxu0 0.0
        %1977 = vmatpush.msra.mxu0 0.0
        %1978 = vmatpush.msra.mxu0 0.0
        %1979 = vmatpush.msra.mxu0 0.0
        %1980 = vmatpush.msra.mxu0 0.0
        %1981 = vmatpush.msra.mxu0 0.0
        %1982 = vmatpush.msra.mxu0 0.0
        %1983 = vmatpush.msra.mxu0 0.0
        %1984 = vmatpush.msra.mxu0 %v1252
        %1985 = vmatpush.msra.mxu0 %v1251
        %1986 = vmatmul.f32.gmra.mxu0 %v1928
        %v1987 = vpop.f32.mrf.mxu0
        %v1988 = vadd.f32 0.0, %v1987
        %1989 = vdwg.mxu0
        %v1990 = vadd.f32 %v1039, %v1988
        %v1991 = vxor.u32 %v1990, 2147483648
        %v1992 = vmul.f32 %v1991, 1.442695
        %v1993 = vpow.pop %v1992
        %v1994 = vadd.f32 %v1993, 1.0
        %v1995 = vrcp.pop %v1994
        %v1996 = vmul.f32 %v1994, %v1995
        %v1997 = vsub.f32 1.0, %v1996
        %v1998 = vmul.f32 %v1995, %v1997
        %v1999 = vadd.f32 %v1995, %v1998
        %vm2000 = vweird.f32 %v1994
        %vm2001 = vweird.f32 %v1995
        %vm2002 = vmor %vm2000, %vm2001
        %v2003 = vsel %vm2002, %v1995, %v1999
        %v2004 = vand.u32 2147483647, %v1994
        %vm2005 = vcmp.eq.f32.partialorder %v2004, 8.507059e+37
        %v2006 = vand.u32 %v1994, 2147483648
        %v2007 = vor.u32 1.1754944e-38, %v2006
        %v2008 = vsel %vm2005, %v2007, %v2003
        %v2009 = vmul.f32 1.0, %v2008
        %2010 = vmatpush.msra.mxu0 0.0
        %2011 = vmatpush.msra.mxu0 0.0
        %2012 = vmatpush.msra.mxu0 0.0
        %2013 = vmatpush.msra.mxu0 0.0
        %2014 = vmatpush.msra.mxu0 0.0
        %2015 = vmatpush.msra.mxu0 0.0
        %2016 = vmatpush.msra.mxu0 0.0
        %2017 = vmatpush.msra.mxu0 0.0
        %2018 = vmatpush.msra.mxu0 0.0
        %2019 = vmatpush.msra.mxu0 0.0
        %2020 = vmatpush.msra.mxu0 0.0
        %2021 = vmatpush.msra.mxu0 0.0
        %2022 = vmatpush.msra.mxu0 0.0
        %2023 = vmatpush.msra.mxu0 0.0
        %2024 = vmatpush.msra.mxu0 %v1254
        %2025 = vmatpush.msra.mxu0 %v1253
        %2026 = vmatmul.f32.gmra.mxu0 %v1928
        %v2027 = vpop.f32.mrf.mxu0
        %v2028 = vadd.f32 %v1348, %v2027
        %2029 = vdwg.mxu0
        %v2030 = vmul.f32 %v1969, %v2028
        %v2031 = vadd.f32 %v1088, %v2030
        %v2032 = vtanh.pop %v2031
        %v2033 = vsub.f32 1.0, %v2009
        %v2034 = vmul.f32 %v2033, %v2032
        %v2035 = vmul.f32 %v2009, %v1816
        %v2036 = vadd.f32 %v2034, %v2035
        %v2038 = vsel %vm1263, %v1926, 0
        %2040 = vmatpush.msra.mxu0 0.0
        %2041 = vmatpush.msra.mxu0 0.0
        %2042 = vmatpush.msra.mxu0 0.0
        %2043 = vmatpush.msra.mxu0 0.0
        %2044 = vmatpush.msra.mxu0 0.0
        %2045 = vmatpush.msra.mxu0 0.0
        %2046 = vmatpush.msra.mxu0 0.0
        %2047 = vmatpush.msra.mxu0 0.0
        %2048 = vmatpush.msra.mxu0 0.0
        %2049 = vmatpush.msra.mxu0 0.0
        %2050 = vmatpush.msra.mxu0 0.0
        %2051 = vmatpush.msra.mxu0 0.0
        %2052 = vmatpush.msra.mxu0 0.0
        %2053 = vmatpush.msra.mxu0 0.0
        %2054 = vmatpush.msra.mxu0 %v1257
        %2055 = vmatpush.msra.mxu0 %v1256
        %2056 = vmatmul.f32.gmra.mxu0 %v2038
        %v2057 = vpop.f32.mrf.mxu0
        %v2058 = vadd.f32 0.0, %v2057
        %2059 = vdwg.mxu0
        %v2060 = vadd.f32 %v1140, %v2058
        %v2061 = vxor.u32 %v2060, 2147483648
        %v2062 = vmul.f32 %v2061, 1.442695
        %v2063 = vpow.pop %v2062
        %v2064 = vadd.f32 %v2063, 1.0
        %v2065 = vrcp.pop %v2064
        %v2066 = vmul.f32 %v2064, %v2065
        %v2067 = vsub.f32 1.0, %v2066
        %v2068 = vmul.f32 %v2065, %v2067
        %v2069 = vadd.f32 %v2065, %v2068
        %vm2070 = vweird.f32 %v2064
        %vm2071 = vweird.f32 %v2065
        %vm2072 = vmor %vm2070, %vm2071
        %v2073 = vsel %vm2072, %v2065, %v2069
        %v2074 = vand.u32 2147483647, %v2064
        %vm2075 = vcmp.eq.f32.partialorder %v2074, 8.507059e+37
        %v2076 = vand.u32 %v2064, 2147483648
        %v2077 = vor.u32 1.1754944e-38, %v2076
        %v2078 = vsel %vm2075, %v2077, %v2073
        %v2079 = vmul.f32 1.0, %v2078
        %2080 = vmatpush.msra.mxu0 0.0
        %2081 = vmatpush.msra.mxu0 0.0
        %2082 = vmatpush.msra.mxu0 0.0
        %2083 = vmatpush.msra.mxu0 0.0
        %2084 = vmatpush.msra.mxu0 0.0
        %2085 = vmatpush.msra.mxu0 0.0
        %2086 = vmatpush.msra.mxu0 0.0
        %2087 = vmatpush.msra.mxu0 0.0
        %2088 = vmatpush.msra.mxu0 0.0
        %2089 = vmatpush.msra.mxu0 0.0
        %2090 = vmatpush.msra.mxu0 0.0
        %2091 = vmatpush.msra.mxu0 0.0
        %2092 = vmatpush.msra.mxu0 0.0
        %2093 = vmatpush.msra.mxu0 0.0
        %2094 = vmatpush.msra.mxu0 %v1259
        %2095 = vmatpush.msra.mxu0 %v1258
        %2096 = vmatmul.f32.gmra.mxu0 %v2038
        %v2097 = vpop.f32.mrf.mxu0
        %v2098 = vadd.f32 0.0, %v2097
        %2099 = vdwg.mxu0
        %v2100 = vadd.f32 %v1189, %v2098
        %v2101 = vxor.u32 %v2100, 2147483648
        %v2102 = vmul.f32 %v2101, 1.442695
        %v2103 = vpow.pop %v2102
        %v2104 = vadd.f32 %v2103, 1.0
        %v2105 = vrcp.pop %v2104
        %v2106 = vmul.f32 %v2104, %v2105
        %v2107 = vsub.f32 1.0, %v2106
        %v2108 = vmul.f32 %v2105, %v2107
        %v2109 = vadd.f32 %v2105, %v2108
        %vm2110 = vweird.f32 %v2104
        %vm2111 = vweird.f32 %v2105
        %vm2112 = vmor %vm2110, %vm2111
        %v2113 = vsel %vm2112, %v2105, %v2109
        %v2114 = vand.u32 2147483647, %v2104
        %vm2115 = vcmp.eq.f32.partialorder %v2114, 8.507059e+37
        %v2116 = vand.u32 %v2104, 2147483648
        %v2117 = vor.u32 1.1754944e-38, %v2116
        %v2118 = vsel %vm2115, %v2117, %v2113
        %v2119 = vmul.f32 1.0, %v2118
        %2120 = vmatpush.msra.mxu0 0.0
        %2121 = vmatpush.msra.mxu0 0.0
        %2122 = vmatpush.msra.mxu0 0.0
        %2123 = vmatpush.msra.mxu0 0.0
        %2124 = vmatpush.msra.mxu0 0.0
        %2125 = vmatpush.msra.mxu0 0.0
        %2126 = vmatpush.msra.mxu0 0.0
        %2127 = vmatpush.msra.mxu0 0.0
        %2128 = vmatpush.msra.mxu0 0.0
        %2129 = vmatpush.msra.mxu0 0.0
        %2130 = vmatpush.msra.mxu0 0.0
        %2131 = vmatpush.msra.mxu0 0.0
        %2132 = vmatpush.msra.mxu0 0.0
        %2133 = vmatpush.msra.mxu0 0.0
        %2134 = vmatpush.msra.mxu0 %v1261
        %2135 = vmatpush.msra.mxu0 %v1260
        %2136 = vmatmul.f32.gmra.mxu0 %v2038
        %v2137 = vpop.f32.mrf.mxu0
        %v2138 = vadd.f32 %v1458, %v2137
        %2139 = vdwg.mxu0
        %v2140 = vmul.f32 %v2079, %v2138
        %v2141 = vadd.f32 %v1238, %v2140
        %v2142 = vtanh.pop %v2141
        %v2143 = vsub.f32 1.0, %v2119
        %v2144 = vmul.f32 %v2143, %v2142
        %v2145 = vmul.f32 %v2119, %v1926
        %v2146 = vadd.f32 %v2144, %v2145
        %v2148 = vsel %vm1263, %v2036, 0
        %2150 = vmatpush.msra.mxu0 0.0
        %2151 = vmatpush.msra.mxu0 0.0
        %2152 = vmatpush.msra.mxu0 0.0
        %2153 = vmatpush.msra.mxu0 0.0
        %2154 = vmatpush.msra.mxu0 0.0
        %2155 = vmatpush.msra.mxu0 0.0
        %2156 = vmatpush.msra.mxu0 0.0
        %2157 = vmatpush.msra.mxu0 0.0
        %2158 = vmatpush.msra.mxu0 0.0
        %2159 = vmatpush.msra.mxu0 0.0
        %2160 = vmatpush.msra.mxu0 0.0
        %2161 = vmatpush.msra.mxu0 0.0
        %2162 = vmatpush.msra.mxu0 0.0
        %2163 = vmatpush.msra.mxu0 0.0
        %2164 = vmatpush.msra.mxu0 %v1250
        %2165 = vmatpush.msra.mxu0 %v1249
        %2166 = vmatmul.f32.gmra.mxu0 %v2148
        %v2167 = vpop.f32.mrf.mxu0
        %v2168 = vadd.f32 0.0, %v2167
        %2169 = vdwg.mxu0
        %v2170 = vadd.f32 %v993, %v2168
        %v2171 = vxor.u32 %v2170, 2147483648
        %v2172 = vmul.f32 %v2171, 1.442695
        %v2173 = vpow.pop %v2172
        %v2174 = vadd.f32 %v2173, 1.0
        %v2175 = vrcp.pop %v2174
        %v2176 = vmul.f32 %v2174, %v2175
        %v2177 = vsub.f32 1.0, %v2176
        %v2178 = vmul.f32 %v2175, %v2177
        %v2179 = vadd.f32 %v2175, %v2178
        %vm2180 = vweird.f32 %v2174
        %vm2181 = vweird.f32 %v2175
        %vm2182 = vmor %vm2180, %vm2181
        %v2183 = vsel %vm2182, %v2175, %v2179
        %v2184 = vand.u32 2147483647, %v2174
        %vm2185 = vcmp.eq.f32.partialorder %v2184, 8.507059e+37
        %v2186 = vand.u32 %v2174, 2147483648
        %v2187 = vor.u32 1.1754944e-38, %v2186
        %v2188 = vsel %vm2185, %v2187, %v2183
        %v2189 = vmul.f32 1.0, %v2188
        %2190 = vmatpush.msra.mxu0 0.0
        %2191 = vmatpush.msra.mxu0 0.0
        %2192 = vmatpush.msra.mxu0 0.0
        %2193 = vmatpush.msra.mxu0 0.0
        %2194 = vmatpush.msra.mxu0 0.0
        %2195 = vmatpush.msra.mxu0 0.0
        %2196 = vmatpush.msra.mxu0 0.0
        %2197 = vmatpush.msra.mxu0 0.0
        %2198 = vmatpush.msra.mxu0 0.0
        %2199 = vmatpush.msra.mxu0 0.0
        %2200 = vmatpush.msra.mxu0 0.0
        %2201 = vmatpush.msra.mxu0 0.0
        %2202 = vmatpush.msra.mxu0 0.0
        %2203 = vmatpush.msra.mxu0 0.0
        %2204 = vmatpush.msra.mxu0 %v1252
        %2205 = vmatpush.msra.mxu0 %v1251
        %2206 = vmatmul.f32.gmra.mxu0 %v2148
        %v2207 = vpop.f32.mrf.mxu0
        %v2208 = vadd.f32 0.0, %v2207
        %2209 = vdwg.mxu0
        %v2210 = vadd.f32 %v1042, %v2208
        %v2211 = vxor.u32 %v2210, 2147483648
        %v2212 = vmul.f32 %v2211, 1.442695
        %v2213 = vpow.pop %v2212
        %v2214 = vadd.f32 %v2213, 1.0
        %v2215 = vrcp.pop %v2214
        %v2216 = vmul.f32 %v2214, %v2215
        %v2217 = vsub.f32 1.0, %v2216
        %v2218 = vmul.f32 %v2215, %v2217
        %v2219 = vadd.f32 %v2215, %v2218
        %vm2220 = vweird.f32 %v2214
        %vm2221 = vweird.f32 %v2215
        %vm2222 = vmor %vm2220, %vm2221
        %v2223 = vsel %vm2222, %v2215, %v2219
        %v2224 = vand.u32 2147483647, %v2214
        %vm2225 = vcmp.eq.f32.partialorder %v2224, 8.507059e+37
        %v2226 = vand.u32 %v2214, 2147483648
        %v2227 = vor.u32 1.1754944e-38, %v2226
        %v2228 = vsel %vm2225, %v2227, %v2223
        %v2229 = vmul.f32 1.0, %v2228
        %2230 = vmatpush.msra.mxu0 0.0
        %2231 = vmatpush.msra.mxu0 0.0
        %2232 = vmatpush.msra.mxu0 0.0
        %2233 = vmatpush.msra.mxu0 0.0
        %2234 = vmatpush.msra.mxu0 0.0
        %2235 = vmatpush.msra.mxu0 0.0
        %2236 = vmatpush.msra.mxu0 0.0
        %2237 = vmatpush.msra.mxu0 0.0
        %2238 = vmatpush.msra.mxu0 0.0
        %2239 = vmatpush.msra.mxu0 0.0
        %2240 = vmatpush.msra.mxu0 0.0
        %2241 = vmatpush.msra.mxu0 0.0
        %2242 = vmatpush.msra.mxu0 0.0
        %2243 = vmatpush.msra.mxu0 0.0
        %2244 = vmatpush.msra.mxu0 %v1254
        %2245 = vmatpush.msra.mxu0 %v1253
        %2246 = vmatmul.f32.gmra.mxu0 %v2148
        %v2247 = vpop.f32.mrf.mxu0
        %v2248 = vadd.f32 %v1348, %v2247
        %2249 = vdwg.mxu0
        %v2250 = vmul.f32 %v2189, %v2248
        %v2251 = vadd.f32 %v1091, %v2250
        %v2252 = vtanh.pop %v2251
        %v2253 = vsub.f32 1.0, %v2229
        %v2254 = vmul.f32 %v2253, %v2252
        %v2255 = vmul.f32 %v2229, %v2036
        %v2256 = vadd.f32 %v2254, %v2255
        %v2258 = vsel %vm1263, %v2146, 0
        %2260 = vmatpush.msra.mxu0 0.0
        %2261 = vmatpush.msra.mxu0 0.0
        %2262 = vmatpush.msra.mxu0 0.0
        %2263 = vmatpush.msra.mxu0 0.0
        %2264 = vmatpush.msra.mxu0 0.0
        %2265 = vmatpush.msra.mxu0 0.0
        %2266 = vmatpush.msra.mxu0 0.0
        %2267 = vmatpush.msra.mxu0 0.0
        %2268 = vmatpush.msra.mxu0 0.0
        %2269 = vmatpush.msra.mxu0 0.0
        %2270 = vmatpush.msra.mxu0 0.0
        %2271 = vmatpush.msra.mxu0 0.0
        %2272 = vmatpush.msra.mxu0 0.0
        %2273 = vmatpush.msra.mxu0 0.0
        %2274 = vmatpush.msra.mxu0 %v1257
        %2275 = vmatpush.msra.mxu0 %v1256
        %2276 = vmatmul.f32.gmra.mxu0 %v2258
        %v2277 = vpop.f32.mrf.mxu0
        %v2278 = vadd.f32 0.0, %v2277
        %2279 = vdwg.mxu0
        %v2280 = vadd.f32 %v1137, %v2278
        %v2281 = vxor.u32 %v2280, 2147483648
        %v2282 = vmul.f32 %v2281, 1.442695
        %v2283 = vpow.pop %v2282
        %v2284 = vadd.f32 %v2283, 1.0
        %v2285 = vrcp.pop %v2284
        %v2286 = vmul.f32 %v2284, %v2285
        %v2287 = vsub.f32 1.0, %v2286
        %v2288 = vmul.f32 %v2285, %v2287
        %v2289 = vadd.f32 %v2285, %v2288
        %vm2290 = vweird.f32 %v2284
        %vm2291 = vweird.f32 %v2285
        %vm2292 = vmor %vm2290, %vm2291
        %v2293 = vsel %vm2292, %v2285, %v2289
        %v2294 = vand.u32 2147483647, %v2284
        %vm2295 = vcmp.eq.f32.partialorder %v2294, 8.507059e+37
        %v2296 = vand.u32 %v2284, 2147483648
        %v2297 = vor.u32 1.1754944e-38, %v2296
        %v2298 = vsel %vm2295, %v2297, %v2293
        %v2299 = vmul.f32 1.0, %v2298
        %2300 = vmatpush.msra.mxu0 0.0
        %2301 = vmatpush.msra.mxu0 0.0
        %2302 = vmatpush.msra.mxu0 0.0
        %2303 = vmatpush.msra.mxu0 0.0
        %2304 = vmatpush.msra.mxu0 0.0
        %2305 = vmatpush.msra.mxu0 0.0
        %2306 = vmatpush.msra.mxu0 0.0
        %2307 = vmatpush.msra.mxu0 0.0
        %2308 = vmatpush.msra.mxu0 0.0
        %2309 = vmatpush.msra.mxu0 0.0
        %2310 = vmatpush.msra.mxu0 0.0
        %2311 = vmatpush.msra.mxu0 0.0
        %2312 = vmatpush.msra.mxu0 0.0
        %2313 = vmatpush.msra.mxu0 0.0
        %2314 = vmatpush.msra.mxu0 %v1259
        %2315 = vmatpush.msra.mxu0 %v1258
        %2316 = vmatmul.f32.gmra.mxu0 %v2258
        %v2317 = vpop.f32.mrf.mxu0
        %v2318 = vadd.f32 0.0, %v2317
        %2319 = vdwg.mxu0
        %v2320 = vadd.f32 %v1186, %v2318
        %v2321 = vxor.u32 %v2320, 2147483648
        %v2322 = vmul.f32 %v2321, 1.442695
        %v2323 = vpow.pop %v2322
        %v2324 = vadd.f32 %v2323, 1.0
        %v2325 = vrcp.pop %v2324
        %v2326 = vmul.f32 %v2324, %v2325
        %v2327 = vsub.f32 1.0, %v2326
        %v2328 = vmul.f32 %v2325, %v2327
        %v2329 = vadd.f32 %v2325, %v2328
        %vm2330 = vweird.f32 %v2324
        %vm2331 = vweird.f32 %v2325
        %vm2332 = vmor %vm2330, %vm2331
        %v2333 = vsel %vm2332, %v2325, %v2329
        %v2334 = vand.u32 2147483647, %v2324
        %vm2335 = vcmp.eq.f32.partialorder %v2334, 8.507059e+37
        %v2336 = vand.u32 %v2324, 2147483648
        %v2337 = vor.u32 1.1754944e-38, %v2336
        %v2338 = vsel %vm2335, %v2337, %v2333
        %v2339 = vmul.f32 1.0, %v2338
        %2340 = vmatpush.msra.mxu0 0.0
        %2341 = vmatpush.msra.mxu0 0.0
        %2342 = vmatpush.msra.mxu0 0.0
        %2343 = vmatpush.msra.mxu0 0.0
        %2344 = vmatpush.msra.mxu0 0.0
        %2345 = vmatpush.msra.mxu0 0.0
        %2346 = vmatpush.msra.mxu0 0.0
        %2347 = vmatpush.msra.mxu0 0.0
        %2348 = vmatpush.msra.mxu0 0.0
        %2349 = vmatpush.msra.mxu0 0.0
        %2350 = vmatpush.msra.mxu0 0.0
        %2351 = vmatpush.msra.mxu0 0.0
        %2352 = vmatpush.msra.mxu0 0.0
        %2353 = vmatpush.msra.mxu0 0.0
        %2354 = vmatpush.msra.mxu0 %v1261
        %2355 = vmatpush.msra.mxu0 %v1260
        %2356 = vmatmul.f32.gmra.mxu0 %v2258
        %v2357 = vpop.f32.mrf.mxu0
        %v2358 = vadd.f32 %v1458, %v2357
        %2359 = vdwg.mxu0
        %v2360 = vmul.f32 %v2299, %v2358
        %v2361 = vadd.f32 %v1235, %v2360
        %v2362 = vtanh.pop %v2361
        %v2363 = vsub.f32 1.0, %v2339
        %v2364 = vmul.f32 %v2363, %v2362
        %v2365 = vmul.f32 %v2339, %v2146
        %v2366 = vadd.f32 %v2364, %v2365
        %v2368 = vsel %vm1263, %v2256, 0
        %2370 = vmatpush.msra.mxu0 0.0
        %2371 = vmatpush.msra.mxu0 0.0
        %2372 = vmatpush.msra.mxu0 0.0
        %2373 = vmatpush.msra.mxu0 0.0
        %2374 = vmatpush.msra.mxu0 0.0
        %2375 = vmatpush.msra.mxu0 0.0
        %2376 = vmatpush.msra.mxu0 0.0
        %2377 = vmatpush.msra.mxu0 0.0
        %2378 = vmatpush.msra.mxu0 0.0
        %2379 = vmatpush.msra.mxu0 0.0
        %2380 = vmatpush.msra.mxu0 0.0
        %2381 = vmatpush.msra.mxu0 0.0
        %2382 = vmatpush.msra.mxu0 0.0
        %2383 = vmatpush.msra.mxu0 0.0
        %2384 = vmatpush.msra.mxu0 %v1250
        %2385 = vmatpush.msra.mxu0 %v1249
        %2386 = vmatmul.f32.gmra.mxu0 %v2368
        %v2387 = vpop.f32.mrf.mxu0
        %v2388 = vadd.f32 0.0, %v2387
        %2389 = vdwg.mxu0
        %v2390 = vadd.f32 %v996, %v2388
        %v2391 = vxor.u32 %v2390, 2147483648
        %v2392 = vmul.f32 %v2391, 1.442695
        %v2393 = vpow.pop %v2392
        %v2394 = vadd.f32 %v2393, 1.0
        %v2395 = vrcp.pop %v2394
        %v2396 = vmul.f32 %v2394, %v2395
        %v2397 = vsub.f32 1.0, %v2396
        %v2398 = vmul.f32 %v2395, %v2397
        %v2399 = vadd.f32 %v2395, %v2398
        %vm2400 = vweird.f32 %v2394
        %vm2401 = vweird.f32 %v2395
        %vm2402 = vmor %vm2400, %vm2401
        %v2403 = vsel %vm2402, %v2395, %v2399
        %v2404 = vand.u32 2147483647, %v2394
        %vm2405 = vcmp.eq.f32.partialorder %v2404, 8.507059e+37
        %v2406 = vand.u32 %v2394, 2147483648
        %v2407 = vor.u32 1.1754944e-38, %v2406
        %v2408 = vsel %vm2405, %v2407, %v2403
        %v2409 = vmul.f32 1.0, %v2408
        %2410 = vmatpush.msra.mxu0 0.0
        %2411 = vmatpush.msra.mxu0 0.0
        %2412 = vmatpush.msra.mxu0 0.0
        %2413 = vmatpush.msra.mxu0 0.0
        %2414 = vmatpush.msra.mxu0 0.0
        %2415 = vmatpush.msra.mxu0 0.0
        %2416 = vmatpush.msra.mxu0 0.0
        %2417 = vmatpush.msra.mxu0 0.0
        %2418 = vmatpush.msra.mxu0 0.0
        %2419 = vmatpush.msra.mxu0 0.0
        %2420 = vmatpush.msra.mxu0 0.0
        %2421 = vmatpush.msra.mxu0 0.0
        %2422 = vmatpush.msra.mxu0 0.0
        %2423 = vmatpush.msra.mxu0 0.0
        %2424 = vmatpush.msra.mxu0 %v1252
        %2425 = vmatpush.msra.mxu0 %v1251
        %2426 = vmatmul.f32.gmra.mxu0 %v2368
        %v2427 = vpop.f32.mrf.mxu0
        %v2428 = vadd.f32 0.0, %v2427
        %2429 = vdwg.mxu0
        %v2430 = vadd.f32 %v1045, %v2428
        %v2431 = vxor.u32 %v2430, 2147483648
        %v2432 = vmul.f32 %v2431, 1.442695
        %v2433 = vpow.pop %v2432
        %v2434 = vadd.f32 %v2433, 1.0
        %v2435 = vrcp.pop %v2434
        %v2436 = vmul.f32 %v2434, %v2435
        %v2437 = vsub.f32 1.0, %v2436
        %v2438 = vmul.f32 %v2435, %v2437
        %v2439 = vadd.f32 %v2435, %v2438
        %vm2440 = vweird.f32 %v2434
        %vm2441 = vweird.f32 %v2435
        %vm2442 = vmor %vm2440, %vm2441
        %v2443 = vsel %vm2442, %v2435, %v2439
        %v2444 = vand.u32 2147483647, %v2434
        %vm2445 = vcmp.eq.f32.partialorder %v2444, 8.507059e+37
        %v2446 = vand.u32 %v2434, 2147483648
        %v2447 = vor.u32 1.1754944e-38, %v2446
        %v2448 = vsel %vm2445, %v2447, %v2443
        %v2449 = vmul.f32 1.0, %v2448
        %2450 = vmatpush.msra.mxu0 0.0
        %2451 = vmatpush.msra.mxu0 0.0
        %2452 = vmatpush.msra.mxu0 0.0
        %2453 = vmatpush.msra.mxu0 0.0
        %2454 = vmatpush.msra.mxu0 0.0
        %2455 = vmatpush.msra.mxu0 0.0
        %2456 = vmatpush.msra.mxu0 0.0
        %2457 = vmatpush.msra.mxu0 0.0
        %2458 = vmatpush.msra.mxu0 0.0
        %2459 = vmatpush.msra.mxu0 0.0
        %2460 = vmatpush.msra.mxu0 0.0
        %2461 = vmatpush.msra.mxu0 0.0
        %2462 = vmatpush.msra.mxu0 0.0
        %2463 = vmatpush.msra.mxu0 0.0
        %2464 = vmatpush.msra.mxu0 %v1254
        %2465 = vmatpush.msra.mxu0 %v1253
        %2466 = vmatmul.f32.gmra.mxu0 %v2368
        %v2467 = vpop.f32.mrf.mxu0
        %v2468 = vadd.f32 %v1348, %v2467
        %2469 = vdwg.mxu0
        %v2470 = vmul.f32 %v2409, %v2468
        %v2471 = vadd.f32 %v1094, %v2470
        %v2472 = vtanh.pop %v2471
        %v2473 = vsub.f32 1.0, %v2449
        %v2474 = vmul.f32 %v2473, %v2472
        %v2475 = vmul.f32 %v2449, %v2256
        %v2476 = vadd.f32 %v2474, %v2475
        %v2478 = vsel %vm1263, %v2366, 0
        %2480 = vmatpush.msra.mxu0 0.0
        %2481 = vmatpush.msra.mxu0 0.0
        %2482 = vmatpush.msra.mxu0 0.0
        %2483 = vmatpush.msra.mxu0 0.0
        %2484 = vmatpush.msra.mxu0 0.0
        %2485 = vmatpush.msra.mxu0 0.0
        %2486 = vmatpush.msra.mxu0 0.0
        %2487 = vmatpush.msra.mxu0 0.0
        %2488 = vmatpush.msra.mxu0 0.0
        %2489 = vmatpush.msra.mxu0 0.0
        %2490 = vmatpush.msra.mxu0 0.0
        %2491 = vmatpush.msra.mxu0 0.0
        %2492 = vmatpush.msra.mxu0 0.0
        %2493 = vmatpush.msra.mxu0 0.0
        %2494 = vmatpush.msra.mxu0 %v1257
        %2495 = vmatpush.msra.mxu0 %v1256
        %2496 = vmatmul.f32.gmra.mxu0 %v2478
        %v2497 = vpop.f32.mrf.mxu0
        %v2498 = vadd.f32 0.0, %v2497
        %2499 = vdwg.mxu0
        %v2500 = vadd.f32 %v1134, %v2498
        %v2501 = vxor.u32 %v2500, 2147483648
        %v2502 = vmul.f32 %v2501, 1.442695
        %v2503 = vpow.pop %v2502
        %v2504 = vadd.f32 %v2503, 1.0
        %v2505 = vrcp.pop %v2504
        %v2506 = vmul.f32 %v2504, %v2505
        %v2507 = vsub.f32 1.0, %v2506
        %v2508 = vmul.f32 %v2505, %v2507
        %v2509 = vadd.f32 %v2505, %v2508
        %vm2510 = vweird.f32 %v2504
        %vm2511 = vweird.f32 %v2505
        %vm2512 = vmor %vm2510, %vm2511
        %v2513 = vsel %vm2512, %v2505, %v2509
        %v2514 = vand.u32 2147483647, %v2504
        %vm2515 = vcmp.eq.f32.partialorder %v2514, 8.507059e+37
        %v2516 = vand.u32 %v2504, 2147483648
        %v2517 = vor.u32 1.1754944e-38, %v2516
        %v2518 = vsel %vm2515, %v2517, %v2513
        %v2519 = vmul.f32 1.0, %v2518
        %2520 = vmatpush.msra.mxu0 0.0
        %2521 = vmatpush.msra.mxu0 0.0
        %2522 = vmatpush.msra.mxu0 0.0
        %2523 = vmatpush.msra.mxu0 0.0
        %2524 = vmatpush.msra.mxu0 0.0
        %2525 = vmatpush.msra.mxu0 0.0
        %2526 = vmatpush.msra.mxu0 0.0
        %2527 = vmatpush.msra.mxu0 0.0
        %2528 = vmatpush.msra.mxu0 0.0
        %2529 = vmatpush.msra.mxu0 0.0
        %2530 = vmatpush.msra.mxu0 0.0
        %2531 = vmatpush.msra.mxu0 0.0
        %2532 = vmatpush.msra.mxu0 0.0
        %2533 = vmatpush.msra.mxu0 0.0
        %2534 = vmatpush.msra.mxu0 %v1259
        %2535 = vmatpush.msra.mxu0 %v1258
        %2536 = vmatmul.f32.gmra.mxu0 %v2478
        %v2537 = vpop.f32.mrf.mxu0
        %v2538 = vadd.f32 0.0, %v2537
        %2539 = vdwg.mxu0
        %v2540 = vadd.f32 %v1183, %v2538
        %v2541 = vxor.u32 %v2540, 2147483648
        %v2542 = vmul.f32 %v2541, 1.442695
        %v2543 = vpow.pop %v2542
        %v2544 = vadd.f32 %v2543, 1.0
        %v2545 = vrcp.pop %v2544
        %v2546 = vmul.f32 %v2544, %v2545
        %v2547 = vsub.f32 1.0, %v2546
        %v2548 = vmul.f32 %v2545, %v2547
        %v2549 = vadd.f32 %v2545, %v2548
        %vm2550 = vweird.f32 %v2544
        %vm2551 = vweird.f32 %v2545
        %vm2552 = vmor %vm2550, %vm2551
        %v2553 = vsel %vm2552, %v2545, %v2549
        %v2554 = vand.u32 2147483647, %v2544
        %vm2555 = vcmp.eq.f32.partialorder %v2554, 8.507059e+37
        %v2556 = vand.u32 %v2544, 2147483648
        %v2557 = vor.u32 1.1754944e-38, %v2556
        %v2558 = vsel %vm2555, %v2557, %v2553
        %v2559 = vmul.f32 1.0, %v2558
        %2560 = vmatpush.msra.mxu0 0.0
        %2561 = vmatpush.msra.mxu0 0.0
        %2562 = vmatpush.msra.mxu0 0.0
        %2563 = vmatpush.msra.mxu0 0.0
        %2564 = vmatpush.msra.mxu0 0.0
        %2565 = vmatpush.msra.mxu0 0.0
        %2566 = vmatpush.msra.mxu0 0.0
        %2567 = vmatpush.msra.mxu0 0.0
        %2568 = vmatpush.msra.mxu0 0.0
        %2569 = vmatpush.msra.mxu0 0.0
        %2570 = vmatpush.msra.mxu0 0.0
        %2571 = vmatpush.msra.mxu0 0.0
        %2572 = vmatpush.msra.mxu0 0.0
        %2573 = vmatpush.msra.mxu0 0.0
        %2574 = vmatpush.msra.mxu0 %v1261
        %2575 = vmatpush.msra.mxu0 %v1260
        %2576 = vmatmul.f32.gmra.mxu0 %v2478
        %v2577 = vpop.f32.mrf.mxu0
        %v2578 = vadd.f32 %v1458, %v2577
        %2579 = vdwg.mxu0
        %v2580 = vmul.f32 %v2519, %v2578
        %v2581 = vadd.f32 %v1232, %v2580
        %v2582 = vtanh.pop %v2581
        %v2583 = vsub.f32 1.0, %v2559
        %v2584 = vmul.f32 %v2583, %v2582
        %v2585 = vmul.f32 %v2559, %v2366
        %v2586 = vadd.f32 %v2584, %v2585
        %v2588 = vsel %vm1263, %v2476, 0
        %2590 = vmatpush.msra.mxu0 0.0
        %2591 = vmatpush.msra.mxu0 0.0
        %2592 = vmatpush.msra.mxu0 0.0
        %2593 = vmatpush.msra.mxu0 0.0
        %2594 = vmatpush.msra.mxu0 0.0
        %2595 = vmatpush.msra.mxu0 0.0
        %2596 = vmatpush.msra.mxu0 0.0
        %2597 = vmatpush.msra.mxu0 0.0
        %2598 = vmatpush.msra.mxu0 0.0
        %2599 = vmatpush.msra.mxu0 0.0
        %2600 = vmatpush.msra.mxu0 0.0
        %2601 = vmatpush.msra.mxu0 0.0
        %2602 = vmatpush.msra.mxu0 0.0
        %2603 = vmatpush.msra.mxu0 0.0
        %2604 = vmatpush.msra.mxu0 %v1250
        %2605 = vmatpush.msra.mxu0 %v1249
        %2606 = vmatmul.f32.gmra.mxu0 %v2588
        %v2607 = vpop.f32.mrf.mxu0
        %v2608 = vadd.f32 0.0, %v2607
        %2609 = vdwg.mxu0
        %v2610 = vadd.f32 %v999, %v2608
        %v2611 = vxor.u32 %v2610, 2147483648
        %v2612 = vmul.f32 %v2611, 1.442695
        %v2613 = vpow.pop %v2612
        %v2614 = vadd.f32 %v2613, 1.0
        %v2615 = vrcp.pop %v2614
        %v2616 = vmul.f32 %v2614, %v2615
        %v2617 = vsub.f32 1.0, %v2616
        %v2618 = vmul.f32 %v2615, %v2617
        %v2619 = vadd.f32 %v2615, %v2618
        %vm2620 = vweird.f32 %v2614
        %vm2621 = vweird.f32 %v2615
        %vm2622 = vmor %vm2620, %vm2621
        %v2623 = vsel %vm2622, %v2615, %v2619
        %v2624 = vand.u32 2147483647, %v2614
        %vm2625 = vcmp.eq.f32.partialorder %v2624, 8.507059e+37
        %v2626 = vand.u32 %v2614, 2147483648
        %v2627 = vor.u32 1.1754944e-38, %v2626
        %v2628 = vsel %vm2625, %v2627, %v2623
        %v2629 = vmul.f32 1.0, %v2628
        %2630 = vmatpush.msra.mxu0 0.0
        %2631 = vmatpush.msra.mxu0 0.0
        %2632 = vmatpush.msra.mxu0 0.0
        %2633 = vmatpush.msra.mxu0 0.0
        %2634 = vmatpush.msra.mxu0 0.0
        %2635 = vmatpush.msra.mxu0 0.0
        %2636 = vmatpush.msra.mxu0 0.0
        %2637 = vmatpush.msra.mxu0 0.0
        %2638 = vmatpush.msra.mxu0 0.0
        %2639 = vmatpush.msra.mxu0 0.0
        %2640 = vmatpush.msra.mxu0 0.0
        %2641 = vmatpush.msra.mxu0 0.0
        %2642 = vmatpush.msra.mxu0 0.0
        %2643 = vmatpush.msra.mxu0 0.0
        %2644 = vmatpush.msra.mxu0 %v1252
        %2645 = vmatpush.msra.mxu0 %v1251
        %2646 = vmatmul.f32.gmra.mxu0 %v2588
        %v2647 = vpop.f32.mrf.mxu0
        %v2648 = vadd.f32 0.0, %v2647
        %2649 = vdwg.mxu0
        %v2650 = vadd.f32 %v1048, %v2648
        %v2651 = vxor.u32 %v2650, 2147483648
        %v2652 = vmul.f32 %v2651, 1.442695
        %v2653 = vpow.pop %v2652
        %v2654 = vadd.f32 %v2653, 1.0
        %v2655 = vrcp.pop %v2654
        %v2656 = vmul.f32 %v2654, %v2655
        %v2657 = vsub.f32 1.0, %v2656
        %v2658 = vmul.f32 %v2655, %v2657
        %v2659 = vadd.f32 %v2655, %v2658
        %vm2660 = vweird.f32 %v2654
        %vm2661 = vweird.f32 %v2655
        %vm2662 = vmor %vm2660, %vm2661
        %v2663 = vsel %vm2662, %v2655, %v2659
        %v2664 = vand.u32 2147483647, %v2654
        %vm2665 = vcmp.eq.f32.partialorder %v2664, 8.507059e+37
        %v2666 = vand.u32 %v2654, 2147483648
        %v2667 = vor.u32 1.1754944e-38, %v2666
        %v2668 = vsel %vm2665, %v2667, %v2663
        %v2669 = vmul.f32 1.0, %v2668
        %2670 = vmatpush.msra.mxu0 0.0
        %2671 = vmatpush.msra.mxu0 0.0
        %2672 = vmatpush.msra.mxu0 0.0
        %2673 = vmatpush.msra.mxu0 0.0
        %2674 = vmatpush.msra.mxu0 0.0
        %2675 = vmatpush.msra.mxu0 0.0
        %2676 = vmatpush.msra.mxu0 0.0
        %2677 = vmatpush.msra.mxu0 0.0
        %2678 = vmatpush.msra.mxu0 0.0
        %2679 = vmatpush.msra.mxu0 0.0
        %2680 = vmatpush.msra.mxu0 0.0
        %2681 = vmatpush.msra.mxu0 0.0
        %2682 = vmatpush.msra.mxu0 0.0
        %2683 = vmatpush.msra.mxu0 0.0
        %2684 = vmatpush.msra.mxu0 %v1254
        %2685 = vmatpush.msra.mxu0 %v1253
        %2686 = vmatmul.f32.gmra.mxu0 %v2588
        %v2687 = vpop.f32.mrf.mxu0
        %v2688 = vadd.f32 %v1348, %v2687
        %2689 = vdwg.mxu0
        %v2690 = vmul.f32 %v2629, %v2688
        %v2691 = vadd.f32 %v1097, %v2690
        %v2692 = vtanh.pop %v2691
        %v2693 = vsub.f32 1.0, %v2669
        %v2694 = vmul.f32 %v2693, %v2692
        %v2695 = vmul.f32 %v2669, %v2476
        %v2696 = vadd.f32 %v2694, %v2695
        %v2698 = vsel %vm1263, %v2586, 0
        %2700 = vmatpush.msra.mxu0 0.0
        %2701 = vmatpush.msra.mxu0 0.0
        %2702 = vmatpush.msra.mxu0 0.0
        %2703 = vmatpush.msra.mxu0 0.0
        %2704 = vmatpush.msra.mxu0 0.0
        %2705 = vmatpush.msra.mxu0 0.0
        %2706 = vmatpush.msra.mxu0 0.0
        %2707 = vmatpush.msra.mxu0 0.0
        %2708 = vmatpush.msra.mxu0 0.0
        %2709 = vmatpush.msra.mxu0 0.0
        %2710 = vmatpush.msra.mxu0 0.0
        %2711 = vmatpush.msra.mxu0 0.0
        %2712 = vmatpush.msra.mxu0 0.0
        %2713 = vmatpush.msra.mxu0 0.0
        %2714 = vmatpush.msra.mxu0 %v1257
        %2715 = vmatpush.msra.mxu0 %v1256
        %2716 = vmatmul.f32.gmra.mxu0 %v2698
        %v2717 = vpop.f32.mrf.mxu0
        %v2718 = vadd.f32 0.0, %v2717
        %2719 = vdwg.mxu0
        %v2720 = vadd.f32 %v1131, %v2718
        %v2721 = vxor.u32 %v2720, 2147483648
        %v2722 = vmul.f32 %v2721, 1.442695
        %v2723 = vpow.pop %v2722
        %v2724 = vadd.f32 %v2723, 1.0
        %v2725 = vrcp.pop %v2724
        %v2726 = vmul.f32 %v2724, %v2725
        %v2727 = vsub.f32 1.0, %v2726
        %v2728 = vmul.f32 %v2725, %v2727
        %v2729 = vadd.f32 %v2725, %v2728
        %vm2730 = vweird.f32 %v2724
        %vm2731 = vweird.f32 %v2725
        %vm2732 = vmor %vm2730, %vm2731
        %v2733 = vsel %vm2732, %v2725, %v2729
        %v2734 = vand.u32 2147483647, %v2724
        %vm2735 = vcmp.eq.f32.partialorder %v2734, 8.507059e+37
        %v2736 = vand.u32 %v2724, 2147483648
        %v2737 = vor.u32 1.1754944e-38, %v2736
        %v2738 = vsel %vm2735, %v2737, %v2733
        %v2739 = vmul.f32 1.0, %v2738
        %2740 = vmatpush.msra.mxu0 0.0
        %2741 = vmatpush.msra.mxu0 0.0
        %2742 = vmatpush.msra.mxu0 0.0
        %2743 = vmatpush.msra.mxu0 0.0
        %2744 = vmatpush.msra.mxu0 0.0
        %2745 = vmatpush.msra.mxu0 0.0
        %2746 = vmatpush.msra.mxu0 0.0
        %2747 = vmatpush.msra.mxu0 0.0
        %2748 = vmatpush.msra.mxu0 0.0
        %2749 = vmatpush.msra.mxu0 0.0
        %2750 = vmatpush.msra.mxu0 0.0
        %2751 = vmatpush.msra.mxu0 0.0
        %2752 = vmatpush.msra.mxu0 0.0
        %2753 = vmatpush.msra.mxu0 0.0
        %2754 = vmatpush.msra.mxu0 %v1259
        %2755 = vmatpush.msra.mxu0 %v1258
        %2756 = vmatmul.f32.gmra.mxu0 %v2698
        %v2757 = vpop.f32.mrf.mxu0
        %v2758 = vadd.f32 0.0, %v2757
        %2759 = vdwg.mxu0
        %v2760 = vadd.f32 %v1180, %v2758
        %v2761 = vxor.u32 %v2760, 2147483648
        %v2762 = vmul.f32 %v2761, 1.442695
        %v2763 = vpow.pop %v2762
        %v2764 = vadd.f32 %v2763, 1.0
        %v2765 = vrcp.pop %v2764
        %v2766 = vmul.f32 %v2764, %v2765
        %v2767 = vsub.f32 1.0, %v2766
        %v2768 = vmul.f32 %v2765, %v2767
        %v2769 = vadd.f32 %v2765, %v2768
        %vm2770 = vweird.f32 %v2764
        %vm2771 = vweird.f32 %v2765
        %vm2772 = vmor %vm2770, %vm2771
        %v2773 = vsel %vm2772, %v2765, %v2769
        %v2774 = vand.u32 2147483647, %v2764
        %vm2775 = vcmp.eq.f32.partialorder %v2774, 8.507059e+37
        %v2776 = vand.u32 %v2764, 2147483648
        %v2777 = vor.u32 1.1754944e-38, %v2776
        %v2778 = vsel %vm2775, %v2777, %v2773
        %v2779 = vmul.f32 1.0, %v2778
        %2780 = vmatpush.msra.mxu0 0.0
        %2781 = vmatpush.msra.mxu0 0.0
        %2782 = vmatpush.msra.mxu0 0.0
        %2783 = vmatpush.msra.mxu0 0.0
        %2784 = vmatpush.msra.mxu0 0.0
        %2785 = vmatpush.msra.mxu0 0.0
        %2786 = vmatpush.msra.mxu0 0.0
        %2787 = vmatpush.msra.mxu0 0.0
        %2788 = vmatpush.msra.mxu0 0.0
        %2789 = vmatpush.msra.mxu0 0.0
        %2790 = vmatpush.msra.mxu0 0.0
        %2791 = vmatpush.msra.mxu0 0.0
        %2792 = vmatpush.msra.mxu0 0.0
        %2793 = vmatpush.msra.mxu0 0.0
        %2794 = vmatpush.msra.mxu0 %v1261
        %2795 = vmatpush.msra.mxu0 %v1260
        %2796 = vmatmul.f32.gmra.mxu0 %v2698
        %v2797 = vpop.f32.mrf.mxu0
        %v2798 = vadd.f32 %v1458, %v2797
        %2799 = vdwg.mxu0
        %v2800 = vmul.f32 %v2739, %v2798
        %v2801 = vadd.f32 %v1229, %v2800
        %v2802 = vtanh.pop %v2801
        %v2803 = vsub.f32 1.0, %v2779
        %v2804 = vmul.f32 %v2803, %v2802
        %v2805 = vmul.f32 %v2779, %v2586
        %v2806 = vadd.f32 %v2804, %v2805
        %v2808 = vsel %vm1263, %v2696, 0
        %2810 = vmatpush.msra.mxu0 0.0
        %2811 = vmatpush.msra.mxu0 0.0
        %2812 = vmatpush.msra.mxu0 0.0
        %2813 = vmatpush.msra.mxu0 0.0
        %2814 = vmatpush.msra.mxu0 0.0
        %2815 = vmatpush.msra.mxu0 0.0
        %2816 = vmatpush.msra.mxu0 0.0
        %2817 = vmatpush.msra.mxu0 0.0
        %2818 = vmatpush.msra.mxu0 0.0
        %2819 = vmatpush.msra.mxu0 0.0
        %2820 = vmatpush.msra.mxu0 0.0
        %2821 = vmatpush.msra.mxu0 0.0
        %2822 = vmatpush.msra.mxu0 0.0
        %2823 = vmatpush.msra.mxu0 0.0
        %2824 = vmatpush.msra.mxu0 %v1250
        %2825 = vmatpush.msra.mxu0 %v1249
        %2826 = vmatmul.f32.gmra.mxu0 %v2808
        %v2827 = vpop.f32.mrf.mxu0
        %v2828 = vadd.f32 0.0, %v2827
        %2829 = vdwg.mxu0
        %v2830 = vadd.f32 %v1002, %v2828
        %v2831 = vxor.u32 %v2830, 2147483648
        %v2832 = vmul.f32 %v2831, 1.442695
        %v2833 = vpow.pop %v2832
        %v2834 = vadd.f32 %v2833, 1.0
        %v2835 = vrcp.pop %v2834
        %v2836 = vmul.f32 %v2834, %v2835
        %v2837 = vsub.f32 1.0, %v2836
        %v2838 = vmul.f32 %v2835, %v2837
        %v2839 = vadd.f32 %v2835, %v2838
        %vm2840 = vweird.f32 %v2834
        %vm2841 = vweird.f32 %v2835
        %vm2842 = vmor %vm2840, %vm2841
        %v2843 = vsel %vm2842, %v2835, %v2839
        %v2844 = vand.u32 2147483647, %v2834
        %vm2845 = vcmp.eq.f32.partialorder %v2844, 8.507059e+37
        %v2846 = vand.u32 %v2834, 2147483648
        %v2847 = vor.u32 1.1754944e-38, %v2846
        %v2848 = vsel %vm2845, %v2847, %v2843
        %v2849 = vmul.f32 1.0, %v2848
        %2850 = vmatpush.msra.mxu0 0.0
        %2851 = vmatpush.msra.mxu0 0.0
        %2852 = vmatpush.msra.mxu0 0.0
        %2853 = vmatpush.msra.mxu0 0.0
        %2854 = vmatpush.msra.mxu0 0.0
        %2855 = vmatpush.msra.mxu0 0.0
        %2856 = vmatpush.msra.mxu0 0.0
        %2857 = vmatpush.msra.mxu0 0.0
        %2858 = vmatpush.msra.mxu0 0.0
        %2859 = vmatpush.msra.mxu0 0.0
        %2860 = vmatpush.msra.mxu0 0.0
        %2861 = vmatpush.msra.mxu0 0.0
        %2862 = vmatpush.msra.mxu0 0.0
        %2863 = vmatpush.msra.mxu0 0.0
        %2864 = vmatpush.msra.mxu0 %v1252
        %2865 = vmatpush.msra.mxu0 %v1251
        %2866 = vmatmul.f32.gmra.mxu0 %v2808
        %v2867 = vpop.f32.mrf.mxu0
        %v2868 = vadd.f32 0.0, %v2867
        %2869 = vdwg.mxu0
        %v2870 = vadd.f32 %v1051, %v2868
        %v2871 = vxor.u32 %v2870, 2147483648
        %v2872 = vmul.f32 %v2871, 1.442695
        %v2873 = vpow.pop %v2872
        %v2874 = vadd.f32 %v2873, 1.0
        %v2875 = vrcp.pop %v2874
        %v2876 = vmul.f32 %v2874, %v2875
        %v2877 = vsub.f32 1.0, %v2876
        %v2878 = vmul.f32 %v2875, %v2877
        %v2879 = vadd.f32 %v2875, %v2878
        %vm2880 = vweird.f32 %v2874
        %vm2881 = vweird.f32 %v2875
        %vm2882 = vmor %vm2880, %vm2881
        %v2883 = vsel %vm2882, %v2875, %v2879
        %v2884 = vand.u32 2147483647, %v2874
        %vm2885 = vcmp.eq.f32.partialorder %v2884, 8.507059e+37
        %v2886 = vand.u32 %v2874, 2147483648
        %v2887 = vor.u32 1.1754944e-38, %v2886
        %v2888 = vsel %vm2885, %v2887, %v2883
        %v2889 = vmul.f32 1.0, %v2888
        %2890 = vmatpush.msra.mxu0 0.0
        %2891 = vmatpush.msra.mxu0 0.0
        %2892 = vmatpush.msra.mxu0 0.0
        %2893 = vmatpush.msra.mxu0 0.0
        %2894 = vmatpush.msra.mxu0 0.0
        %2895 = vmatpush.msra.mxu0 0.0
        %2896 = vmatpush.msra.mxu0 0.0
        %2897 = vmatpush.msra.mxu0 0.0
        %2898 = vmatpush.msra.mxu0 0.0
        %2899 = vmatpush.msra.mxu0 0.0
        %2900 = vmatpush.msra.mxu0 0.0
        %2901 = vmatpush.msra.mxu0 0.0
        %2902 = vmatpush.msra.mxu0 0.0
        %2903 = vmatpush.msra.mxu0 0.0
        %2904 = vmatpush.msra.mxu0 %v1254
        %2905 = vmatpush.msra.mxu0 %v1253
        %2906 = vmatmul.f32.gmra.mxu0 %v2808
        %v2907 = vpop.f32.mrf.mxu0
        %v2908 = vadd.f32 %v1348, %v2907
        %2909 = vdwg.mxu0
        %v2910 = vmul.f32 %v2849, %v2908
        %v2911 = vadd.f32 %v1100, %v2910
        %v2912 = vtanh.pop %v2911
        %v2913 = vsub.f32 1.0, %v2889
        %v2914 = vmul.f32 %v2913, %v2912
        %v2915 = vmul.f32 %v2889, %v2696
        %v2916 = vadd.f32 %v2914, %v2915
        %v2918 = vsel %vm1263, %v2806, 0
        %2920 = vmatpush.msra.mxu0 0.0
        %2921 = vmatpush.msra.mxu0 0.0
        %2922 = vmatpush.msra.mxu0 0.0
        %2923 = vmatpush.msra.mxu0 0.0
        %2924 = vmatpush.msra.mxu0 0.0
        %2925 = vmatpush.msra.mxu0 0.0
        %2926 = vmatpush.msra.mxu0 0.0
        %2927 = vmatpush.msra.mxu0 0.0
        %2928 = vmatpush.msra.mxu0 0.0
        %2929 = vmatpush.msra.mxu0 0.0
        %2930 = vmatpush.msra.mxu0 0.0
        %2931 = vmatpush.msra.mxu0 0.0
        %2932 = vmatpush.msra.mxu0 0.0
        %2933 = vmatpush.msra.mxu0 0.0
        %2934 = vmatpush.msra.mxu0 %v1257
        %2935 = vmatpush.msra.mxu0 %v1256
        %2936 = vmatmul.f32.gmra.mxu0 %v2918
        %v2937 = vpop.f32.mrf.mxu0
        %v2938 = vadd.f32 0.0, %v2937
        %2939 = vdwg.mxu0
        %v2940 = vadd.f32 %v1128, %v2938
        %v2941 = vxor.u32 %v2940, 2147483648
        %v2942 = vmul.f32 %v2941, 1.442695
        %v2943 = vpow.pop %v2942
        %v2944 = vadd.f32 %v2943, 1.0
        %v2945 = vrcp.pop %v2944
        %v2946 = vmul.f32 %v2944, %v2945
        %v2947 = vsub.f32 1.0, %v2946
        %v2948 = vmul.f32 %v2945, %v2947
        %v2949 = vadd.f32 %v2945, %v2948
        %vm2950 = vweird.f32 %v2944
        %vm2951 = vweird.f32 %v2945
        %vm2952 = vmor %vm2950, %vm2951
        %v2953 = vsel %vm2952, %v2945, %v2949
        %v2954 = vand.u32 2147483647, %v2944
        %vm2955 = vcmp.eq.f32.partialorder %v2954, 8.507059e+37
        %v2956 = vand.u32 %v2944, 2147483648
        %v2957 = vor.u32 1.1754944e-38, %v2956
        %v2958 = vsel %vm2955, %v2957, %v2953
        %v2959 = vmul.f32 1.0, %v2958
        %2960 = vmatpush.msra.mxu0 0.0
        %2961 = vmatpush.msra.mxu0 0.0
        %2962 = vmatpush.msra.mxu0 0.0
        %2963 = vmatpush.msra.mxu0 0.0
        %2964 = vmatpush.msra.mxu0 0.0
        %2965 = vmatpush.msra.mxu0 0.0
        %2966 = vmatpush.msra.mxu0 0.0
        %2967 = vmatpush.msra.mxu0 0.0
        %2968 = vmatpush.msra.mxu0 0.0
        %2969 = vmatpush.msra.mxu0 0.0
        %2970 = vmatpush.msra.mxu0 0.0
        %2971 = vmatpush.msra.mxu0 0.0
        %2972 = vmatpush.msra.mxu0 0.0
        %2973 = vmatpush.msra.mxu0 0.0
        %2974 = vmatpush.msra.mxu0 %v1259
        %2975 = vmatpush.msra.mxu0 %v1258
        %2976 = vmatmul.f32.gmra.mxu0 %v2918
        %v2977 = vpop.f32.mrf.mxu0
        %v2978 = vadd.f32 0.0, %v2977
        %2979 = vdwg.mxu0
        %v2980 = vadd.f32 %v1177, %v2978
        %v2981 = vxor.u32 %v2980, 2147483648
        %v2982 = vmul.f32 %v2981, 1.442695
        %v2983 = vpow.pop %v2982
        %v2984 = vadd.f32 %v2983, 1.0
        %v2985 = vrcp.pop %v2984
        %v2986 = vmul.f32 %v2984, %v2985
        %v2987 = vsub.f32 1.0, %v2986
        %v2988 = vmul.f32 %v2985, %v2987
        %v2989 = vadd.f32 %v2985, %v2988
        %vm2990 = vweird.f32 %v2984
        %vm2991 = vweird.f32 %v2985
        %vm2992 = vmor %vm2990, %vm2991
        %v2993 = vsel %vm2992, %v2985, %v2989
        %v2994 = vand.u32 2147483647, %v2984
        %vm2995 = vcmp.eq.f32.partialorder %v2994, 8.507059e+37
        %v2996 = vand.u32 %v2984, 2147483648
        %v2997 = vor.u32 1.1754944e-38, %v2996
        %v2998 = vsel %vm2995, %v2997, %v2993
        %v2999 = vmul.f32 1.0, %v2998
        %3000 = vmatpush.msra.mxu0 0.0
        %3001 = vmatpush.msra.mxu0 0.0
        %3002 = vmatpush.msra.mxu0 0.0
        %3003 = vmatpush.msra.mxu0 0.0
        %3004 = vmatpush.msra.mxu0 0.0
        %3005 = vmatpush.msra.mxu0 0.0
        %3006 = vmatpush.msra.mxu0 0.0
        %3007 = vmatpush.msra.mxu0 0.0
        %3008 = vmatpush.msra.mxu0 0.0
        %3009 = vmatpush.msra.mxu0 0.0
        %3010 = vmatpush.msra.mxu0 0.0
        %3011 = vmatpush.msra.mxu0 0.0
        %3012 = vmatpush.msra.mxu0 0.0
        %3013 = vmatpush.msra.mxu0 0.0
        %3014 = vmatpush.msra.mxu0 %v1261
        %3015 = vmatpush.msra.mxu0 %v1260
        %3016 = vmatmul.f32.gmra.mxu0 %v2918
        %v3017 = vpop.f32.mrf.mxu0
        %v3018 = vadd.f32 %v1458, %v3017
        %3019 = vdwg.mxu0
        %v3020 = vmul.f32 %v2959, %v3018
        %v3021 = vadd.f32 %v1226, %v3020
        %v3022 = vtanh.pop %v3021
        %v3023 = vsub.f32 1.0, %v2999
        %v3024 = vmul.f32 %v3023, %v3022
        %v3025 = vmul.f32 %v2999, %v2806
        %v3026 = vadd.f32 %v3024, %v3025
        %v3027 = vld [vmem:[%s43] sm:$0xff]
        %v3028 = vld [vmem:[%s43 + $0x8] sm:$0xff]
        %v3029 = vld [vmem:[%s45] sm:$0xff]
        %v3030 = vld [vmem:[%s45 + $0x8] sm:$0xff]
        %v3032 = vsel %vm1263, %v3026, 0
        %3034 = vmatpush.msra.mxu0 0.0
        %3035 = vmatpush.msra.mxu0 0.0
        %3036 = vmatpush.msra.mxu0 0.0
        %3037 = vmatpush.msra.mxu0 0.0
        %3038 = vmatpush.msra.mxu0 0.0
        %3039 = vmatpush.msra.mxu0 0.0
        %3040 = vmatpush.msra.mxu0 0.0
        %3041 = vmatpush.msra.mxu0 0.0
        %3042 = vmatpush.msra.mxu0 0.0
        %3043 = vmatpush.msra.mxu0 0.0
        %3044 = vmatpush.msra.mxu0 0.0
        %3045 = vmatpush.msra.mxu0 0.0
        %3046 = vmatpush.msra.mxu0 0.0
        %3047 = vmatpush.msra.mxu0 0.0
        %3048 = vmatpush.msra.mxu0 %v3030
        %3049 = vmatpush.msra.mxu0 %v3029
        %3050 = vmatmul.f32.gmra.mxu0 %v3032
        %v3051 = vpop.f32.mrf.mxu0
        %v3052 = vadd.f32 0.0, %v3051
        %3053 = vmatmul.f32.gmra.mxu0 %v2918
        %v3054 = vpop.f32.mrf.mxu0
        %v3055 = vadd.f32 0.0, %v3054
        %3056 = vmatmul.f32.gmra.mxu0 %v2698
        %v3057 = vpop.f32.mrf.mxu0
        %v3058 = vadd.f32 0.0, %v3057
        %3059 = vmatmul.f32.gmra.mxu0 %v2478
        %v3060 = vpop.f32.mrf.mxu0
        %v3061 = vadd.f32 0.0, %v3060
        %3062 = vmatmul.f32.gmra.mxu0 %v2258
        %v3063 = vpop.f32.mrf.mxu0
        %v3064 = vadd.f32 0.0, %v3063
        %3065 = vmatmul.f32.gmra.mxu0 %v2038
        %v3066 = vpop.f32.mrf.mxu0
        %v3067 = vadd.f32 0.0, %v3066
        %3068 = vmatmul.f32.gmra.mxu0 %v1818
        %v3069 = vpop.f32.mrf.mxu0
        %v3070 = vadd.f32 0.0, %v3069
        %3071 = vmatmul.f32.gmra.mxu0 %v1598
        %v3072 = vpop.f32.mrf.mxu0
        %v3073 = vadd.f32 0.0, %v3072
        %3074 = vdwg.mxu0
        %v3076 = vsel %vm1263, %v2916, 0
        %3078 = vmatpush.msra.mxu0 0.0
        %3079 = vmatpush.msra.mxu0 0.0
        %3080 = vmatpush.msra.mxu0 0.0
        %3081 = vmatpush.msra.mxu0 0.0
        %3082 = vmatpush.msra.mxu0 0.0
        %3083 = vmatpush.msra.mxu0 0.0
        %3084 = vmatpush.msra.mxu0 0.0
        %3085 = vmatpush.msra.mxu0 0.0
        %3086 = vmatpush.msra.mxu0 0.0
        %3087 = vmatpush.msra.mxu0 0.0
        %3088 = vmatpush.msra.mxu0 0.0
        %3089 = vmatpush.msra.mxu0 0.0
        %3090 = vmatpush.msra.mxu0 0.0
        %3091 = vmatpush.msra.mxu0 0.0
        %3092 = vmatpush.msra.mxu0 %v3028
        %3093 = vmatpush.msra.mxu0 %v3027
        %3094 = vmatmul.f32.gmra.mxu0 %v1488
        %v3095 = vpop.f32.mrf.mxu0
        %v3096 = vadd.f32 %v3052, %v3095
        %3097 = vmatmul.f32.gmra.mxu0 %v1708
        %v3098 = vpop.f32.mrf.mxu0
        %v3099 = vadd.f32 %v3055, %v3098
        %3100 = vmatmul.f32.gmra.mxu0 %v1928
        %v3101 = vpop.f32.mrf.mxu0
        %v3102 = vadd.f32 %v3058, %v3101
        %3103 = vmatmul.f32.gmra.mxu0 %v2148
        %v3104 = vpop.f32.mrf.mxu0
        %v3105 = vadd.f32 %v3061, %v3104
        %3106 = vmatmul.f32.gmra.mxu0 %v2368
        %v3107 = vpop.f32.mrf.mxu0
        %v3108 = vadd.f32 %v3064, %v3107
        %3109 = vmatmul.f32.gmra.mxu0 %v2588
        %v3110 = vpop.f32.mrf.mxu0
        %v3111 = vadd.f32 %v3067, %v3110
        %3112 = vmatmul.f32.gmra.mxu0 %v2808
        %v3113 = vpop.f32.mrf.mxu0
        %v3114 = vadd.f32 %v3070, %v3113
        %3115 = vmatmul.f32.gmra.mxu0 %v3076
        %v3116 = vpop.f32.mrf.mxu0
        %v3117 = vadd.f32 %v3073, %v3116
        %3118 = vdwg.mxu0
        %v3119 = vld [vmem:[%s47] sm:$0x1]
        %v3121 = vperm.slane %v3119, 0
        %v3123 = vadd.f32 %v3096, %v3121
        %v3124 = vadd.f32 %v3099, %v3121
        %v3125 = vadd.f32 %v3102, %v3121
        %v3126 = vadd.f32 %v3105, %v3121
        %v3127 = vadd.f32 %v3108, %v3121
        %v3128 = vadd.f32 %v3111, %v3121
        %v3129 = vadd.f32 %v3114, %v3121
        %v3130 = vadd.f32 %v3117, %v3121
        %v3131 = vtanh.pop %v3123
        %v3132 = vtanh.pop %v3124
        %v3133 = vtanh.pop %v3125
        %v3134 = vtanh.pop %v3126
        %v3135 = vtanh.pop %v3127
        %v3136 = vtanh.pop %v3128
        %v3137 = vtanh.pop %v3129
        %v3138 = vtanh.pop %v3130
        %v3139 = vld [vmem:[%s49] sm:$0x1]
        %v3141 = vperm.slane %v3139, 0
        %v3143 = vmul.f32 %v3131, %v3141
        %v3144 = vmul.f32 %v3132, %v3141
        %v3145 = vmul.f32 %v3133, %v3141
        %v3146 = vmul.f32 %v3134, %v3141
        %v3147 = vmul.f32 %v3135, %v3141
        %v3148 = vmul.f32 %v3136, %v3141
        %v3149 = vmul.f32 %v3137, %v3141
        %v3150 = vmul.f32 %v3138, %v3141
        %v3151 = vsel %vm938, %v3143, 0.0
        %3152 = vadd.xlane.f32.xlu0 %v3151
        %v3153 = vpop.xlane.xlu0 %3152
        %v3154 = vsel %vm938, %v3144, 0.0
        %3155 = vadd.xlane.f32.xlu0 %v3154
        %v3156 = vpop.xlane.xlu0 %3155
        %v3157 = vsel %vm938, %v3145, 0.0
        %3158 = vadd.xlane.f32.xlu0 %v3157
        %v3159 = vpop.xlane.xlu0 %3158
        %v3160 = vsel %vm938, %v3146, 0.0
        %3161 = vadd.xlane.f32.xlu0 %v3160
        %v3162 = vpop.xlane.xlu0 %3161
        %v3163 = vsel %vm938, %v3147, 0.0
        %3164 = vadd.xlane.f32.xlu0 %v3163
        %v3165 = vpop.xlane.xlu0 %3164
        %v3166 = vsel %vm938, %v3148, 0.0
        %3167 = vadd.xlane.f32.xlu0 %v3166
        %v3168 = vpop.xlane.xlu0 %3167
        %v3169 = vsel %vm938, %v3149, 0.0
        %3170 = vadd.xlane.f32.xlu0 %v3169
        %v3171 = vpop.xlane.xlu0 %3170
        %v3172 = vsel %vm938, %v3150, 0.0
        %3173 = vadd.xlane.f32.xlu0 %v3172
        %v3174 = vpop.xlane.xlu0 %3173
        %v3175 = vtanh.pop %v3153
        %v3176 = vtanh.pop %v3156
        %v3177 = vtanh.pop %v3159
        %v3178 = vtanh.pop %v3162
        %v3179 = vtanh.pop %v3165
        %v3180 = vtanh.pop %v3168
        %v3181 = vtanh.pop %v3171
        %v3182 = vtanh.pop %v3174
        %v3183 = vmax.f32 %v3175, %v3179
        %v3184 = vmax.f32 %v3176, %v3180
        %v3185 = vmax.f32 %v3177, %v3181
        %v3186 = vmax.f32 %v3178, %v3182
        %v3187 = vmax.f32 %v3183, %v3184
        %v3188 = vmax.f32 %v3185, %v3186
        %v3189 = vmax.f32 %v3187, %v3188
        %v3190 = vsub.f32 %v3175, %v3189
        %v3191 = vsub.f32 %v3176, %v3189
        %v3192 = vsub.f32 %v3177, %v3189
        %v3193 = vsub.f32 %v3178, %v3189
        %v3194 = vsub.f32 %v3179, %v3189
        %v3195 = vsub.f32 %v3180, %v3189
        %v3196 = vsub.f32 %v3181, %v3189
        %v3197 = vsub.f32 %v3182, %v3189
        %v3198 = vmul.f32 %v3190, 1.442695
        %v3199 = vpow.pop %v3198
        %v3200 = vmul.f32 %v3191, 1.442695
        %v3201 = vpow.pop %v3200
        %v3202 = vmul.f32 %v3192, 1.442695
        %v3203 = vpow.pop %v3202
        %v3204 = vmul.f32 %v3193, 1.442695
        %v3205 = vpow.pop %v3204
        %v3206 = vmul.f32 %v3194, 1.442695
        %v3207 = vpow.pop %v3206
        %v3208 = vmul.f32 %v3195, 1.442695
        %v3209 = vpow.pop %v3208
        %v3210 = vmul.f32 %v3196, 1.442695
        %v3211 = vpow.pop %v3210
        %v3212 = vmul.f32 %v3197, 1.442695
        %v3213 = vpow.pop %v3212
        %v3214 = vadd.f32 %v3199, %v3201
        %v3215 = vadd.f32 %v3214, %v3203
        %v3216 = vadd.f32 %v3215, %v3205
        %v3217 = vadd.f32 %v3216, %v3207
        %v3218 = vadd.f32 %v3217, %v3209
        %v3219 = vadd.f32 %v3218, %v3211
        %v3220 = vadd.f32 %v3219, %v3213
        %v3221 = vrcp.pop %v3220
        %v3222 = vmul.f32 %v3199, %v3221
        %v3223 = vmul.f32 %v3201, %v3221
        %v3224 = vmul.f32 %v3203, %v3221
        %v3225 = vmul.f32 %v3205, %v3221
        %v3226 = vmul.f32 %v3207, %v3221
        %v3227 = vmul.f32 %v3209, %v3221
        %v3228 = vmul.f32 %v3211, %v3221
        %v3229 = vmul.f32 %v3213, %v3221
        %v3230 = vmul.f32 %v922, %v3222
        %v3231 = vmul.f32 %v923, %v3223
        %v3232 = vmul.f32 %v924, %v3224
        %v3233 = vmul.f32 %v925, %v3225
        %v3234 = vmul.f32 %v926, %v3226
        %v3235 = vmul.f32 %v927, %v3227
        %v3236 = vmul.f32 %v928, %v3228
        %v3237 = vmul.f32 %v929, %v3229
        %v3238 = vsel %vm938, %v3230, 0.0
        %v3239 = vsel %vm938, %v3231, 0.0
        %v3240 = vadd.f32 %v3238, %v3239
        %v3241 = vsel %vm938, %v3232, 0.0
        %v3242 = vadd.f32 %v3240, %v3241
        %v3243 = vsel %vm938, %v3233, 0.0
        %v3244 = vadd.f32 %v3242, %v3243
        %v3245 = vsel %vm938, %v3234, 0.0
        %v3246 = vadd.f32 %v3244, %v3245
        %v3247 = vsel %vm938, %v3235, 0.0
        %v3248 = vadd.f32 %v3246, %v3247
        %v3249 = vsel %vm938, %v3236, 0.0
        %v3250 = vadd.f32 %v3248, %v3249
        %v3251 = vsel %vm938, %v3237, 0.0
        %v3252 = vadd.f32 %v3250, %v3251
        %v3253 = vld [vmem:[%s51] sm:$0xff]
        %v3254 = vld [vmem:[%s51 + $0x8] sm:$0xff]
        %v3255 = vld [vmem:[%s51 + $0x10] sm:$0xff]
        %v3256 = vld [vmem:[%s51 + $0x18] sm:$0xff]
        %v3257 = vld [vmem:[%s53] sm:$0x1]
        %v3259 = vperm.slane %v3257, 0
        %v3262 = vsel %vm938, %v3252, 0
        %3264 = vmatpush.msra.mxu0 0.0
        %3265 = vmatpush.msra.mxu0 0.0
        %3266 = vmatpush.msra.mxu0 0.0
        %3267 = vmatpush.msra.mxu0 0.0
        %3268 = vmatpush.msra.mxu0 0.0
        %3269 = vmatpush.msra.mxu0 0.0
        %3270 = vmatpush.msra.mxu0 0.0
        %3271 = vmatpush.msra.mxu0 0.0
        %3272 = vmatpush.msra.mxu0 0.0
        %3273 = vmatpush.msra.mxu0 0.0
        %3274 = vmatpush.msra.mxu0 0.0
        %3275 = vmatpush.msra.mxu0 0.0
        %3276 = vmatpush.msra.mxu0 %v3256
        %3277 = vmatpush.msra.mxu0 %v3255
        %3278 = vmatpush.msra.mxu0 %v3254
        %3279 = vmatpush.msra.mxu0 %v3253
        %3280 = vmatmul.f32.gmra.mxu0 %v3262
        %v3281 = vpop.f32.mrf.mxu0
        %v3282 = vadd.f32 %v3259, %v3281
        %3283 = vdwg.mxu0
        %v3284 = vmax.f32 %v3282, 0.0
        %v3285 = vld [vmem:[%s55] sm:$0xff]
        %v3286 = vld [vmem:[%s55 + $0x8] sm:$0xff]
        %v3287 = vld [vmem:[%s57] sm:$0x1]
        %v3289 = vperm.slane %v3287, 0
        %v3292 = vsel %vm1263, %v3284, 0
        %3294 = vmatpush.msra.mxu0 0.0
        %3295 = vmatpush.msra.mxu0 0.0
        %3296 = vmatpush.msra.mxu0 0.0
        %3297 = vmatpush.msra.mxu0 0.0
        %3298 = vmatpush.msra.mxu0 0.0
        %3299 = vmatpush.msra.mxu0 0.0
        %3300 = vmatpush.msra.mxu0 0.0
        %3301 = vmatpush.msra.mxu0 0.0
        %3302 = vmatpush.msra.mxu0 0.0
        %3303 = vmatpush.msra.mxu0 0.0
        %3304 = vmatpush.msra.mxu0 0.0
        %3305 = vmatpush.msra.mxu0 0.0
        %3306 = vmatpush.msra.mxu0 0.0
        %3307 = vmatpush.msra.mxu0 0.0
        %3308 = vmatpush.msra.mxu0 %v3286
        %3309 = vmatpush.msra.mxu0 %v3285
        %3310 = vmatmul.f32.gmra.mxu0 %v3292
        %v3311 = vpop.f32.mrf.mxu0
        %v3312 = vadd.f32 %v3289, %v3311
        %3313 = vdwg.mxu0
        %v3314 = vxor.u32 %v3312, 2147483648
        %v3315 = vmul.f32 %v3314, 1.442695
        %v3316 = vpow.pop %v3315
        %v3317 = vadd.f32 %v3316, 1.0
        %v3318 = vrcp.pop %v3317
        %v3319 = vmul.f32 %v3317, %v3318
        %v3320 = vsub.f32 1.0, %v3319
        %v3321 = vmul.f32 %v3318, %v3320
        %v3322 = vadd.f32 %v3318, %v3321
        %vm3323 = vweird.f32 %v3317
        %vm3324 = vweird.f32 %v3318
        %vm3325 = vmor %vm3323, %vm3324
        %v3326 = vsel %vm3325, %v3318, %v3322
        %v3327 = vand.u32 2147483647, %v3317
        %vm3328 = vcmp.eq.f32.partialorder %v3327, 8.507059e+37
        %v3329 = vand.u32 %v3317, 2147483648
        %v3330 = vor.u32 1.1754944e-38, %v3329
        %v3331 = vsel %vm3328, %v3330, %v3326
        %v3332 = vmul.f32 1.0, %v3331
        %vm3333 = vcmask 31744
        %3334 = vst.msk [vmem:[%s921] sm:$0xff] %vm3333, %v3332
        %p3335 = scmp.lt.s32.totalorder %s73, 1
        %s3336 = scalar_select %p3335, %s73, 1
        %s3337 = smul.addr %s3336, 8
        %s3338 = scalar_lea.vmem %s59, %s3337
        // Predicated region
        $region141: #{tpu_custom_call.1} parent=135 // pred_check
          %p3339 = pneg %p705
        $region142: #{tpu_custom_call.1} parent=135 // pred_check_branch
          %3341 = sbr.rel (%p3339) target = $region144
        $region143: #{tpu_custom_call.1} parent=135 // pred_region
          _
        $region144: #{tpu_custom_call.1} parent=135 // pred_fallthru
          _
      $region136: #{tpu_custom_call.1} parent=5 // pred_fallthru
        _
      %p3342 = scmp.le.s32.totalorder 2, %s68
      // Predicated region
      $region145: #{tpu_custom_call.1} parent=5 // pred_check
        %p3343 = pneg %p3342
      $region146: #{tpu_custom_call.1} parent=5 // pred_check_branch
        %3345 = sbr.rel (%p3343) target = $region148
      $region147: #{tpu_custom_call.1} parent=5 // pred_region
        %s3346 = ssub.s32 %s68, 2
        // Predicated region
        $region149: #{tpu_custom_call.1} parent=147 // pred_check
          %p3347 = pneg %p711
        $region150: #{tpu_custom_call.1} parent=147 // pred_check_branch
          %3349 = sbr.rel (%p3347) target = $region152
        $region151: #{tpu_custom_call.1} parent=147 // pred_region
          %p3350 = scmp.lt.s32.totalorder %s74, 1
          %s3351 = scalar_select %p3350, %s74, 1
          %s3352 = smul.addr %s3351, 8
          %s3353 = scalar_lea.vmem %s59, %s3352
        $region152: #{tpu_custom_call.1} parent=147 // pred_fallthru
          _
      $region148: #{tpu_custom_call.1} parent=5 // pred_fallthru
        _
    $region6: #{tpu_custom_call.1} parent=1 // loop_footer
      %s72 = sadd.s32 1, %s68
    $region7: #{tpu_custom_call.1} parent=1 // loop_footer_branch
      %67 = sbr.rel target = $region3
    $region8: #{tpu_custom_call.1} parent=1 // loop_exit
      _
    %3354 = vsyncpa [#allocation3], 1
    %s3355 = scalar_lea.sflag [#allocation3], 1
    %3356 = vsyncpa %s3355, 1

</llo_original>
